<compile_context>
chip_gen: v6e
topology: v6e:2x2x1
jax: 0.10.0
libtpu: 0.0.40
codegen_flags: <defaults>
</compile_context>

<pallas_src>
import math
from functools import partial

import jax
import jax.numpy as jnp
from jax import lax
from jax.experimental import pallas as pl
from jax.experimental.pallas import tpu as pltpu


def _layer_norm(x, gamma, beta, eps):
    mu = jnp.mean(x, axis=-1, keepdims=True)
    var = jnp.mean((x - mu) ** 2, axis=-1, keepdims=True)
    return (x - mu) * lax.rsqrt(var + eps) * gamma + beta


def encoder_layer_kernel(nhead, eps, need_weights, ffn_chunk,
                         x_ref, wqkv_ref, bin_ref, wo_ref, bo_ref,
                         w1_ref, b1_ref, w2_ref, b2_ref,
                         g1_ref, beta1_ref, g2_ref, beta2_ref,
                         out_ref, *attn_refs):
    Bt, S, D = x_ref.shape
    Dff = w1_ref.shape[1]
    dh = D // nhead
    rows = Bt * S
    cdt = wqkv_ref.dtype            # MXU operand dtype (f32 or bf16); accumulation is f32

    x = x_ref[...].reshape(rows, D)  # one tall matrix for all row-wise ops

    # --- fused QKV projection (1/sqrt(dh) pre-folded into Q columns in the wrapper) ---
    qkv = jnp.dot(x.astype(cdt), wqkv_ref[...],
                  preferred_element_type=jnp.float32) + bin_ref[0]

    # --- batched multi-head self-attention: single (H*Bt)-batched 3-D einsums ---
    def heads(t):                    # (rows, D) -> (H*Bt, S, dh); batch index = h*Bt + b
        return jnp.transpose(t.reshape(rows, nhead, dh), (1, 0, 2)).reshape(nhead * Bt, S, dh)

    qh = heads(qkv[:, 0 * D:1 * D])
    kh = heads(qkv[:, 1 * D:2 * D])
    vh = heads(qkv[:, 2 * D:3 * D])

    s = jnp.einsum("bqd,bkd->bqk", qh.astype(cdt), kh.astype(cdt),
                   preferred_element_type=jnp.float32)               # (H*Bt, S, S)
    s = s - jnp.max(s, axis=-1, keepdims=True)
    p = jnp.exp(s)                                                   # f32, EUP
    p = p * pl.reciprocal(jnp.sum(p, axis=-1, keepdims=True), approx=True)
    o = jnp.einsum("bqk,bkd->bqd", p.astype(cdt), vh.astype(cdt),
                   preferred_element_type=jnp.float32)               # (H*Bt, S, dh)
    attn_out = jnp.transpose(o.reshape(nhead, rows, dh), (1, 0, 2)).reshape(rows, D)

    # --- output projection + residual + LayerNorm1 (dropout1 identity in eval) ---
    src = x + jnp.dot(attn_out.astype(cdt), wo_ref[...],
                      preferred_element_type=jnp.float32) + bo_ref[0]
    src = _layer_norm(src, g1_ref[0], beta1_ref[0], eps)

    # --- ReLU-FFN chunked over Dff + residual + LayerNorm2 (dropouts identity) ---
    src2 = jnp.zeros((rows, D), jnp.float32) + b2_ref[0]
    for c0 in range(0, Dff, ffn_chunk):
        c1 = min(c0 + ffn_chunk, Dff)
        h = jnp.maximum(
            jnp.dot(src.astype(cdt), w1_ref[:, c0:c1],
                    preferred_element_type=jnp.float32) + b1_ref[0, c0:c1], 0.0)
        src2 = src2 + jnp.dot(h.astype(cdt), w2_ref[c0:c1, :],
                              preferred_element_type=jnp.float32)
    src = _layer_norm(src + src2, g2_ref[0], beta2_ref[0], eps)

    out_ref[...] = src.reshape(Bt, S, D)
    if need_weights:
        # heads-averaged attention probabilities (nn.MultiheadAttention default)
        attn_refs[0][...] = jnp.mean(p.reshape(nhead, Bt, S, S), axis=0)


def _vmem_estimate(Bt, S, D, Dff, nhead, need_weights, weight_bytes, ffn_chunk):
    """Rough per-grid-step VMEM footprint (bytes)."""
    f32 = 4
    rows = Bt * S
    io = 2 * 2 * rows * D * f32                        # x + out blocks, double-buffered
    if need_weights:
        io += 2 * Bt * S * S * f32                     # attn-weights block, double-buffered
    inter = f32 * (rows * 3 * D                        # qkv
                   + 3 * rows * D                      # head-major q/k/v
                   + 2 * nhead * Bt * S * S            # scores + probs
                   + rows * D                          # attention output
                   + 2 * rows * D                      # src + src2
                   + rows * min(ffn_chunk, Dff))       # ffn hidden chunk
    return io + weight_bytes + inter


def _pick_block_b(B, S, D, Dff, nhead, need_weights, weight_bytes, ffn_chunk,
                  vmem_budget, min_grid_steps):
    """Largest Bt dividing B that fits the VMEM budget.
    min_grid_steps=1 (default): max-fit, right for single-TC v5e/v6e.
    min_grid_steps=2: keep >=2 'parallel' grid steps so v7x's 2 TCs both get work."""
    best = 1
    for bt in range(1, B + 1):
        if B % bt:
            continue
        if (B // bt) < min_grid_steps and bt > 1:
            continue
        if _vmem_estimate(bt, S, D, Dff, nhead, need_weights,
                          weight_bytes, ffn_chunk) > vmem_budget:
            continue
        best = bt
    return best


@partial(jax.jit, static_argnames=("nhead", "need_weights", "matmul_dtype", "block_b",
                                   "min_grid_steps", "ffn_chunk", "single_buffer_weights"))
def custom_encoder_layer(src_sbd, params, nhead, *, need_weights=True,
                         matmul_dtype=jnp.float32,     # use jnp.bfloat16 on v6e/v7x
                         block_b=None,
                         min_grid_steps=1,             # set 2 on v7x (2 TCs/chip)
                         ffn_chunk=None,
                         single_buffer_weights=True):
    """src_sbd: (S, B, D) float32 (PyTorch batch_first=False layout).
    Returns (out (S,B,D), attn (B,S,S)) like CustomEncoderLayer.forward in eval mode."""
    S, B, D = src_sbd.shape
    Dff = params["w1"].shape[0]
    assert D % nhead == 0
    dh = D // nhead

    # Layout / constant-folding plumbing outside the kernel: pre-transpose weights so the
    # kernel never transposes a VMEM weight tile, fold 1/sqrt(dh) into the Q projection,
    # and cast MXU operands (bf16 recommended on v6e/v7x; biases/LN stay f32).
    scale = 1.0 / math.sqrt(dh)
    w_in_t = params["w_in"].T                                          # (D, 3D)
    wqkv = jnp.concatenate([w_in_t[:, :D] * scale, w_in_t[:, D:]], axis=1).astype(matmul_dtype)
    b_in = jnp.concatenate([params["b_in"][:, :D] * scale, params["b_in"][:, D:]], axis=1)
    wo_t = params["wo"].T.astype(matmul_dtype)                         # (D, D)
    w1_t = params["w1"].T.astype(matmul_dtype)                         # (D, Dff)
    w2_t = params["w2"].T.astype(matmul_dtype)                         # (Dff, D)

    ffn_chunk = int(ffn_chunk) if ffn_chunk is not None else min(Dff, 1024)

    weight_bytes = sum(int(a.size) * a.dtype.itemsize for a in (wqkv, wo_t, w1_t, w2_t))
    weight_bytes += 4 * (3 * D + D + Dff + D + 4 * D)                  # f32 biases / LN params

    vmem_budget = 40 * 1024 * 1024   # safe under v7x 64 MiB physical per TC, with headroom
    Bt = block_b if block_b is not None else _pick_block_b(
        B, S, D, Dff, nhead, need_weights, weight_bytes, ffn_chunk,
        vmem_budget, min_grid_steps)
    assert B % Bt == 0

    vmem_est = _vmem_estimate(Bt, S, D, Dff, nhead, need_weights, weight_bytes, ffn_chunk)
    vmem_limit = int(min(64 * 1024 * 1024, max(int(1.4 * vmem_est), 16 * 1024 * 1024)))

    x = jnp.transpose(src_sbd, (1, 0, 2))                              # (B, S, D); fused under jit

    def wspec(shape):
        """Grid-invariant weight/bias block; single-buffered to halve weight VMEM."""
        n = len(shape)
        idx = lambda b: (0,) * n
        if single_buffer_weights:
            return pl.BlockSpec(shape, idx, pipeline_mode=pl.Buffered(1))
        return pl.BlockSpec(shape, idx)

    kernel = partial(encoder_layer_kernel, nhead, 1e-5, need_weights, ffn_chunk)

    out_shapes = [jax.ShapeDtypeStruct((B, S, D), jnp.float32)]
    out_specs = [pl.BlockSpec((Bt, S, D), lambda b: (b, 0, 0))]
    if need_weights:
        # Perf note: prefer need_weights=False in perf paths (skips B*S*S HBM writeback);
        # when S % 128 != 0 this store lowers to lane-masked partial stores.
        out_shapes.append(jax.ShapeDtypeStruct((B, S, S), jnp.float32))
        out_specs.append(pl.BlockSpec((Bt, S, S), lambda b: (b, 0, 0)))

    flops = 2 * B * (S * D * 3 * D                 # qkv projection
                     + nhead * 2 * S * S * dh      # scores + p@v
                     + S * D * D                   # output projection
                     + 2 * S * D * Dff)            # feed-forward
    transc = B * nhead * S * S + 4 * B * S
    io_bytes = 4 * (2 * B * S * D + (B * S * S if need_weights else 0))
    cost = pl.CostEstimate(flops=int(flops), transcendentals=int(transc),
                           bytes_accessed=int(weight_bytes + io_bytes))

    results = pl.pallas_call(
        kernel,
        out_shape=tuple(out_shapes),
        grid=(B // Bt,),
        in_specs=[
            pl.BlockSpec((Bt, S, D), lambda b: (b, 0, 0)),   # x
            wspec((D, 3 * D)), wspec((1, 3 * D)),            # fused qkv  W^T (Q pre-scaled), b
            wspec((D, D)), wspec((1, D)),                    # out-proj   W^T, b
            wspec((D, Dff)), wspec((1, Dff)),                # linear1    W^T, b
            wspec((Dff, D)), wspec((1, D)),                  # linear2    W^T, b
            wspec((1, D)), wspec((1, D)),                    # norm1 gamma, beta
            wspec((1, D)), wspec((1, D)),                    # norm2 gamma, beta
        ],
        out_specs=tuple(out_specs),
        compiler_params=pltpu.CompilerParams(
            dimension_semantics=("parallel",),
            vmem_limit_bytes=vmem_limit),
        cost_estimate=cost,
    )(x, wqkv, b_in, wo_t, params["bo"],
      w1_t, params["b1"], w2_t, params["b2"],
      params["g1"], params["beta1"], params["g2"], params["beta2"])

    out = jnp.transpose(results[0], (1, 0, 2))               # back to (S, B, D)
    if need_weights:
        return out, results[1]
    return out


def reference(src_sbd, params, nhead):
    """Pure-JAX reference with identical semantics (eval mode)."""
    S, B, D = src_sbd.shape
    dh = D // nhead
    x = jnp.transpose(src_sbd, (1, 0, 2))            # (B, S, D)
    qkv = jnp.einsum("bsd,ed->bse", x, params["w_in"]) + params["b_in"][0]
    q, k, v = qkv[..., :D], qkv[..., D:2 * D], qkv[..., 2 * D:]

    def split(t):
        return t.reshape(B, S, nhead, dh).transpose(0, 2, 1, 3)

    qh, kh, vh = split(q), split(k), split(v)
    sc = jnp.einsum("bhqd,bhkd->bhqk", qh, kh) / jnp.sqrt(dh)
    p = jax.nn.softmax(sc, axis=-1)
    o = jnp.einsum("bhqk,bhkd->bhqd", p, vh).transpose(0, 2, 1, 3).reshape(B, S, D)
    src2 = jnp.einsum("bsd,ed->bse", o, params["wo"]) + params["bo"][0]
    y = x + src2

    def ln(t, g, b):
        mu = t.mean(-1, keepdims=True)
        var = ((t - mu) ** 2).mean(-1, keepdims=True)
        return (t - mu) / jnp.sqrt(var + 1e-5) * g[0] + b[0]

    y = ln(y, params["g1"], params["beta1"])
    h = jnp.maximum(jnp.einsum("bsd,fd->bsf", y, params["w1"]) + params["b1"][0], 0.0)
    src2 = jnp.einsum("bsf,df->bsd", h, params["w2"]) + params["b2"][0]
    y = ln(y + src2, params["g2"], params["beta2"])
    return jnp.transpose(y, (1, 0, 2)), p.mean(axis=1)


def init_params(key, d_model, nhead, dim_feedforward):
    ks = jax.random.split(key, 8)
    s = 0.1
    return {
        "w_in": s * jax.random.normal(ks[0], (3 * d_model, d_model), jnp.float32),
        "b_in": s * jax.random.normal(ks[1], (1, 3 * d_model), jnp.float32),
        "wo":   s * jax.random.normal(ks[2], (d_model, d_model), jnp.float32),
        "bo":   s * jax.random.normal(ks[3], (1, d_model), jnp.float32),
        "w1":   s * jax.random.normal(ks[4], (dim_feedforward, d_model), jnp.float32),
        "b1":   s * jax.random.normal(ks[5], (1, dim_feedforward), jnp.float32),
        "w2":   s * jax.random.normal(ks[6], (d_model, dim_feedforward), jnp.float32),
        "b2":   s * jax.random.normal(ks[7], (1, d_model), jnp.float32),
        "g1":   jnp.ones((1, d_model), jnp.float32),
        "beta1": jnp.zeros((1, d_model), jnp.float32),
        "g2":   jnp.ones((1, d_model), jnp.float32),
        "beta2": jnp.zeros((1, d_model), jnp.float32),
    }


if __name__ == "__main__":
    S, B, D, NHEAD, DFF = 8, 2, 32, 4, 64
    key = jax.random.PRNGKey(0)
    k_x, k_p = jax.random.split(key)
    src = jax.random.normal(k_x, (S, B, D), jnp.float32)
    params = init_params(k_p, D, NHEAD, DFF)

    ref_out, ref_attn = reference(src, params, NHEAD)

    def run(**kw):
        try:
            return custom_encoder_layer(src, params, NHEAD, **kw)
        except Exception:
            # Fallback only if this JAX build rejects pl.Buffered(1) single-buffering.
            return custom_encoder_layer(src, params, NHEAD,
                                        single_buffer_weights=False, **kw)

    # f32 MXU path (v5e-friendly); tolerance covers approx-reciprocal softmax normalization
    out, attn = run()
    out, attn = jax.block_until_ready(out), jax.block_until_ready(attn)
    assert jnp.allclose(out, ref_out, atol=1e-2, rtol=1e-2)
    assert jnp.allclose(attn, ref_attn, atol=5e-3, rtol=1e-2)

    # bf16 MXU-operand path (recommended default on v6e/v7x); looser tolerance for bf16
    out_bf, attn_bf = run(matmul_dtype=jnp.bfloat16)
    out_bf, attn_bf = jax.block_until_ready(out_bf), jax.block_until_ready(attn_bf)
    assert jnp.allclose(out_bf, ref_out, atol=7e-2, rtol=7e-2)
    assert jnp.allclose(attn_bf, ref_attn, atol=2e-2, rtol=5e-2)

    print("KERNEL_OK")
</pallas_src>

<mosaic_0001>
module attributes {stable_mosaic.version = 11 : i64} {
  func.func @encoder_layer_kernel(%arg0: i32, %arg1: memref<2x8x32xf32, #tpu.memory_space<vmem>>, %arg2: memref<32x96xf32, #tpu.memory_space<vmem>>, %arg3: memref<1x96xf32, #tpu.memory_space<vmem>>, %arg4: memref<32x32xf32, #tpu.memory_space<vmem>>, %arg5: memref<1x32xf32, #tpu.memory_space<vmem>>, %arg6: memref<32x64xf32, #tpu.memory_space<vmem>>, %arg7: memref<1x64xf32, #tpu.memory_space<vmem>>, %arg8: memref<64x32xf32, #tpu.memory_space<vmem>>, %arg9: memref<1x32xf32, #tpu.memory_space<vmem>>, %arg10: memref<1x32xf32, #tpu.memory_space<vmem>>, %arg11: memref<1x32xf32, #tpu.memory_space<vmem>>, %arg12: memref<1x32xf32, #tpu.memory_space<vmem>>, %arg13: memref<1x32xf32, #tpu.memory_space<vmem>>, %arg14: memref<2x8x32xf32, #tpu.memory_space<vmem>>, %arg15: memref<2x8x8xf32, #tpu.memory_space<vmem>>) attributes {dimension_semantics = [#tpu.dimension_semantics<parallel>], iteration_bounds = array<i64: 1>, scalar_prefetch = 0 : i64, scratch_operands = 0 : i64, tpu.core_type = #tpu.core_type<tc>, window_params = [{transform_indices = @transform_0, window_bounds = array<i64: 2, 8, 32>}, {pipeline_mode = #tpu.pipeline_mode<synchronous>, transform_indices = @transform_1, window_bounds = array<i64: 32, 96>}, {pipeline_mode = #tpu.pipeline_mode<synchronous>, transform_indices = @transform_2, window_bounds = array<i64: 1, 96>}, {pipeline_mode = #tpu.pipeline_mode<synchronous>, transform_indices = @transform_3, window_bounds = array<i64: 32, 32>}, {pipeline_mode = #tpu.pipeline_mode<synchronous>, transform_indices = @transform_4, window_bounds = array<i64: 1, 32>}, {pipeline_mode = #tpu.pipeline_mode<synchronous>, transform_indices = @transform_5, window_bounds = array<i64: 32, 64>}, {pipeline_mode = #tpu.pipeline_mode<synchronous>, transform_indices = @transform_6, window_bounds = array<i64: 1, 64>}, {pipeline_mode = #tpu.pipeline_mode<synchronous>, transform_indices = @transform_7, window_bounds = array<i64: 64, 32>}, {pipeline_mode = #tpu.pipeline_mode<synchronous>, transform_indices = @transform_8, window_bounds = array<i64: 1, 32>}, {pipeline_mode = #tpu.pipeline_mode<synchronous>, transform_indices = @transform_9, window_bounds = array<i64: 1, 32>}, {pipeline_mode = #tpu.pipeline_mode<synchronous>, transform_indices = @transform_10, window_bounds = array<i64: 1, 32>}, {pipeline_mode = #tpu.pipeline_mode<synchronous>, transform_indices = @transform_11, window_bounds = array<i64: 1, 32>}, {pipeline_mode = #tpu.pipeline_mode<synchronous>, transform_indices = @transform_12, window_bounds = array<i64: 1, 32>}, {transform_indices = @transform_13, window_bounds = array<i64: 2, 8, 32>}, {transform_indices = @transform_14, window_bounds = array<i64: 2, 8, 8>}]} {
    %c0 = arith.constant 0 : index
    %c0_0 = arith.constant 0 : index
    %c0_1 = arith.constant 0 : index
    %0 = vector.load %arg1[%c0, %c0_0, %c0_1] : memref<2x8x32xf32, #tpu.memory_space<vmem>>, vector<2x8x32xf32>
    %1 = vector.shape_cast %0 : vector<2x8x32xf32> to vector<16x32xf32>
    %c0_2 = arith.constant 0 : index
    %c0_3 = arith.constant 0 : index
    %2 = vector.load %arg2[%c0_2, %c0_3] : memref<32x96xf32, #tpu.memory_space<vmem>>, vector<32x96xf32>
    %cst = arith.constant dense<0.000000e+00> : vector<16x96xf32>
    %3 = tpu.matmul %1, %2, %cst {dimension_numbers = #tpu.dot_dimension_numbers<[1], [0], [0], [1], [0, 0, 1, 1], [], []>} : vector<16x32xf32>, vector<32x96xf32>, vector<16x96xf32> -> vector<16x96xf32>
    %c0_4 = arith.constant 0 : index
    %c0_5 = arith.constant 0 : index
    %4 = vector.load %arg3[%c0_4, %c0_5] : memref<1x96xf32, #tpu.memory_space<vmem>>, vector<1x96xf32>
    %5 = vector.shape_cast %4 : vector<1x96xf32> to vector<96xf32>
    %6 = vector.shape_cast %5 : vector<96xf32> to vector<1x96xf32>
    %7 = vector.broadcast %6 : vector<1x96xf32> to vector<16x96xf32>
    %8 = arith.addf %3, %7 : vector<16x96xf32>
    %9 = vector.extract_strided_slice %8 {offsets = [0, 0], sizes = [16, 32], strides = [1, 1]} : vector<16x96xf32> to vector<16x32xf32>
    %10 = vector.shape_cast %9 : vector<16x32xf32> to vector<16x4x8xf32>
    %11 = tpu.transpose %10, [1, 0, 2] : vector<16x4x8xf32> -> vector<4x16x8xf32>
    %12 = vector.shape_cast %11 : vector<4x16x8xf32> to vector<8x8x8xf32>
    %13 = vector.extract_strided_slice %8 {offsets = [0, 32], sizes = [16, 32], strides = [1, 1]} : vector<16x96xf32> to vector<16x32xf32>
    %14 = vector.shape_cast %13 : vector<16x32xf32> to vector<16x4x8xf32>
    %15 = tpu.transpose %14, [1, 0, 2] : vector<16x4x8xf32> -> vector<4x16x8xf32>
    %16 = vector.shape_cast %15 : vector<4x16x8xf32> to vector<8x8x8xf32>
    %17 = vector.extract_strided_slice %8 {offsets = [0, 64], sizes = [16, 32], strides = [1, 1]} : vector<16x96xf32> to vector<16x32xf32>
    %18 = vector.shape_cast %17 : vector<16x32xf32> to vector<16x4x8xf32>
    %19 = tpu.transpose %18, [1, 0, 2] : vector<16x4x8xf32> -> vector<4x16x8xf32>
    %20 = vector.shape_cast %19 : vector<4x16x8xf32> to vector<8x8x8xf32>
    "tpu.trace_start"() <{level = 10 : i32, message = "bqd,bkd->bqk"}> : () -> ()
    %cst_6 = arith.constant dense<0.000000e+00> : vector<8x8x8xf32>
    %21 = tpu.matmul %12, %16, %cst_6 {dimension_numbers = #tpu.dot_dimension_numbers<[2], [2], [1], [1], [0, 0, 0, 1, 1, 1], [0], [0]>} : vector<8x8x8xf32>, vector<8x8x8xf32>, vector<8x8x8xf32> -> vector<8x8x8xf32>
    "tpu.trace_stop"() : () -> ()
    %cst_7 = arith.constant dense<0xFF800000> : vector<8x8xf32>
    %22 = vector.multi_reduction <maximumf>, %21, %cst_7 [2] : vector<8x8x8xf32> to vector<8x8xf32>
    %23 = vector.shape_cast %22 : vector<8x8xf32> to vector<8x8x1xf32>
    %24 = vector.broadcast %23 : vector<8x8x1xf32> to vector<8x8x8xf32>
    %25 = arith.subf %21, %24 : vector<8x8x8xf32>
    %26 = math.exp %25 : vector<8x8x8xf32>
    %cst_8 = arith.constant dense<0.000000e+00> : vector<8x8xf32>
    %27 = vector.multi_reduction <add>, %26, %cst_8 [2] : vector<8x8x8xf32> to vector<8x8xf32>
    %28 = vector.shape_cast %27 : vector<8x8xf32> to vector<8x8x1xf32>
    %29 = tpu.reciprocal %28 {approx = true} : vector<8x8x1xf32> -> vector<8x8x1xf32>
    %30 = vector.broadcast %29 : vector<8x8x1xf32> to vector<8x8x8xf32>
    %31 = arith.mulf %26, %30 : vector<8x8x8xf32>
    "tpu.trace_start"() <{level = 10 : i32, message = "bqk,bkd->bqd"}> : () -> ()
    %cst_9 = arith.constant dense<0.000000e+00> : vector<8x8x8xf32>
    %32 = tpu.matmul %31, %20, %cst_9 {dimension_numbers = #tpu.dot_dimension_numbers<[2], [1], [1], [2], [0, 0, 0, 1, 1, 2], [0], [0]>} : vector<8x8x8xf32>, vector<8x8x8xf32>, vector<8x8x8xf32> -> vector<8x8x8xf32>
    "tpu.trace_stop"() : () -> ()
    %33 = vector.shape_cast %32 : vector<8x8x8xf32> to vector<4x16x8xf32>
    %34 = tpu.transpose %33, [1, 0, 2] : vector<4x16x8xf32> -> vector<16x4x8xf32>
    %35 = vector.shape_cast %34 : vector<16x4x8xf32> to vector<16x32xf32>
    %c0_10 = arith.constant 0 : index
    %c0_11 = arith.constant 0 : index
    %36 = vector.load %arg4[%c0_10, %c0_11] : memref<32x32xf32, #tpu.memory_space<vmem>>, vector<32x32xf32>
    %cst_12 = arith.constant dense<0.000000e+00> : vector<16x32xf32>
    %37 = tpu.matmul %35, %36, %cst_12 {dimension_numbers = #tpu.dot_dimension_numbers<[1], [0], [0], [1], [0, 0, 1, 1], [], []>} : vector<16x32xf32>, vector<32x32xf32>, vector<16x32xf32> -> vector<16x32xf32>
    %38 = arith.addf %1, %37 : vector<16x32xf32>
    %c0_13 = arith.constant 0 : index
    %c0_14 = arith.constant 0 : index
    %39 = vector.load %arg5[%c0_13, %c0_14] : memref<1x32xf32, #tpu.memory_space<vmem>>, vector<1x32xf32>
    %40 = vector.shape_cast %39 : vector<1x32xf32> to vector<32xf32>
    %41 = vector.shape_cast %40 : vector<32xf32> to vector<1x32xf32>
    %42 = vector.broadcast %41 : vector<1x32xf32> to vector<16x32xf32>
    %43 = arith.addf %38, %42 : vector<16x32xf32>
    %c0_15 = arith.constant 0 : index
    %c0_16 = arith.constant 0 : index
    %44 = vector.load %arg10[%c0_15, %c0_16] : memref<1x32xf32, #tpu.memory_space<vmem>>, vector<1x32xf32>
    %45 = vector.shape_cast %44 : vector<1x32xf32> to vector<32xf32>
    %c0_17 = arith.constant 0 : index
    %c0_18 = arith.constant 0 : index
    %46 = vector.load %arg11[%c0_17, %c0_18] : memref<1x32xf32, #tpu.memory_space<vmem>>, vector<1x32xf32>
    %47 = vector.shape_cast %46 : vector<1x32xf32> to vector<32xf32>
    %cst_19 = arith.constant dense<0.000000e+00> : vector<16xf32>
    %48 = vector.multi_reduction <add>, %43, %cst_19 [1] : vector<16x32xf32> to vector<16xf32>
    %49 = vector.shape_cast %48 : vector<16xf32> to vector<16x1xf32>
    %cst_20 = arith.constant 3.200000e+01 : f32
    %50 = vector.broadcast %cst_20 : f32 to vector<16x1xf32>
    %51 = arith.divf %49, %50 : vector<16x1xf32>
    %52 = vector.broadcast %51 : vector<16x1xf32> to vector<16x32xf32>
    %53 = arith.subf %43, %52 : vector<16x32xf32>
    %54 = arith.mulf %53, %53 : vector<16x32xf32>
    %cst_21 = arith.constant dense<0.000000e+00> : vector<16xf32>
    %55 = vector.multi_reduction <add>, %54, %cst_21 [1] : vector<16x32xf32> to vector<16xf32>
    %56 = vector.shape_cast %55 : vector<16xf32> to vector<16x1xf32>
    %cst_22 = arith.constant 3.200000e+01 : f32
    %57 = vector.broadcast %cst_22 : f32 to vector<16x1xf32>
    %58 = arith.divf %56, %57 : vector<16x1xf32>
    %59 = vector.broadcast %51 : vector<16x1xf32> to vector<16x32xf32>
    %60 = arith.subf %43, %59 : vector<16x32xf32>
    %cst_23 = arith.constant 9.99999974E-6 : f32
    %61 = vector.broadcast %cst_23 : f32 to vector<16x1xf32>
    %62 = arith.addf %58, %61 : vector<16x1xf32>
    %63 = math.rsqrt %62 : vector<16x1xf32>
    %64 = vector.broadcast %63 : vector<16x1xf32> to vector<16x32xf32>
    %65 = arith.mulf %60, %64 : vector<16x32xf32>
    %66 = vector.shape_cast %45 : vector<32xf32> to vector<1x32xf32>
    %67 = vector.broadcast %66 : vector<1x32xf32> to vector<16x32xf32>
    %68 = arith.mulf %65, %67 : vector<16x32xf32>
    %69 = vector.shape_cast %47 : vector<32xf32> to vector<1x32xf32>
    %70 = vector.broadcast %69 : vector<1x32xf32> to vector<16x32xf32>
    %71 = arith.addf %68, %70 : vector<16x32xf32>
    %cst_24 = arith.constant 0.000000e+00 : f32
    %72 = vector.broadcast %cst_24 : f32 to vector<16x32xf32>
    %c0_25 = arith.constant 0 : index
    %c0_26 = arith.constant 0 : index
    %73 = vector.load %arg9[%c0_25, %c0_26] : memref<1x32xf32, #tpu.memory_space<vmem>>, vector<1x32xf32>
    %74 = vector.shape_cast %73 : vector<1x32xf32> to vector<32xf32>
    %75 = vector.shape_cast %74 : vector<32xf32> to vector<1x32xf32>
    %76 = vector.broadcast %75 : vector<1x32xf32> to vector<16x32xf32>
    %77 = arith.addf %72, %76 : vector<16x32xf32>
    %c0_27 = arith.constant 0 : index
    %c0_28 = arith.constant 0 : index
    %78 = vector.load %arg6[%c0_27, %c0_28] : memref<32x64xf32, #tpu.memory_space<vmem>>, vector<32x64xf32>
    %cst_29 = arith.constant dense<0.000000e+00> : vector<16x64xf32>
    %79 = tpu.matmul %71, %78, %cst_29 {dimension_numbers = #tpu.dot_dimension_numbers<[1], [0], [0], [1], [0, 0, 1, 1], [], []>} : vector<16x32xf32>, vector<32x64xf32>, vector<16x64xf32> -> vector<16x64xf32>
    %c0_30 = arith.constant 0 : index
    %c0_31 = arith.constant 0 : index
    %80 = vector.load %arg7[%c0_30, %c0_31] : memref<1x64xf32, #tpu.memory_space<vmem>>, vector<1x64xf32>
    %81 = vector.shape_cast %80 : vector<1x64xf32> to vector<64xf32>
    %82 = vector.shape_cast %81 : vector<64xf32> to vector<1x64xf32>
    %83 = vector.broadcast %82 : vector<1x64xf32> to vector<16x64xf32>
    %84 = arith.addf %79, %83 : vector<16x64xf32>
    %cst_32 = arith.constant 0.000000e+00 : f32
    %85 = vector.broadcast %cst_32 : f32 to vector<16x64xf32>
    %86 = arith.maximumf %84, %85 : vector<16x64xf32>
    %c0_33 = arith.constant 0 : index
    %c0_34 = arith.constant 0 : index
    %87 = vector.load %arg8[%c0_33, %c0_34] : memref<64x32xf32, #tpu.memory_space<vmem>>, vector<64x32xf32>
    %cst_35 = arith.constant dense<0.000000e+00> : vector<16x32xf32>
    %88 = tpu.matmul %86, %87, %cst_35 {dimension_numbers = #tpu.dot_dimension_numbers<[1], [0], [0], [1], [0, 0, 1, 1], [], []>} : vector<16x64xf32>, vector<64x32xf32>, vector<16x32xf32> -> vector<16x32xf32>
    %89 = arith.addf %77, %88 : vector<16x32xf32>
    %90 = arith.addf %71, %89 : vector<16x32xf32>
    %c0_36 = arith.constant 0 : index
    %c0_37 = arith.constant 0 : index
    %91 = vector.load %arg12[%c0_36, %c0_37] : memref<1x32xf32, #tpu.memory_space<vmem>>, vector<1x32xf32>
    %92 = vector.shape_cast %91 : vector<1x32xf32> to vector<32xf32>
    %c0_38 = arith.constant 0 : index
    %c0_39 = arith.constant 0 : index
    %93 = vector.load %arg13[%c0_38, %c0_39] : memref<1x32xf32, #tpu.memory_space<vmem>>, vector<1x32xf32>
    %94 = vector.shape_cast %93 : vector<1x32xf32> to vector<32xf32>
    %cst_40 = arith.constant dense<0.000000e+00> : vector<16xf32>
    %95 = vector.multi_reduction <add>, %90, %cst_40 [1] : vector<16x32xf32> to vector<16xf32>
    %96 = vector.shape_cast %95 : vector<16xf32> to vector<16x1xf32>
    %cst_41 = arith.constant 3.200000e+01 : f32
    %97 = vector.broadcast %cst_41 : f32 to vector<16x1xf32>
    %98 = arith.divf %96, %97 : vector<16x1xf32>
    %99 = vector.broadcast %98 : vector<16x1xf32> to vector<16x32xf32>
    %100 = arith.subf %90, %99 : vector<16x32xf32>
    %101 = arith.mulf %100, %100 : vector<16x32xf32>
    %cst_42 = arith.constant dense<0.000000e+00> : vector<16xf32>
    %102 = vector.multi_reduction <add>, %101, %cst_42 [1] : vector<16x32xf32> to vector<16xf32>
    %103 = vector.shape_cast %102 : vector<16xf32> to vector<16x1xf32>
    %cst_43 = arith.constant 3.200000e+01 : f32
    %104 = vector.broadcast %cst_43 : f32 to vector<16x1xf32>
    %105 = arith.divf %103, %104 : vector<16x1xf32>
    %106 = vector.broadcast %98 : vector<16x1xf32> to vector<16x32xf32>
    %107 = arith.subf %90, %106 : vector<16x32xf32>
    %cst_44 = arith.constant 9.99999974E-6 : f32
    %108 = vector.broadcast %cst_44 : f32 to vector<16x1xf32>
    %109 = arith.addf %105, %108 : vector<16x1xf32>
    %110 = math.rsqrt %109 : vector<16x1xf32>
    %111 = vector.broadcast %110 : vector<16x1xf32> to vector<16x32xf32>
    %112 = arith.mulf %107, %111 : vector<16x32xf32>
    %113 = vector.shape_cast %92 : vector<32xf32> to vector<1x32xf32>
    %114 = vector.broadcast %113 : vector<1x32xf32> to vector<16x32xf32>
    %115 = arith.mulf %112, %114 : vector<16x32xf32>
    %116 = vector.shape_cast %94 : vector<32xf32> to vector<1x32xf32>
    %117 = vector.broadcast %116 : vector<1x32xf32> to vector<16x32xf32>
    %118 = arith.addf %115, %117 : vector<16x32xf32>
    %119 = vector.shape_cast %118 : vector<16x32xf32> to vector<2x8x32xf32>
    %c0_45 = arith.constant 0 : index
    %c0_46 = arith.constant 0 : index
    %c0_47 = arith.constant 0 : index
    %120 = vector.load %arg14[%c0_45, %c0_46, %c0_47] : memref<2x8x32xf32, #tpu.memory_space<vmem>>, vector<2x8x32xf32>
    tpu.vector_store %arg14[%c0_45, %c0_46, %c0_47], %119 {strides = array<i32>} : memref<2x8x32xf32, #tpu.memory_space<vmem>>, vector<2x8x32xf32>,
    %121 = vector.shape_cast %31 : vector<8x8x8xf32> to vector<4x2x8x8xf32>
    %cst_48 = arith.constant dense<0.000000e+00> : vector<2x8x8xf32>
    %122 = vector.multi_reduction <add>, %121, %cst_48 [0] : vector<4x2x8x8xf32> to vector<2x8x8xf32>
    %cst_49 = arith.constant 4.000000e+00 : f32
    %123 = vector.broadcast %cst_49 : f32 to vector<2x8x8xf32>
    %124 = arith.divf %122, %123 : vector<2x8x8xf32>
    %c0_50 = arith.constant 0 : index
    %c0_51 = arith.constant 0 : index
    %c0_52 = arith.constant 0 : index
    %125 = vector.load %arg15[%c0_50, %c0_51, %c0_52] : memref<2x8x8xf32, #tpu.memory_space<vmem>>, vector<2x8x8xf32>
    tpu.vector_store %arg15[%c0_50, %c0_51, %c0_52], %124 {strides = array<i32>} : memref<2x8x8xf32, #tpu.memory_space<vmem>>, vector<2x8x8xf32>,
    return
  }
  func.func @transform_0(%arg0: i32) -> (i32, i32, i32) {
    %c0_i32 = arith.constant 0 : i32
    %c0_i32_0 = arith.constant 0 : i32
    %c0_i32_1 = arith.constant 0 : i32
    return %arg0, %c0_i32, %c0_i32_0 : i32, i32, i32
  }
  func.func @transform_1(%arg0: i32) -> (i32, i32) {
    %c0_i32 = arith.constant 0 : i32
    %c0_i32_0 = arith.constant 0 : i32
    %c0_i32_1 = arith.constant 0 : i32
    return %c0_i32, %c0_i32_0 : i32, i32
  }
  func.func @transform_2(%arg0: i32) -> (i32, i32) {
    %c0_i32 = arith.constant 0 : i32
    %c0_i32_0 = arith.constant 0 : i32
    %c0_i32_1 = arith.constant 0 : i32
    return %c0_i32, %c0_i32_0 : i32, i32
  }
  func.func @transform_3(%arg0: i32) -> (i32, i32) {
    %c0_i32 = arith.constant 0 : i32
    %c0_i32_0 = arith.constant 0 : i32
    %c0_i32_1 = arith.constant 0 : i32
    return %c0_i32, %c0_i32_0 : i32, i32
  }
  func.func @transform_4(%arg0: i32) -> (i32, i32) {
    %c0_i32 = arith.constant 0 : i32
    %c0_i32_0 = arith.constant 0 : i32
    %c0_i32_1 = arith.constant 0 : i32
    return %c0_i32, %c0_i32_0 : i32, i32
  }
  func.func @transform_5(%arg0: i32) -> (i32, i32) {
    %c0_i32 = arith.constant 0 : i32
    %c0_i32_0 = arith.constant 0 : i32
    %c0_i32_1 = arith.constant 0 : i32
    return %c0_i32, %c0_i32_0 : i32, i32
  }
  func.func @transform_6(%arg0: i32) -> (i32, i32) {
    %c0_i32 = arith.constant 0 : i32
    %c0_i32_0 = arith.constant 0 : i32
    %c0_i32_1 = arith.constant 0 : i32
    return %c0_i32, %c0_i32_0 : i32, i32
  }
  func.func @transform_7(%arg0: i32) -> (i32, i32) {
    %c0_i32 = arith.constant 0 : i32
    %c0_i32_0 = arith.constant 0 : i32
    %c0_i32_1 = arith.constant 0 : i32
    return %c0_i32, %c0_i32_0 : i32, i32
  }
  func.func @transform_8(%arg0: i32) -> (i32, i32) {
    %c0_i32 = arith.constant 0 : i32
    %c0_i32_0 = arith.constant 0 : i32
    %c0_i32_1 = arith.constant 0 : i32
    return %c0_i32, %c0_i32_0 : i32, i32
  }
  func.func @transform_9(%arg0: i32) -> (i32, i32) {
    %c0_i32 = arith.constant 0 : i32
    %c0_i32_0 = arith.constant 0 : i32
    %c0_i32_1 = arith.constant 0 : i32
    return %c0_i32, %c0_i32_0 : i32, i32
  }
  func.func @transform_10(%arg0: i32) -> (i32, i32) {
    %c0_i32 = arith.constant 0 : i32
    %c0_i32_0 = arith.constant 0 : i32
    %c0_i32_1 = arith.constant 0 : i32
    return %c0_i32, %c0_i32_0 : i32, i32
  }
  func.func @transform_11(%arg0: i32) -> (i32, i32) {
    %c0_i32 = arith.constant 0 : i32
    %c0_i32_0 = arith.constant 0 : i32
    %c0_i32_1 = arith.constant 0 : i32
    return %c0_i32, %c0_i32_0 : i32, i32
  }
  func.func @transform_12(%arg0: i32) -> (i32, i32) {
    %c0_i32 = arith.constant 0 : i32
    %c0_i32_0 = arith.constant 0 : i32
    %c0_i32_1 = arith.constant 0 : i32
    return %c0_i32, %c0_i32_0 : i32, i32
  }
  func.func @transform_13(%arg0: i32) -> (i32, i32, i32) {
    %c0_i32 = arith.constant 0 : i32
    %c0_i32_0 = arith.constant 0 : i32
    %c0_i32_1 = arith.constant 0 : i32
    return %arg0, %c0_i32, %c0_i32_0 : i32, i32, i32
  }
  func.func @transform_14(%arg0: i32) -> (i32, i32, i32) {
    %c0_i32 = arith.constant 0 : i32
    %c0_i32_0 = arith.constant 0 : i32
    %c0_i32_1 = arith.constant 0 : i32
    return %arg0, %c0_i32, %c0_i32_0 : i32, i32, i32
  }
}

module attributes {stable_mosaic.version = 11 : i64} {
  func.func @encoder_layer_kernel(%arg0: i32, %arg1: memref<2x8x32xf32, #tpu.memory_space<vmem>>, %arg2: memref<32x96xf32, #tpu.memory_space<vmem>>, %arg3: memref<1x96xf32, #tpu.memory_space<vmem>>, %arg4: memref<32x32xf32, #tpu.memory_space<vmem>>, %arg5: memref<1x32xf32, #tpu.memory_space<vmem>>, %arg6: memref<32x64xf32, #tpu.memory_space<vmem>>, %arg7: memref<1x64xf32, #tpu.memory_space<vmem>>, %arg8: memref<64x32xf32, #tpu.memory_space<vmem>>, %arg9: memref<1x32xf32, #tpu.memory_space<vmem>>, %arg10: memref<1x32xf32, #tpu.memory_space<vmem>>, %arg11: memref<1x32xf32, #tpu.memory_space<vmem>>, %arg12: memref<1x32xf32, #tpu.memory_space<vmem>>, %arg13: memref<1x32xf32, #tpu.memory_space<vmem>>, %arg14: memref<2x8x32xf32, #tpu.memory_space<vmem>>, %arg15: memref<2x8x8xf32, #tpu.memory_space<vmem>>) attributes {dimension_semantics = [#tpu.dimension_semantics<parallel>], iteration_bounds = array<i64: 1>, scalar_prefetch = 0 : i64, scratch_operands = 0 : i64, tpu.core_type = #tpu.core_type<tc>, window_params = [{transform_indices = @transform_0, window_bounds = array<i64: 2, 8, 32>}, {pipeline_mode = #tpu.pipeline_mode<synchronous>, transform_indices = @transform_1, window_bounds = array<i64: 32, 96>}, {pipeline_mode = #tpu.pipeline_mode<synchronous>, transform_indices = @transform_2, window_bounds = array<i64: 1, 96>}, {pipeline_mode = #tpu.pipeline_mode<synchronous>, transform_indices = @transform_3, window_bounds = array<i64: 32, 32>}, {pipeline_mode = #tpu.pipeline_mode<synchronous>, transform_indices = @transform_4, window_bounds = array<i64: 1, 32>}, {pipeline_mode = #tpu.pipeline_mode<synchronous>, transform_indices = @transform_5, window_bounds = array<i64: 32, 64>}, {pipeline_mode = #tpu.pipeline_mode<synchronous>, transform_indices = @transform_6, window_bounds = array<i64: 1, 64>}, {pipeline_mode = #tpu.pipeline_mode<synchronous>, transform_indices = @transform_7, window_bounds = array<i64: 64, 32>}, {pipeline_mode = #tpu.pipeline_mode<synchronous>, transform_indices = @transform_8, window_bounds = array<i64: 1, 32>}, {pipeline_mode = #tpu.pipeline_mode<synchronous>, transform_indices = @transform_9, window_bounds = array<i64: 1, 32>}, {pipeline_mode = #tpu.pipeline_mode<synchronous>, transform_indices = @transform_10, window_bounds = array<i64: 1, 32>}, {pipeline_mode = #tpu.pipeline_mode<synchronous>, transform_indices = @transform_11, window_bounds = array<i64: 1, 32>}, {pipeline_mode = #tpu.pipeline_mode<synchronous>, transform_indices = @transform_12, window_bounds = array<i64: 1, 32>}, {transform_indices = @transform_13, window_bounds = array<i64: 2, 8, 32>}, {transform_indices = @transform_14, window_bounds = array<i64: 2, 8, 8>}]} {
    %c0 = arith.constant 0 : index
    %c0_0 = arith.constant 0 : index
    %c0_1 = arith.constant 0 : index
    %0 = vector.load %arg1[%c0, %c0_0, %c0_1] : memref<2x8x32xf32, #tpu.memory_space<vmem>>, vector<2x8x32xf32>
    %1 = vector.shape_cast %0 : vector<2x8x32xf32> to vector<16x32xf32>
    %c0_2 = arith.constant 0 : index
    %c0_3 = arith.constant 0 : index
    %2 = vector.load %arg2[%c0_2, %c0_3] : memref<32x96xf32, #tpu.memory_space<vmem>>, vector<32x96xf32>
    %cst = arith.constant dense<0.000000e+00> : vector<16x96xf32>
    %3 = tpu.matmul %1, %2, %cst {dimension_numbers = #tpu.dot_dimension_numbers<[1], [0], [0], [1], [0, 0, 1, 1], [], []>} : vector<16x32xf32>, vector<32x96xf32>, vector<16x96xf32> -> vector<16x96xf32>
    %c0_4 = arith.constant 0 : index
    %c0_5 = arith.constant 0 : index
    %4 = vector.load %arg3[%c0_4, %c0_5] : memref<1x96xf32, #tpu.memory_space<vmem>>, vector<1x96xf32>
    %5 = vector.shape_cast %4 : vector<1x96xf32> to vector<96xf32>
    %6 = vector.shape_cast %5 : vector<96xf32> to vector<1x96xf32>
    %7 = vector.broadcast %6 : vector<1x96xf32> to vector<16x96xf32>
    %8 = arith.addf %3, %7 : vector<16x96xf32>
    %9 = vector.extract_strided_slice %8 {offsets = [0, 0], sizes = [16, 32], strides = [1, 1]} : vector<16x96xf32> to vector<16x32xf32>
    %10 = vector.shape_cast %9 : vector<16x32xf32> to vector<16x4x8xf32>
    %11 = tpu.transpose %10, [1, 0, 2] : vector<16x4x8xf32> -> vector<4x16x8xf32>
    %12 = vector.shape_cast %11 : vector<4x16x8xf32> to vector<8x8x8xf32>
    %13 = vector.extract_strided_slice %8 {offsets = [0, 32], sizes = [16, 32], strides = [1, 1]} : vector<16x96xf32> to vector<16x32xf32>
    %14 = vector.shape_cast %13 : vector<16x32xf32> to vector<16x4x8xf32>
    %15 = tpu.transpose %14, [1, 0, 2] : vector<16x4x8xf32> -> vector<4x16x8xf32>
    %16 = vector.shape_cast %15 : vector<4x16x8xf32> to vector<8x8x8xf32>
    %17 = vector.extract_strided_slice %8 {offsets = [0, 64], sizes = [16, 32], strides = [1, 1]} : vector<16x96xf32> to vector<16x32xf32>
    %18 = vector.shape_cast %17 : vector<16x32xf32> to vector<16x4x8xf32>
    %19 = tpu.transpose %18, [1, 0, 2] : vector<16x4x8xf32> -> vector<4x16x8xf32>
    %20 = vector.shape_cast %19 : vector<4x16x8xf32> to vector<8x8x8xf32>
    "tpu.trace_start"() <{level = 10 : i32, message = "bqd,bkd->bqk"}> : () -> ()
    %cst_6 = arith.constant dense<0.000000e+00> : vector<8x8x8xf32>
    %21 = tpu.matmul %12, %16, %cst_6 {dimension_numbers = #tpu.dot_dimension_numbers<[2], [2], [1], [1], [0, 0, 0, 1, 1, 1], [0], [0]>} : vector<8x8x8xf32>, vector<8x8x8xf32>, vector<8x8x8xf32> -> vector<8x8x8xf32>
    "tpu.trace_stop"() : () -> ()
    %cst_7 = arith.constant dense<0xFF800000> : vector<8x8xf32>
    %22 = vector.multi_reduction <maximumf>, %21, %cst_7 [2] : vector<8x8x8xf32> to vector<8x8xf32>
    %23 = vector.shape_cast %22 : vector<8x8xf32> to vector<8x8x1xf32>
    %24 = vector.broadcast %23 : vector<8x8x1xf32> to vector<8x8x8xf32>
    %25 = arith.subf %21, %24 : vector<8x8x8xf32>
    %26 = math.exp %25 : vector<8x8x8xf32>
    %cst_8 = arith.constant dense<0.000000e+00> : vector<8x8xf32>
    %27 = vector.multi_reduction <add>, %26, %cst_8 [2] : vector<8x8x8xf32> to vector<8x8xf32>
    %28 = vector.shape_cast %27 : vector<8x8xf32> to vector<8x8x1xf32>
    %29 = tpu.reciprocal %28 {approx = true} : vector<8x8x1xf32> -> vector<8x8x1xf32>
    %30 = vector.broadcast %29 : vector<8x8x1xf32> to vector<8x8x8xf32>
    %31 = arith.mulf %26, %30 : vector<8x8x8xf32>
    "tpu.trace_start"() <{level = 10 : i32, message = "bqk,bkd->bqd"}> : () -> ()
    %cst_9 = arith.constant dense<0.000000e+00> : vector<8x8x8xf32>
    %32 = tpu.matmul %31, %20, %cst_9 {dimension_numbers = #tpu.dot_dimension_numbers<[2], [1], [1], [2], [0, 0, 0, 1, 1, 2], [0], [0]>} : vector<8x8x8xf32>, vector<8x8x8xf32>, vector<8x8x8xf32> -> vector<8x8x8xf32>
    "tpu.trace_stop"() : () -> ()
    %33 = vector.shape_cast %32 : vector<8x8x8xf32> to vector<4x16x8xf32>
    %34 = tpu.transpose %33, [1, 0, 2] : vector<4x16x8xf32> -> vector<16x4x8xf32>
    %35 = vector.shape_cast %34 : vector<16x4x8xf32> to vector<16x32xf32>
    %c0_10 = arith.constant 0 : index
    %c0_11 = arith.constant 0 : index
    %36 = vector.load %arg4[%c0_10, %c0_11] : memref<32x32xf32, #tpu.memory_space<vmem>>, vector<32x32xf32>
    %cst_12 = arith.constant dense<0.000000e+00> : vector<16x32xf32>
    %37 = tpu.matmul %35, %36, %cst_12 {dimension_numbers = #tpu.dot_dimension_numbers<[1], [0], [0], [1], [0, 0, 1, 1], [], []>} : vector<16x32xf32>, vector<32x32xf32>, vector<16x32xf32> -> vector<16x32xf32>
    %38 = arith.addf %1, %37 : vector<16x32xf32>
    %c0_13 = arith.constant 0 : index
    %c0_14 = arith.constant 0 : index
    %39 = vector.load %arg5[%c0_13, %c0_14] : memref<1x32xf32, #tpu.memory_space<vmem>>, vector<1x32xf32>
    %40 = vector.shape_cast %39 : vector<1x32xf32> to vector<32xf32>
    %41 = vector.shape_cast %40 : vector<32xf32> to vector<1x32xf32>
    %42 = vector.broadcast %41 : vector<1x32xf32> to vector<16x32xf32>
    %43 = arith.addf %38, %42 : vector<16x32xf32>
    %c0_15 = arith.constant 0 : index
    %c0_16 = arith.constant 0 : index
    %44 = vector.load %arg10[%c0_15, %c0_16] : memref<1x32xf32, #tpu.memory_space<vmem>>, vector<1x32xf32>
    %45 = vector.shape_cast %44 : vector<1x32xf32> to vector<32xf32>
    %c0_17 = arith.constant 0 : index
    %c0_18 = arith.constant 0 : index
    %46 = vector.load %arg11[%c0_17, %c0_18] : memref<1x32xf32, #tpu.memory_space<vmem>>, vector<1x32xf32>
    %47 = vector.shape_cast %46 : vector<1x32xf32> to vector<32xf32>
    %cst_19 = arith.constant dense<0.000000e+00> : vector<16xf32>
    %48 = vector.multi_reduction <add>, %43, %cst_19 [1] : vector<16x32xf32> to vector<16xf32>
    %49 = vector.shape_cast %48 : vector<16xf32> to vector<16x1xf32>
    %cst_20 = arith.constant 3.200000e+01 : f32
    %50 = vector.broadcast %cst_20 : f32 to vector<16x1xf32>
    %51 = arith.divf %49, %50 : vector<16x1xf32>
    %52 = vector.broadcast %51 : vector<16x1xf32> to vector<16x32xf32>
    %53 = arith.subf %43, %52 : vector<16x32xf32>
    %54 = arith.mulf %53, %53 : vector<16x32xf32>
    %cst_21 = arith.constant dense<0.000000e+00> : vector<16xf32>
    %55 = vector.multi_reduction <add>, %54, %cst_21 [1] : vector<16x32xf32> to vector<16xf32>
    %56 = vector.shape_cast %55 : vector<16xf32> to vector<16x1xf32>
    %cst_22 = arith.constant 3.200000e+01 : f32
    %57 = vector.broadcast %cst_22 : f32 to vector<16x1xf32>
    %58 = arith.divf %56, %57 : vector<16x1xf32>
    %59 = vector.broadcast %51 : vector<16x1xf32> to vector<16x32xf32>
    %60 = arith.subf %43, %59 : vector<16x32xf32>
    %cst_23 = arith.constant 9.99999974E-6 : f32
    %61 = vector.broadcast %cst_23 : f32 to vector<16x1xf32>
    %62 = arith.addf %58, %61 : vector<16x1xf32>
    %63 = math.rsqrt %62 : vector<16x1xf32>
    %64 = vector.broadcast %63 : vector<16x1xf32> to vector<16x32xf32>
    %65 = arith.mulf %60, %64 : vector<16x32xf32>
    %66 = vector.shape_cast %45 : vector<32xf32> to vector<1x32xf32>
    %67 = vector.broadcast %66 : vector<1x32xf32> to vector<16x32xf32>
    %68 = arith.mulf %65, %67 : vector<16x32xf32>
    %69 = vector.shape_cast %47 : vector<32xf32> to vector<1x32xf32>
    %70 = vector.broadcast %69 : vector<1x32xf32> to vector<16x32xf32>
    %71 = arith.addf %68, %70 : vector<16x32xf32>
    %cst_24 = arith.constant 0.000000e+00 : f32
    %72 = vector.broadcast %cst_24 : f32 to vector<16x32xf32>
    %c0_25 = arith.constant 0 : index
    %c0_26 = arith.constant 0 : index
    %73 = vector.load %arg9[%c0_25, %c0_26] : memref<1x32xf32, #tpu.memory_space<vmem>>, vector<1x32xf32>
    %74 = vector.shape_cast %73 : vector<1x32xf32> to vector<32xf32>
    %75 = vector.shape_cast %74 : vector<32xf32> to vector<1x32xf32>
    %76 = vector.broadcast %75 : vector<1x32xf32> to vector<16x32xf32>
    %77 = arith.addf %72, %76 : vector<16x32xf32>
    %c0_27 = arith.constant 0 : index
    %c0_28 = arith.constant 0 : index
    %78 = vector.load %arg6[%c0_27, %c0_28] : memref<32x64xf32, #tpu.memory_space<vmem>>, vector<32x64xf32>
    %cst_29 = arith.constant dense<0.000000e+00> : vector<16x64xf32>
    %79 = tpu.matmul %71, %78, %cst_29 {dimension_numbers = #tpu.dot_dimension_numbers<[1], [0], [0], [1], [0, 0, 1, 1], [], []>} : vector<16x32xf32>, vector<32x64xf32>, vector<16x64xf32> -> vector<16x64xf32>
    %c0_30 = arith.constant 0 : index
    %c0_31 = arith.constant 0 : index
    %80 = vector.load %arg7[%c0_30, %c0_31] : memref<1x64xf32, #tpu.memory_space<vmem>>, vector<1x64xf32>
    %81 = vector.shape_cast %80 : vector<1x64xf32> to vector<64xf32>
    %82 = vector.shape_cast %81 : vector<64xf32> to vector<1x64xf32>
    %83 = vector.broadcast %82 : vector<1x64xf32> to vector<16x64xf32>
    %84 = arith.addf %79, %83 : vector<16x64xf32>
    %cst_32 = arith.constant 0.000000e+00 : f32
    %85 = vector.broadcast %cst_32 : f32 to vector<16x64xf32>
    %86 = arith.maximumf %84, %85 : vector<16x64xf32>
    %c0_33 = arith.constant 0 : index
    %c0_34 = arith.constant 0 : index
    %87 = vector.load %arg8[%c0_33, %c0_34] : memref<64x32xf32, #tpu.memory_space<vmem>>, vector<64x32xf32>
    %cst_35 = arith.constant dense<0.000000e+00> : vector<16x32xf32>
    %88 = tpu.matmul %86, %87, %cst_35 {dimension_numbers = #tpu.dot_dimension_numbers<[1], [0], [0], [1], [0, 0, 1, 1], [], []>} : vector<16x64xf32>, vector<64x32xf32>, vector<16x32xf32> -> vector<16x32xf32>
    %89 = arith.addf %77, %88 : vector<16x32xf32>
    %90 = arith.addf %71, %89 : vector<16x32xf32>
    %c0_36 = arith.constant 0 : index
    %c0_37 = arith.constant 0 : index
    %91 = vector.load %arg12[%c0_36, %c0_37] : memref<1x32xf32, #tpu.memory_space<vmem>>, vector<1x32xf32>
    %92 = vector.shape_cast %91 : vector<1x32xf32> to vector<32xf32>
    %c0_38 = arith.constant 0 : index
    %c0_39 = arith.constant 0 : index
    %93 = vector.load %arg13[%c0_38, %c0_39] : memref<1x32xf32, #tpu.memory_space<vmem>>, vector<1x32xf32>
    %94 = vector.shape_cast %93 : vector<1x32xf32> to vector<32xf32>
    %cst_40 = arith.constant dense<0.000000e+00> : vector<16xf32>
    %95 = vector.multi_reduction <add>, %90, %cst_40 [1] : vector<16x32xf32> to vector<16xf32>
    %96 = vector.shape_cast %95 : vector<16xf32> to vector<16x1xf32>
    %cst_41 = arith.constant 3.200000e+01 : f32
    %97 = vector.broadcast %cst_41 : f32 to vector<16x1xf32>
    %98 = arith.divf %96, %97 : vector<16x1xf32>
    %99 = vector.broadcast %98 : vector<16x1xf32> to vector<16x32xf32>
    %100 = arith.subf %90, %99 : vector<16x32xf32>
    %101 = arith.mulf %100, %100 : vector<16x32xf32>
    %cst_42 = arith.constant dense<0.000000e+00> : vector<16xf32>
    %102 = vector.multi_reduction <add>, %101, %cst_42 [1] : vector<16x32xf32> to vector<16xf32>
    %103 = vector.shape_cast %102 : vector<16xf32> to vector<16x1xf32>
    %cst_43 = arith.constant 3.200000e+01 : f32
    %104 = vector.broadcast %cst_43 : f32 to vector<16x1xf32>
    %105 = arith.divf %103, %104 : vector<16x1xf32>
    %106 = vector.broadcast %98 : vector<16x1xf32> to vector<16x32xf32>
    %107 = arith.subf %90, %106 : vector<16x32xf32>
    %cst_44 = arith.constant 9.99999974E-6 : f32
    %108 = vector.broadcast %cst_44 : f32 to vector<16x1xf32>
    %109 = arith.addf %105, %108 : vector<16x1xf32>
    %110 = math.rsqrt %109 : vector<16x1xf32>
    %111 = vector.broadcast %110 : vector<16x1xf32> to vector<16x32xf32>
    %112 = arith.mulf %107, %111 : vector<16x32xf32>
    %113 = vector.shape_cast %92 : vector<32xf32> to vector<1x32xf32>
    %114 = vector.broadcast %113 : vector<1x32xf32> to vector<16x32xf32>
    %115 = arith.mulf %112, %114 : vector<16x32xf32>
    %116 = vector.shape_cast %94 : vector<32xf32> to vector<1x32xf32>
    %117 = vector.broadcast %116 : vector<1x32xf32> to vector<16x32xf32>
    %118 = arith.addf %115, %117 : vector<16x32xf32>
    %119 = vector.shape_cast %118 : vector<16x32xf32> to vector<2x8x32xf32>
    %c0_45 = arith.constant 0 : index
    %c0_46 = arith.constant 0 : index
    %c0_47 = arith.constant 0 : index
    %120 = vector.load %arg14[%c0_45, %c0_46, %c0_47] : memref<2x8x32xf32, #tpu.memory_space<vmem>>, vector<2x8x32xf32>
    tpu.vector_store %arg14[%c0_45, %c0_46, %c0_47], %119 {strides = array<i32>} : memref<2x8x32xf32, #tpu.memory_space<vmem>>, vector<2x8x32xf32>,
    %121 = vector.shape_cast %31 : vector<8x8x8xf32> to vector<4x2x8x8xf32>
    %cst_48 = arith.constant dense<0.000000e+00> : vector<2x8x8xf32>
    %122 = vector.multi_reduction <add>, %121, %cst_48 [0] : vector<4x2x8x8xf32> to vector<2x8x8xf32>
    %cst_49 = arith.constant 4.000000e+00 : f32
    %123 = vector.broadcast %cst_49 : f32 to vector<2x8x8xf32>
    %124 = arith.divf %122, %123 : vector<2x8x8xf32>
    %c0_50 = arith.constant 0 : index
    %c0_51 = arith.constant 0 : index
    %c0_52 = arith.constant 0 : index
    %125 = vector.load %arg15[%c0_50, %c0_51, %c0_52] : memref<2x8x8xf32, #tpu.memory_space<vmem>>, vector<2x8x8xf32>
    tpu.vector_store %arg15[%c0_50, %c0_51, %c0_52], %124 {strides = array<i32>} : memref<2x8x8xf32, #tpu.memory_space<vmem>>, vector<2x8x8xf32>,
    return
  }
  func.func @transform_0(%arg0: i32) -> (i32, i32, i32) {
    %c0_i32 = arith.constant 0 : i32
    %c0_i32_0 = arith.constant 0 : i32
    %c0_i32_1 = arith.constant 0 : i32
    return %arg0, %c0_i32, %c0_i32_0 : i32, i32, i32
  }
  func.func @transform_1(%arg0: i32) -> (i32, i32) {
    %c0_i32 = arith.constant 0 : i32
    %c0_i32_0 = arith.constant 0 : i32
    %c0_i32_1 = arith.constant 0 : i32
    return %c0_i32, %c0_i32_0 : i32, i32
  }
  func.func @transform_2(%arg0: i32) -> (i32, i32) {
    %c0_i32 = arith.constant 0 : i32
    %c0_i32_0 = arith.constant 0 : i32
    %c0_i32_1 = arith.constant 0 : i32
    return %c0_i32, %c0_i32_0 : i32, i32
  }
  func.func @transform_3(%arg0: i32) -> (i32, i32) {
    %c0_i32 = arith.constant 0 : i32
    %c0_i32_0 = arith.constant 0 : i32
    %c0_i32_1 = arith.constant 0 : i32
    return %c0_i32, %c0_i32_0 : i32, i32
  }
  func.func @transform_4(%arg0: i32) -> (i32, i32) {
    %c0_i32 = arith.constant 0 : i32
    %c0_i32_0 = arith.constant 0 : i32
    %c0_i32_1 = arith.constant 0 : i32
    return %c0_i32, %c0_i32_0 : i32, i32
  }
  func.func @transform_5(%arg0: i32) -> (i32, i32) {
    %c0_i32 = arith.constant 0 : i32
    %c0_i32_0 = arith.constant 0 : i32
    %c0_i32_1 = arith.constant 0 : i32
    return %c0_i32, %c0_i32_0 : i32, i32
  }
  func.func @transform_6(%arg0: i32) -> (i32, i32) {
    %c0_i32 = arith.constant 0 : i32
    %c0_i32_0 = arith.constant 0 : i32
    %c0_i32_1 = arith.constant 0 : i32
    return %c0_i32, %c0_i32_0 : i32, i32
  }
  func.func @transform_7(%arg0: i32) -> (i32, i32) {
    %c0_i32 = arith.constant 0 : i32
    %c0_i32_0 = arith.constant 0 : i32
    %c0_i32_1 = arith.constant 0 : i32
    return %c0_i32, %c0_i32_0 : i32, i32
  }
  func.func @transform_8(%arg0: i32) -> (i32, i32) {
    %c0_i32 = arith.constant 0 : i32
    %c0_i32_0 = arith.constant 0 : i32
    %c0_i32_1 = arith.constant 0 : i32
    return %c0_i32, %c0_i32_0 : i32, i32
  }
  func.func @transform_9(%arg0: i32) -> (i32, i32) {
    %c0_i32 = arith.constant 0 : i32
    %c0_i32_0 = arith.constant 0 : i32
    %c0_i32_1 = arith.constant 0 : i32
    return %c0_i32, %c0_i32_0 : i32, i32
  }
  func.func @transform_10(%arg0: i32) -> (i32, i32) {
    %c0_i32 = arith.constant 0 : i32
    %c0_i32_0 = arith.constant 0 : i32
    %c0_i32_1 = arith.constant 0 : i32
    return %c0_i32, %c0_i32_0 : i32, i32
  }
  func.func @transform_11(%arg0: i32) -> (i32, i32) {
    %c0_i32 = arith.constant 0 : i32
    %c0_i32_0 = arith.constant 0 : i32
    %c0_i32_1 = arith.constant 0 : i32
    return %c0_i32, %c0_i32_0 : i32, i32
  }
  func.func @transform_12(%arg0: i32) -> (i32, i32) {
    %c0_i32 = arith.constant 0 : i32
    %c0_i32_0 = arith.constant 0 : i32
    %c0_i32_1 = arith.constant 0 : i32
    return %c0_i32, %c0_i32_0 : i32, i32
  }
  func.func @transform_13(%arg0: i32) -> (i32, i32, i32) {
    %c0_i32 = arith.constant 0 : i32
    %c0_i32_0 = arith.constant 0 : i32
    %c0_i32_1 = arith.constant 0 : i32
    return %arg0, %c0_i32, %c0_i32_0 : i32, i32, i32
  }
  func.func @transform_14(%arg0: i32) -> (i32, i32, i32) {
    %c0_i32 = arith.constant 0 : i32
    %c0_i32_0 = arith.constant 0 : i32
    %c0_i32_1 = arith.constant 0 : i32
    return %arg0, %c0_i32, %c0_i32_0 : i32, i32, i32
  }
}

</mosaic_0001>

<llo_original>
// kernel: custom_encoder_layer.1
$region0: #{custom_encoder_layer.1}
  #allocation0 [shape = 'u32[]', space=smem, size = 0x4, offset = 0x4, fixed_abs, tag = 'smem constant byte address 0x4 - core index']
  #allocation1 [shape = 'u32[144,128]{1,0:T(1,128)}', space=vmem, size = 0x12000, scoped, tag = 'internal scratch']
  %s0 = inlined_call_operand.vmem [shape: f32[2,8,32], index: 0, kind: input, shape index: {}]
  %s1 = inlined_call_operand.vmem [shape: f32[32,96], index: 1, kind: input, shape index: {}]
  %s2 = inlined_call_operand.vmem [shape: f32[1,96], index: 2, kind: input, shape index: {}]
  %s3 = inlined_call_operand.vmem [shape: f32[32,32], index: 3, kind: input, shape index: {}]
  %s4 = inlined_call_operand.vmem [shape: f32[1,32], index: 4, kind: input, shape index: {}]
  %s5 = inlined_call_operand.vmem [shape: f32[32,64], index: 5, kind: input, shape index: {}]
  %s6 = inlined_call_operand.vmem [shape: f32[1,64], index: 6, kind: input, shape index: {}]
  %s7 = inlined_call_operand.vmem [shape: f32[64,32], index: 7, kind: input, shape index: {}]
  %s8 = inlined_call_operand.vmem [shape: f32[1,32], index: 8, kind: input, shape index: {}]
  %s9 = inlined_call_operand.vmem [shape: f32[1,32], index: 9, kind: input, shape index: {}]
  %s10 = inlined_call_operand.vmem [shape: f32[1,32], index: 10, kind: input, shape index: {}]
  %s11 = inlined_call_operand.vmem [shape: f32[1,32], index: 11, kind: input, shape index: {}]
  %s12 = inlined_call_operand.vmem [shape: f32[1,32], index: 12, kind: input, shape index: {}]
  %s13 = inlined_call_operand.vmem [shape: f32[2,8,32], index: 13, kind: output, shape index: {0}]
  %s14 = inlined_call_operand.hbm [shape: f32[2,8,8], index: 14, kind: output, shape index: {1}]
  %15 = xla_tuple %s13, %s14
  %s16 = sld [smem:[#allocation0]]
  $region70: #{custom_encoder_layer.1} parent=0
    _
  %s18 = ssub.s32 1, %s16
  %s19 = scalar_select 0, %s18, %s16
  $region1: #{custom_encoder_layer.1} parent=0
    #allocation2 [shape = 'u8[8192]{0}', space=vmem, size = 0x2000, scoped, tag = 'output window, operand 1, single buffered']
    #allocation3 [shape = 's32[1]{0}', space=sflag, size = 0x4, scoped, tag = 'scoped memory for custom_encoder_layer.1']
    %20 = vsyncpa [#allocation3], 0
    // Predicated region
    $region2: #{custom_encoder_layer.1} parent=1 // pred_check
      _
    $region3: #{custom_encoder_layer.1} parent=1 // pred_check_branch
      %22 = sbr.rel (0) target = $region5
    $region4: #{custom_encoder_layer.1} parent=1 // pred_region
      _
    $region5: #{custom_encoder_layer.1} parent=1 // pred_fallthru
      _
    // Predicated region
    $region6: #{custom_encoder_layer.1} parent=1 // pred_check
      _
    $region7: #{custom_encoder_layer.1} parent=1 // pred_check_branch
      %24 = sbr.rel (0) target = $region9
    $region8: #{custom_encoder_layer.1} parent=1 // pred_region
      _
    $region9: #{custom_encoder_layer.1} parent=1 // pred_fallthru
      _
    // Predicated region
    $region10: #{custom_encoder_layer.1} parent=1 // pred_check
      _
    $region11: #{custom_encoder_layer.1} parent=1 // pred_check_branch
      %26 = sbr.rel (0) target = $region13
    $region12: #{custom_encoder_layer.1} parent=1 // pred_region
      _
    $region13: #{custom_encoder_layer.1} parent=1 // pred_fallthru
      _
    // Predicated region
    $region14: #{custom_encoder_layer.1} parent=1 // pred_check
      _
    $region15: #{custom_encoder_layer.1} parent=1 // pred_check_branch
      %28 = sbr.rel (0) target = $region17
    $region16: #{custom_encoder_layer.1} parent=1 // pred_region
      _
    $region17: #{custom_encoder_layer.1} parent=1 // pred_fallthru
      _
    // Predicated region
    $region18: #{custom_encoder_layer.1} parent=1 // pred_check
      _
    $region19: #{custom_encoder_layer.1} parent=1 // pred_check_branch
      %30 = sbr.rel (0) target = $region21
    $region20: #{custom_encoder_layer.1} parent=1 // pred_region
      _
    $region21: #{custom_encoder_layer.1} parent=1 // pred_fallthru
      _
    // Predicated region
    $region22: #{custom_encoder_layer.1} parent=1 // pred_check
      _
    $region23: #{custom_encoder_layer.1} parent=1 // pred_check_branch
      %32 = sbr.rel (0) target = $region25
    $region24: #{custom_encoder_layer.1} parent=1 // pred_region
      _
    $region25: #{custom_encoder_layer.1} parent=1 // pred_fallthru
      _
    // Predicated region
    $region26: #{custom_encoder_layer.1} parent=1 // pred_check
      _
    $region27: #{custom_encoder_layer.1} parent=1 // pred_check_branch
      %34 = sbr.rel (0) target = $region29
    $region28: #{custom_encoder_layer.1} parent=1 // pred_region
      _
    $region29: #{custom_encoder_layer.1} parent=1 // pred_fallthru
      _
    // Predicated region
    $region30: #{custom_encoder_layer.1} parent=1 // pred_check
      _
    $region31: #{custom_encoder_layer.1} parent=1 // pred_check_branch
      %36 = sbr.rel (0) target = $region33
    $region32: #{custom_encoder_layer.1} parent=1 // pred_region
      _
    $region33: #{custom_encoder_layer.1} parent=1 // pred_fallthru
      _
    // Predicated region
    $region34: #{custom_encoder_layer.1} parent=1 // pred_check
      _
    $region35: #{custom_encoder_layer.1} parent=1 // pred_check_branch
      %38 = sbr.rel (0) target = $region37
    $region36: #{custom_encoder_layer.1} parent=1 // pred_region
      _
    $region37: #{custom_encoder_layer.1} parent=1 // pred_fallthru
      _
    // Predicated region
    $region38: #{custom_encoder_layer.1} parent=1 // pred_check
      _
    $region39: #{custom_encoder_layer.1} parent=1 // pred_check_branch
      %40 = sbr.rel (0) target = $region41
    $region40: #{custom_encoder_layer.1} parent=1 // pred_region
      _
    $region41: #{custom_encoder_layer.1} parent=1 // pred_fallthru
      _
    // Predicated region
    $region42: #{custom_encoder_layer.1} parent=1 // pred_check
      _
    $region43: #{custom_encoder_layer.1} parent=1 // pred_check_branch
      %42 = sbr.rel (0) target = $region45
    $region44: #{custom_encoder_layer.1} parent=1 // pred_region
      _
    $region45: #{custom_encoder_layer.1} parent=1 // pred_fallthru
      _
    // Predicated region
    $region46: #{custom_encoder_layer.1} parent=1 // pred_check
      _
    $region47: #{custom_encoder_layer.1} parent=1 // pred_check_branch
      %44 = sbr.rel (0) target = $region49
    $region48: #{custom_encoder_layer.1} parent=1 // pred_region
      _
    $region49: #{custom_encoder_layer.1} parent=1 // pred_fallthru
      _
    // Predicated region
    $region50: #{custom_encoder_layer.1} parent=1 // pred_check
      _
    $region51: #{custom_encoder_layer.1} parent=1 // pred_check_branch
      %46 = sbr.rel (0) target = $region53
    $region52: #{custom_encoder_layer.1} parent=1 // pred_region
      _
    $region53: #{custom_encoder_layer.1} parent=1 // pred_fallthru
      _
    %v47 = vld [vmem:[%s0] sm:$0xff]
    %v48 = vld [vmem:[%s0 + $0x8] sm:$0xff]
    %v49 = vld [vmem:[%s1] sm:$0xff]
    %v50 = vld [vmem:[%s1 + $0x8] sm:$0xff]
    %v51 = vld [vmem:[%s1 + $0x10] sm:$0xff]
    %v52 = vld [vmem:[%s1 + $0x18] sm:$0xff]
    %v53 = vld [vmem:[%s2] sm:$0x1]
    %v55 = vlaneseq
    %v56 = vshrl.u32 %v55, 7
    %v57 = vsub.s32 0, %v56
    %v58 = vrot.slane %v53, %v57
    %vm60 = vcmask 261120
    %v62 = vsel %vm60, %v47, 0
    %v65 = vsel %vm60, %v48, 0
    %67 = vmatprep.subr.mxu0 0.0
    %68 = vmatpush1.msra.mxu0 0.0
    %69 = vmatprep.subr.mxu0 0.0
    %70 = vmatpush1.msra.mxu0 0.0
    %71 = vmatprep.subr.mxu0 0.0
    %72 = vmatpush1.msra.mxu0 0.0
    %73 = vmatprep.subr.mxu0 0.0
    %74 = vmatpush1.msra.mxu0 0.0
    %75 = vmatprep.subr.mxu0 0.0
    %76 = vmatpush1.msra.mxu0 0.0
    %77 = vmatprep.subr.mxu0 0.0
    %78 = vmatpush1.msra.mxu0 0.0
    %79 = vmatprep.subr.mxu0 0.0
    %80 = vmatpush1.msra.mxu0 0.0
    %81 = vmatprep.subr.mxu0 0.0
    %82 = vmatpush1.msra.mxu0 0.0
    %83 = vmatprep.subr.mxu0 0.0
    %84 = vmatpush1.msra.mxu0 0.0
    %85 = vmatprep.subr.mxu0 0.0
    %86 = vmatpush1.msra.mxu0 0.0
    %87 = vmatprep.subr.mxu0 0.0
    %88 = vmatpush1.msra.mxu0 0.0
    %89 = vmatprep.subr.mxu0 0.0
    %90 = vmatpush1.msra.mxu0 0.0
    %91 = vmatprep.subr.mxu0 0.0
    %92 = vmatpush1.msra.mxu0 %v52
    %93 = vmatprep.subr.mxu0 0.0
    %94 = vmatpush1.msra.mxu0 %v51
    %95 = vmatprep.subr.mxu0 0.0
    %96 = vmatpush1.msra.mxu0 %v50
    %97 = vmatprep.subr.mxu0 0.0
    %98 = vmatpush1.msra.mxu0 %v49
    %99 = vmatprep.subr.mxu0 0.0
    %100 = vmatpush2.msra.mxu0 0.0
    %101 = vmatprep.subr.mxu0 0.0
    %102 = vmatpush2.msra.mxu0 0.0
    %103 = vmatprep.subr.mxu0 0.0
    %104 = vmatpush2.msra.mxu0 0.0
    %105 = vmatprep.subr.mxu0 0.0
    %106 = vmatpush2.msra.mxu0 0.0
    %107 = vmatprep.subr.mxu0 0.0
    %108 = vmatpush2.msra.mxu0 0.0
    %109 = vmatprep.subr.mxu0 0.0
    %110 = vmatpush2.msra.mxu0 0.0
    %111 = vmatprep.subr.mxu0 0.0
    %112 = vmatpush2.msra.mxu0 0.0
    %113 = vmatprep.subr.mxu0 0.0
    %114 = vmatpush2.msra.mxu0 0.0
    %115 = vmatprep.subr.mxu0 0.0
    %116 = vmatpush2.msra.mxu0 0.0
    %117 = vmatprep.subr.mxu0 0.0
    %118 = vmatpush2.msra.mxu0 0.0
    %119 = vmatprep.subr.mxu0 0.0
    %120 = vmatpush2.msra.mxu0 0.0
    %121 = vmatprep.subr.mxu0 0.0
    %122 = vmatpush2.msra.mxu0 0.0
    %123 = vmatprep.subr.mxu0 0.0
    %124 = vmatpush2.msra.mxu0 0.0
    %125 = vmatprep.subr.mxu0 0.0
    %126 = vmatpush2.msra.mxu0 0.0
    %127 = vmatprep.subr.mxu0 0.0
    %128 = vmatpush2.msra.mxu0 0.0
    %129 = vmatprep.subr.mxu0 0.0
    %130 = vmatpush2.msra.mxu0 0.0
    %131 = vmatprep.mubr.f32.mxu0 0.0
    %132 = vmatmul.mubr.f32.gmra.mxu0 %v62
    %v133 = vpop.f32.mrf.mxu0
    %v134 = vadd.f32 %v58, %v133
    %v135 = vpop.f32.mrf.mxu0
    %136 = vmatprep.mubr.f32.mxu0 0.0
    %137 = vmatmul.mubr.f32.gmra.mxu0 %v65
    %v138 = vpop.f32.mrf.mxu0
    %v139 = vadd.f32 %v58, %v138
    %v140 = vpop.f32.mrf.mxu0
    %141 = vdwg.mxu0
    %144 = vrot.lane.b32.xlu0 %v134, 120
    %v145 = vpop.permute.xlu0 %144
    %146 = vrot.lane.b32.xlu0 %v139, 120
    %v147 = vpop.permute.xlu0 %146
    %150 = vrot.lane.b32.xlu0 %v134, 112
    %v151 = vpop.permute.xlu0 %150
    %152 = vrot.lane.b32.xlu0 %v139, 112
    %v153 = vpop.permute.xlu0 %152
    %156 = vrot.lane.b32.xlu0 %v134, 104
    %v157 = vpop.permute.xlu0 %156
    %158 = vrot.lane.b32.xlu0 %v139, 104
    %v159 = vpop.permute.xlu0 %158
    %v162 = vcombine.low %v134, %v151
    %v163 = vcombine.high %v134, %v151
    %v165 = vunpack.c.l.s4 1983009808
    %v166 = vunpack.c.0.s8 %v165
    %v167 = vlaneseq
    %v168 = vshrl.u32 %v167, 7
    %v169 = vsub.s32 %v166, %v168
    %v170 = vrot.slane %v162, %v169
    %v172 = vunpack.c.l.s4 1983009808
    %v173 = vunpack.c.0.s8 %v172
    %v174 = vlaneseq
    %v175 = vshrl.u32 %v174, 7
    %v176 = vsub.s32 %v173, %v175
    %v177 = vrot.slane %v163, %v176
    %v178 = vcombine.low %v145, %v157
    %v179 = vcombine.high %v145, %v157
    %v181 = vunpack.c.l.s4 1983009808
    %v182 = vunpack.c.0.s8 %v181
    %v183 = vlaneseq
    %v184 = vshrl.u32 %v183, 7
    %v185 = vsub.s32 %v182, %v184
    %v186 = vrot.slane %v178, %v185
    %v188 = vunpack.c.l.s4 1983009808
    %v189 = vunpack.c.0.s8 %v188
    %v190 = vlaneseq
    %v191 = vshrl.u32 %v190, 7
    %v192 = vsub.s32 %v189, %v191
    %v193 = vrot.slane %v179, %v192
    %v194 = vcombine.low %v170, %v186
    %v195 = vcombine.high %v170, %v186
    %v197 = vunpack.c.l.s4 1934713408
    %v198 = vunpack.c.0.s8 %v197
    %v199 = vlaneseq
    %v200 = vshrl.u32 %v199, 7
    %v201 = vsub.s32 %v198, %v200
    %v202 = vrot.slane %v194, %v201
    %v204 = vunpack.c.l.s4 1934713408
    %v205 = vunpack.c.0.s8 %v204
    %v206 = vlaneseq
    %v207 = vshrl.u32 %v206, 7
    %v208 = vsub.s32 %v205, %v207
    %v209 = vrot.slane %v195, %v208
    %v210 = vcombine.low %v177, %v193
    %v211 = vcombine.high %v177, %v193
    %v213 = vunpack.c.l.s4 1934713408
    %v214 = vunpack.c.0.s8 %v213
    %v215 = vlaneseq
    %v216 = vshrl.u32 %v215, 7
    %v217 = vsub.s32 %v214, %v216
    %v218 = vrot.slane %v210, %v217
    %v220 = vunpack.c.l.s4 1934713408
    %v221 = vunpack.c.0.s8 %v220
    %v222 = vlaneseq
    %v223 = vshrl.u32 %v222, 7
    %v224 = vsub.s32 %v221, %v223
    %v225 = vrot.slane %v211, %v224
    %v226 = vcombine.high %v202, 0.0
    %v227 = vcombine.high %v209, 0.0
    %v228 = vcombine.high %v218, 0.0
    %v229 = vcombine.high %v225, 0.0
    %v230 = vcombine.low %v139, %v153
    %v231 = vcombine.high %v139, %v153
    %v233 = vunpack.c.l.s4 1983009808
    %v234 = vunpack.c.0.s8 %v233
    %v235 = vlaneseq
    %v236 = vshrl.u32 %v235, 7
    %v237 = vsub.s32 %v234, %v236
    %v238 = vrot.slane %v230, %v237
    %v240 = vunpack.c.l.s4 1983009808
    %v241 = vunpack.c.0.s8 %v240
    %v242 = vlaneseq
    %v243 = vshrl.u32 %v242, 7
    %v244 = vsub.s32 %v241, %v243
    %v245 = vrot.slane %v231, %v244
    %v246 = vcombine.low %v147, %v159
    %v247 = vcombine.high %v147, %v159
    %v249 = vunpack.c.l.s4 1983009808
    %v250 = vunpack.c.0.s8 %v249
    %v251 = vlaneseq
    %v252 = vshrl.u32 %v251, 7
    %v253 = vsub.s32 %v250, %v252
    %v254 = vrot.slane %v246, %v253
    %v256 = vunpack.c.l.s4 1983009808
    %v257 = vunpack.c.0.s8 %v256
    %v258 = vlaneseq
    %v259 = vshrl.u32 %v258, 7
    %v260 = vsub.s32 %v257, %v259
    %v261 = vrot.slane %v247, %v260
    %v262 = vcombine.low %v238, %v254
    %v263 = vcombine.high %v238, %v254
    %v265 = vunpack.c.l.s4 1934713408
    %v266 = vunpack.c.0.s8 %v265
    %v267 = vlaneseq
    %v268 = vshrl.u32 %v267, 7
    %v269 = vsub.s32 %v266, %v268
    %v270 = vrot.slane %v262, %v269
    %v272 = vunpack.c.l.s4 1934713408
    %v273 = vunpack.c.0.s8 %v272
    %v274 = vlaneseq
    %v275 = vshrl.u32 %v274, 7
    %v276 = vsub.s32 %v273, %v275
    %v277 = vrot.slane %v263, %v276
    %v278 = vcombine.low %v245, %v261
    %v279 = vcombine.high %v245, %v261
    %v281 = vunpack.c.l.s4 1934713408
    %v282 = vunpack.c.0.s8 %v281
    %v283 = vlaneseq
    %v284 = vshrl.u32 %v283, 7
    %v285 = vsub.s32 %v282, %v284
    %v286 = vrot.slane %v278, %v285
    %v288 = vunpack.c.l.s4 1934713408
    %v289 = vunpack.c.0.s8 %v288
    %v290 = vlaneseq
    %v291 = vshrl.u32 %v290, 7
    %v292 = vsub.s32 %v289, %v291
    %v293 = vrot.slane %v279, %v292
    %v294 = vcombine.high %v270, 0.0
    %v295 = vcombine.high %v277, 0.0
    %v296 = vcombine.high %v286, 0.0
    %v297 = vcombine.high %v293, 0.0
    %v298 = vcombine.low %v202, %v209
    %v300 = vunpack.c.l.s4 1983009808
    %v301 = vunpack.c.0.s8 %v300
    %v302 = vlaneseq
    %v303 = vshrl.u32 %v302, 7
    %v304 = vsub.s32 %v301, %v303
    %v305 = vrot.slane %v298, %v304
    %v306 = vcombine.low %v226, %v227
    %v308 = vunpack.c.l.s4 1983009808
    %v309 = vunpack.c.0.s8 %v308
    %v310 = vlaneseq
    %v311 = vshrl.u32 %v310, 7
    %v312 = vsub.s32 %v309, %v311
    %v313 = vrot.slane %v306, %v312
    %v314 = vcombine.low %v218, %v225
    %v316 = vunpack.c.l.s4 1983009808
    %v317 = vunpack.c.0.s8 %v316
    %v318 = vlaneseq
    %v319 = vshrl.u32 %v318, 7
    %v320 = vsub.s32 %v317, %v319
    %v321 = vrot.slane %v314, %v320
    %v322 = vcombine.low %v228, %v229
    %v324 = vunpack.c.l.s4 1983009808
    %v325 = vunpack.c.0.s8 %v324
    %v326 = vlaneseq
    %v327 = vshrl.u32 %v326, 7
    %v328 = vsub.s32 %v325, %v327
    %v329 = vrot.slane %v322, %v328
    %v330 = vcombine.low %v305, %v313
    %v331 = vcombine.high %v305, %v313
    %v333 = vunpack.c.l.s4 1934713408
    %v334 = vunpack.c.0.s8 %v333
    %v335 = vlaneseq
    %v336 = vshrl.u32 %v335, 7
    %v337 = vsub.s32 %v334, %v336
    %v338 = vrot.slane %v330, %v337
    %v340 = vunpack.c.l.s4 1934713408
    %v341 = vunpack.c.0.s8 %v340
    %v342 = vlaneseq
    %v343 = vshrl.u32 %v342, 7
    %v344 = vsub.s32 %v341, %v343
    %v345 = vrot.slane %v331, %v344
    %v346 = vcombine.low %v321, %v329
    %v347 = vcombine.high %v321, %v329
    %v349 = vunpack.c.l.s4 1934713408
    %v350 = vunpack.c.0.s8 %v349
    %v351 = vlaneseq
    %v352 = vshrl.u32 %v351, 7
    %v353 = vsub.s32 %v350, %v352
    %v354 = vrot.slane %v346, %v353
    %v356 = vunpack.c.l.s4 1934713408
    %v357 = vunpack.c.0.s8 %v356
    %v358 = vlaneseq
    %v359 = vshrl.u32 %v358, 7
    %v360 = vsub.s32 %v357, %v359
    %v361 = vrot.slane %v347, %v360
    %v362 = vcombine.low %v338, %v354
    %v363 = vcombine.high %v338, %v354
    %v364 = vcombine.low %v345, %v361
    %v365 = vcombine.high %v345, %v361
    %v366 = vcombine.low %v270, %v277
    %v368 = vunpack.c.l.s4 1983009808
    %v369 = vunpack.c.0.s8 %v368
    %v370 = vlaneseq
    %v371 = vshrl.u32 %v370, 7
    %v372 = vsub.s32 %v369, %v371
    %v373 = vrot.slane %v366, %v372
    %v374 = vcombine.low %v294, %v295
    %v376 = vunpack.c.l.s4 1983009808
    %v377 = vunpack.c.0.s8 %v376
    %v378 = vlaneseq
    %v379 = vshrl.u32 %v378, 7
    %v380 = vsub.s32 %v377, %v379
    %v381 = vrot.slane %v374, %v380
    %v382 = vcombine.low %v286, %v293
    %v384 = vunpack.c.l.s4 1983009808
    %v385 = vunpack.c.0.s8 %v384
    %v386 = vlaneseq
    %v387 = vshrl.u32 %v386, 7
    %v388 = vsub.s32 %v385, %v387
    %v389 = vrot.slane %v382, %v388
    %v390 = vcombine.low %v296, %v297
    %v392 = vunpack.c.l.s4 1983009808
    %v393 = vunpack.c.0.s8 %v392
    %v394 = vlaneseq
    %v395 = vshrl.u32 %v394, 7
    %v396 = vsub.s32 %v393, %v395
    %v397 = vrot.slane %v390, %v396
    %v398 = vcombine.low %v373, %v381
    %v399 = vcombine.high %v373, %v381
    %v401 = vunpack.c.l.s4 1934713408
    %v402 = vunpack.c.0.s8 %v401
    %v403 = vlaneseq
    %v404 = vshrl.u32 %v403, 7
    %v405 = vsub.s32 %v402, %v404
    %v406 = vrot.slane %v398, %v405
    %v408 = vunpack.c.l.s4 1934713408
    %v409 = vunpack.c.0.s8 %v408
    %v410 = vlaneseq
    %v411 = vshrl.u32 %v410, 7
    %v412 = vsub.s32 %v409, %v411
    %v413 = vrot.slane %v399, %v412
    %v414 = vcombine.low %v389, %v397
    %v415 = vcombine.high %v389, %v397
    %v417 = vunpack.c.l.s4 1934713408
    %v418 = vunpack.c.0.s8 %v417
    %v419 = vlaneseq
    %v420 = vshrl.u32 %v419, 7
    %v421 = vsub.s32 %v418, %v420
    %v422 = vrot.slane %v414, %v421
    %v424 = vunpack.c.l.s4 1934713408
    %v425 = vunpack.c.0.s8 %v424
    %v426 = vlaneseq
    %v427 = vshrl.u32 %v426, 7
    %v428 = vsub.s32 %v425, %v427
    %v429 = vrot.slane %v415, %v428
    %v430 = vcombine.low %v406, %v422
    %v431 = vcombine.high %v406, %v422
    %v432 = vcombine.low %v413, %v429
    %v433 = vcombine.high %v413, %v429
    %434 = vrot.lane.b32.xlu0 %v134, 96
    %v435 = vpop.permute.xlu0 %434
    %436 = vrot.lane.b32.xlu0 %v139, 96
    %v437 = vpop.permute.xlu0 %436
    %438 = vrot.lane.b32.xlu0 %v145, 96
    %v439 = vpop.permute.xlu0 %438
    %440 = vrot.lane.b32.xlu0 %v147, 96
    %v441 = vpop.permute.xlu0 %440
    %442 = vrot.lane.b32.xlu0 %v151, 96
    %v443 = vpop.permute.xlu0 %442
    %444 = vrot.lane.b32.xlu0 %v153, 96
    %v445 = vpop.permute.xlu0 %444
    %446 = vrot.lane.b32.xlu0 %v157, 96
    %v447 = vpop.permute.xlu0 %446
    %448 = vrot.lane.b32.xlu0 %v159, 96
    %v449 = vpop.permute.xlu0 %448
    %v458 = vcombine.low %v435, %v443
    %v459 = vcombine.high %v435, %v443
    %v461 = vunpack.c.l.s4 1983009808
    %v462 = vunpack.c.0.s8 %v461
    %v463 = vlaneseq
    %v464 = vshrl.u32 %v463, 7
    %v465 = vsub.s32 %v462, %v464
    %v466 = vrot.slane %v458, %v465
    %v468 = vunpack.c.l.s4 1983009808
    %v469 = vunpack.c.0.s8 %v468
    %v470 = vlaneseq
    %v471 = vshrl.u32 %v470, 7
    %v472 = vsub.s32 %v469, %v471
    %v473 = vrot.slane %v459, %v472
    %v474 = vcombine.low %v439, %v447
    %v475 = vcombine.high %v439, %v447
    %v477 = vunpack.c.l.s4 1983009808
    %v478 = vunpack.c.0.s8 %v477
    %v479 = vlaneseq
    %v480 = vshrl.u32 %v479, 7
    %v481 = vsub.s32 %v478, %v480
    %v482 = vrot.slane %v474, %v481
    %v484 = vunpack.c.l.s4 1983009808
    %v485 = vunpack.c.0.s8 %v484
    %v486 = vlaneseq
    %v487 = vshrl.u32 %v486, 7
    %v488 = vsub.s32 %v485, %v487
    %v489 = vrot.slane %v475, %v488
    %v490 = vcombine.low %v466, %v482
    %v491 = vcombine.high %v466, %v482
    %v493 = vunpack.c.l.s4 1934713408
    %v494 = vunpack.c.0.s8 %v493
    %v495 = vlaneseq
    %v496 = vshrl.u32 %v495, 7
    %v497 = vsub.s32 %v494, %v496
    %v498 = vrot.slane %v490, %v497
    %v500 = vunpack.c.l.s4 1934713408
    %v501 = vunpack.c.0.s8 %v500
    %v502 = vlaneseq
    %v503 = vshrl.u32 %v502, 7
    %v504 = vsub.s32 %v501, %v503
    %v505 = vrot.slane %v491, %v504
    %v506 = vcombine.low %v473, %v489
    %v507 = vcombine.high %v473, %v489
    %v509 = vunpack.c.l.s4 1934713408
    %v510 = vunpack.c.0.s8 %v509
    %v511 = vlaneseq
    %v512 = vshrl.u32 %v511, 7
    %v513 = vsub.s32 %v510, %v512
    %v514 = vrot.slane %v506, %v513
    %v516 = vunpack.c.l.s4 1934713408
    %v517 = vunpack.c.0.s8 %v516
    %v518 = vlaneseq
    %v519 = vshrl.u32 %v518, 7
    %v520 = vsub.s32 %v517, %v519
    %v521 = vrot.slane %v507, %v520
    %v522 = vcombine.high %v498, 0.0
    %v523 = vcombine.high %v505, 0.0
    %v524 = vcombine.high %v514, 0.0
    %v525 = vcombine.high %v521, 0.0
    %v526 = vcombine.low %v437, %v445
    %v527 = vcombine.high %v437, %v445
    %v529 = vunpack.c.l.s4 1983009808
    %v530 = vunpack.c.0.s8 %v529
    %v531 = vlaneseq
    %v532 = vshrl.u32 %v531, 7
    %v533 = vsub.s32 %v530, %v532
    %v534 = vrot.slane %v526, %v533
    %v536 = vunpack.c.l.s4 1983009808
    %v537 = vunpack.c.0.s8 %v536
    %v538 = vlaneseq
    %v539 = vshrl.u32 %v538, 7
    %v540 = vsub.s32 %v537, %v539
    %v541 = vrot.slane %v527, %v540
    %v542 = vcombine.low %v441, %v449
    %v543 = vcombine.high %v441, %v449
    %v545 = vunpack.c.l.s4 1983009808
    %v546 = vunpack.c.0.s8 %v545
    %v547 = vlaneseq
    %v548 = vshrl.u32 %v547, 7
    %v549 = vsub.s32 %v546, %v548
    %v550 = vrot.slane %v542, %v549
    %v552 = vunpack.c.l.s4 1983009808
    %v553 = vunpack.c.0.s8 %v552
    %v554 = vlaneseq
    %v555 = vshrl.u32 %v554, 7
    %v556 = vsub.s32 %v553, %v555
    %v557 = vrot.slane %v543, %v556
    %v558 = vcombine.low %v534, %v550
    %v559 = vcombine.high %v534, %v550
    %v561 = vunpack.c.l.s4 1934713408
    %v562 = vunpack.c.0.s8 %v561
    %v563 = vlaneseq
    %v564 = vshrl.u32 %v563, 7
    %v565 = vsub.s32 %v562, %v564
    %v566 = vrot.slane %v558, %v565
    %v568 = vunpack.c.l.s4 1934713408
    %v569 = vunpack.c.0.s8 %v568
    %v570 = vlaneseq
    %v571 = vshrl.u32 %v570, 7
    %v572 = vsub.s32 %v569, %v571
    %v573 = vrot.slane %v559, %v572
    %v574 = vcombine.low %v541, %v557
    %v575 = vcombine.high %v541, %v557
    %v577 = vunpack.c.l.s4 1934713408
    %v578 = vunpack.c.0.s8 %v577
    %v579 = vlaneseq
    %v580 = vshrl.u32 %v579, 7
    %v581 = vsub.s32 %v578, %v580
    %v582 = vrot.slane %v574, %v581
    %v584 = vunpack.c.l.s4 1934713408
    %v585 = vunpack.c.0.s8 %v584
    %v586 = vlaneseq
    %v587 = vshrl.u32 %v586, 7
    %v588 = vsub.s32 %v585, %v587
    %v589 = vrot.slane %v575, %v588
    %v590 = vcombine.high %v566, 0.0
    %v591 = vcombine.high %v573, 0.0
    %v592 = vcombine.high %v582, 0.0
    %v593 = vcombine.high %v589, 0.0
    %v594 = vcombine.low %v498, %v505
    %v596 = vunpack.c.l.s4 1983009808
    %v597 = vunpack.c.0.s8 %v596
    %v598 = vlaneseq
    %v599 = vshrl.u32 %v598, 7
    %v600 = vsub.s32 %v597, %v599
    %v601 = vrot.slane %v594, %v600
    %v602 = vcombine.low %v522, %v523
    %v604 = vunpack.c.l.s4 1983009808
    %v605 = vunpack.c.0.s8 %v604
    %v606 = vlaneseq
    %v607 = vshrl.u32 %v606, 7
    %v608 = vsub.s32 %v605, %v607
    %v609 = vrot.slane %v602, %v608
    %v610 = vcombine.low %v514, %v521
    %v612 = vunpack.c.l.s4 1983009808
    %v613 = vunpack.c.0.s8 %v612
    %v614 = vlaneseq
    %v615 = vshrl.u32 %v614, 7
    %v616 = vsub.s32 %v613, %v615
    %v617 = vrot.slane %v610, %v616
    %v618 = vcombine.low %v524, %v525
    %v620 = vunpack.c.l.s4 1983009808
    %v621 = vunpack.c.0.s8 %v620
    %v622 = vlaneseq
    %v623 = vshrl.u32 %v622, 7
    %v624 = vsub.s32 %v621, %v623
    %v625 = vrot.slane %v618, %v624
    %v626 = vcombine.low %v601, %v609
    %v627 = vcombine.high %v601, %v609
    %v629 = vunpack.c.l.s4 1934713408
    %v630 = vunpack.c.0.s8 %v629
    %v631 = vlaneseq
    %v632 = vshrl.u32 %v631, 7
    %v633 = vsub.s32 %v630, %v632
    %v634 = vrot.slane %v626, %v633
    %v636 = vunpack.c.l.s4 1934713408
    %v637 = vunpack.c.0.s8 %v636
    %v638 = vlaneseq
    %v639 = vshrl.u32 %v638, 7
    %v640 = vsub.s32 %v637, %v639
    %v641 = vrot.slane %v627, %v640
    %v642 = vcombine.low %v617, %v625
    %v643 = vcombine.high %v617, %v625
    %v645 = vunpack.c.l.s4 1934713408
    %v646 = vunpack.c.0.s8 %v645
    %v647 = vlaneseq
    %v648 = vshrl.u32 %v647, 7
    %v649 = vsub.s32 %v646, %v648
    %v650 = vrot.slane %v642, %v649
    %v652 = vunpack.c.l.s4 1934713408
    %v653 = vunpack.c.0.s8 %v652
    %v654 = vlaneseq
    %v655 = vshrl.u32 %v654, 7
    %v656 = vsub.s32 %v653, %v655
    %v657 = vrot.slane %v643, %v656
    %v658 = vcombine.low %v634, %v650
    %v659 = vcombine.high %v634, %v650
    %v660 = vcombine.low %v641, %v657
    %v661 = vcombine.high %v641, %v657
    %v662 = vcombine.low %v566, %v573
    %v664 = vunpack.c.l.s4 1983009808
    %v665 = vunpack.c.0.s8 %v664
    %v666 = vlaneseq
    %v667 = vshrl.u32 %v666, 7
    %v668 = vsub.s32 %v665, %v667
    %v669 = vrot.slane %v662, %v668
    %v670 = vcombine.low %v590, %v591
    %v672 = vunpack.c.l.s4 1983009808
    %v673 = vunpack.c.0.s8 %v672
    %v674 = vlaneseq
    %v675 = vshrl.u32 %v674, 7
    %v676 = vsub.s32 %v673, %v675
    %v677 = vrot.slane %v670, %v676
    %v678 = vcombine.low %v582, %v589
    %v680 = vunpack.c.l.s4 1983009808
    %v681 = vunpack.c.0.s8 %v680
    %v682 = vlaneseq
    %v683 = vshrl.u32 %v682, 7
    %v684 = vsub.s32 %v681, %v683
    %v685 = vrot.slane %v678, %v684
    %v686 = vcombine.low %v592, %v593
    %v688 = vunpack.c.l.s4 1983009808
    %v689 = vunpack.c.0.s8 %v688
    %v690 = vlaneseq
    %v691 = vshrl.u32 %v690, 7
    %v692 = vsub.s32 %v689, %v691
    %v693 = vrot.slane %v686, %v692
    %v694 = vcombine.low %v669, %v677
    %v695 = vcombine.high %v669, %v677
    %v697 = vunpack.c.l.s4 1934713408
    %v698 = vunpack.c.0.s8 %v697
    %v699 = vlaneseq
    %v700 = vshrl.u32 %v699, 7
    %v701 = vsub.s32 %v698, %v700
    %v702 = vrot.slane %v694, %v701
    %v704 = vunpack.c.l.s4 1934713408
    %v705 = vunpack.c.0.s8 %v704
    %v706 = vlaneseq
    %v707 = vshrl.u32 %v706, 7
    %v708 = vsub.s32 %v705, %v707
    %v709 = vrot.slane %v695, %v708
    %v710 = vcombine.low %v685, %v693
    %v711 = vcombine.high %v685, %v693
    %v713 = vunpack.c.l.s4 1934713408
    %v714 = vunpack.c.0.s8 %v713
    %v715 = vlaneseq
    %v716 = vshrl.u32 %v715, 7
    %v717 = vsub.s32 %v714, %v716
    %v718 = vrot.slane %v710, %v717
    %v720 = vunpack.c.l.s4 1934713408
    %v721 = vunpack.c.0.s8 %v720
    %v722 = vlaneseq
    %v723 = vshrl.u32 %v722, 7
    %v724 = vsub.s32 %v721, %v723
    %v725 = vrot.slane %v711, %v724
    %v726 = vcombine.low %v702, %v718
    %v727 = vcombine.high %v702, %v718
    %v728 = vcombine.low %v709, %v725
    %v729 = vcombine.high %v709, %v725
    %730 = vrot.lane.b32.xlu0 %v134, 64
    %v731 = vpop.permute.xlu0 %730
    %732 = vrot.lane.b32.xlu0 %v139, 64
    %v733 = vpop.permute.xlu0 %732
    %734 = vrot.lane.b32.xlu0 %v145, 64
    %v735 = vpop.permute.xlu0 %734
    %736 = vrot.lane.b32.xlu0 %v147, 64
    %v737 = vpop.permute.xlu0 %736
    %738 = vrot.lane.b32.xlu0 %v151, 64
    %v739 = vpop.permute.xlu0 %738
    %740 = vrot.lane.b32.xlu0 %v153, 64
    %v741 = vpop.permute.xlu0 %740
    %742 = vrot.lane.b32.xlu0 %v157, 64
    %v743 = vpop.permute.xlu0 %742
    %744 = vrot.lane.b32.xlu0 %v159, 64
    %v745 = vpop.permute.xlu0 %744
    %v754 = vcombine.low %v731, %v739
    %v755 = vcombine.high %v731, %v739
    %v757 = vunpack.c.l.s4 1983009808
    %v758 = vunpack.c.0.s8 %v757
    %v759 = vlaneseq
    %v760 = vshrl.u32 %v759, 7
    %v761 = vsub.s32 %v758, %v760
    %v762 = vrot.slane %v754, %v761
    %v764 = vunpack.c.l.s4 1983009808
    %v765 = vunpack.c.0.s8 %v764
    %v766 = vlaneseq
    %v767 = vshrl.u32 %v766, 7
    %v768 = vsub.s32 %v765, %v767
    %v769 = vrot.slane %v755, %v768
    %v770 = vcombine.low %v735, %v743
    %v771 = vcombine.high %v735, %v743
    %v773 = vunpack.c.l.s4 1983009808
    %v774 = vunpack.c.0.s8 %v773
    %v775 = vlaneseq
    %v776 = vshrl.u32 %v775, 7
    %v777 = vsub.s32 %v774, %v776
    %v778 = vrot.slane %v770, %v777
    %v780 = vunpack.c.l.s4 1983009808
    %v781 = vunpack.c.0.s8 %v780
    %v782 = vlaneseq
    %v783 = vshrl.u32 %v782, 7
    %v784 = vsub.s32 %v781, %v783
    %v785 = vrot.slane %v771, %v784
    %v786 = vcombine.low %v762, %v778
    %v787 = vcombine.high %v762, %v778
    %v789 = vunpack.c.l.s4 1934713408
    %v790 = vunpack.c.0.s8 %v789
    %v791 = vlaneseq
    %v792 = vshrl.u32 %v791, 7
    %v793 = vsub.s32 %v790, %v792
    %v794 = vrot.slane %v786, %v793
    %v796 = vunpack.c.l.s4 1934713408
    %v797 = vunpack.c.0.s8 %v796
    %v798 = vlaneseq
    %v799 = vshrl.u32 %v798, 7
    %v800 = vsub.s32 %v797, %v799
    %v801 = vrot.slane %v787, %v800
    %v802 = vcombine.low %v769, %v785
    %v803 = vcombine.high %v769, %v785
    %v805 = vunpack.c.l.s4 1934713408
    %v806 = vunpack.c.0.s8 %v805
    %v807 = vlaneseq
    %v808 = vshrl.u32 %v807, 7
    %v809 = vsub.s32 %v806, %v808
    %v810 = vrot.slane %v802, %v809
    %v812 = vunpack.c.l.s4 1934713408
    %v813 = vunpack.c.0.s8 %v812
    %v814 = vlaneseq
    %v815 = vshrl.u32 %v814, 7
    %v816 = vsub.s32 %v813, %v815
    %v817 = vrot.slane %v803, %v816
    %v818 = vcombine.high %v794, 0.0
    %v819 = vcombine.high %v801, 0.0
    %v820 = vcombine.high %v810, 0.0
    %v821 = vcombine.high %v817, 0.0
    %v822 = vcombine.low %v733, %v741
    %v823 = vcombine.high %v733, %v741
    %v825 = vunpack.c.l.s4 1983009808
    %v826 = vunpack.c.0.s8 %v825
    %v827 = vlaneseq
    %v828 = vshrl.u32 %v827, 7
    %v829 = vsub.s32 %v826, %v828
    %v830 = vrot.slane %v822, %v829
    %v832 = vunpack.c.l.s4 1983009808
    %v833 = vunpack.c.0.s8 %v832
    %v834 = vlaneseq
    %v835 = vshrl.u32 %v834, 7
    %v836 = vsub.s32 %v833, %v835
    %v837 = vrot.slane %v823, %v836
    %v838 = vcombine.low %v737, %v745
    %v839 = vcombine.high %v737, %v745
    %v841 = vunpack.c.l.s4 1983009808
    %v842 = vunpack.c.0.s8 %v841
    %v843 = vlaneseq
    %v844 = vshrl.u32 %v843, 7
    %v845 = vsub.s32 %v842, %v844
    %v846 = vrot.slane %v838, %v845
    %v848 = vunpack.c.l.s4 1983009808
    %v849 = vunpack.c.0.s8 %v848
    %v850 = vlaneseq
    %v851 = vshrl.u32 %v850, 7
    %v852 = vsub.s32 %v849, %v851
    %v853 = vrot.slane %v839, %v852
    %v854 = vcombine.low %v830, %v846
    %v855 = vcombine.high %v830, %v846
    %v857 = vunpack.c.l.s4 1934713408
    %v858 = vunpack.c.0.s8 %v857
    %v859 = vlaneseq
    %v860 = vshrl.u32 %v859, 7
    %v861 = vsub.s32 %v858, %v860
    %v862 = vrot.slane %v854, %v861
    %v864 = vunpack.c.l.s4 1934713408
    %v865 = vunpack.c.0.s8 %v864
    %v866 = vlaneseq
    %v867 = vshrl.u32 %v866, 7
    %v868 = vsub.s32 %v865, %v867
    %v869 = vrot.slane %v855, %v868
    %v870 = vcombine.low %v837, %v853
    %v871 = vcombine.high %v837, %v853
    %v873 = vunpack.c.l.s4 1934713408
    %v874 = vunpack.c.0.s8 %v873
    %v875 = vlaneseq
    %v876 = vshrl.u32 %v875, 7
    %v877 = vsub.s32 %v874, %v876
    %v878 = vrot.slane %v870, %v877
    %v880 = vunpack.c.l.s4 1934713408
    %v881 = vunpack.c.0.s8 %v880
    %v882 = vlaneseq
    %v883 = vshrl.u32 %v882, 7
    %v884 = vsub.s32 %v881, %v883
    %v885 = vrot.slane %v871, %v884
    %v886 = vcombine.high %v862, 0.0
    %v887 = vcombine.high %v869, 0.0
    %v888 = vcombine.high %v878, 0.0
    %v889 = vcombine.high %v885, 0.0
    %v890 = vcombine.low %v794, %v801
    %v892 = vunpack.c.l.s4 1983009808
    %v893 = vunpack.c.0.s8 %v892
    %v894 = vlaneseq
    %v895 = vshrl.u32 %v894, 7
    %v896 = vsub.s32 %v893, %v895
    %v897 = vrot.slane %v890, %v896
    %v898 = vcombine.low %v818, %v819
    %v900 = vunpack.c.l.s4 1983009808
    %v901 = vunpack.c.0.s8 %v900
    %v902 = vlaneseq
    %v903 = vshrl.u32 %v902, 7
    %v904 = vsub.s32 %v901, %v903
    %v905 = vrot.slane %v898, %v904
    %v906 = vcombine.low %v810, %v817
    %v908 = vunpack.c.l.s4 1983009808
    %v909 = vunpack.c.0.s8 %v908
    %v910 = vlaneseq
    %v911 = vshrl.u32 %v910, 7
    %v912 = vsub.s32 %v909, %v911
    %v913 = vrot.slane %v906, %v912
    %v914 = vcombine.low %v820, %v821
    %v916 = vunpack.c.l.s4 1983009808
    %v917 = vunpack.c.0.s8 %v916
    %v918 = vlaneseq
    %v919 = vshrl.u32 %v918, 7
    %v920 = vsub.s32 %v917, %v919
    %v921 = vrot.slane %v914, %v920
    %v922 = vcombine.low %v897, %v905
    %v923 = vcombine.high %v897, %v905
    %v925 = vunpack.c.l.s4 1934713408
    %v926 = vunpack.c.0.s8 %v925
    %v927 = vlaneseq
    %v928 = vshrl.u32 %v927, 7
    %v929 = vsub.s32 %v926, %v928
    %v930 = vrot.slane %v922, %v929
    %v932 = vunpack.c.l.s4 1934713408
    %v933 = vunpack.c.0.s8 %v932
    %v934 = vlaneseq
    %v935 = vshrl.u32 %v934, 7
    %v936 = vsub.s32 %v933, %v935
    %v937 = vrot.slane %v923, %v936
    %v938 = vcombine.low %v913, %v921
    %v939 = vcombine.high %v913, %v921
    %v941 = vunpack.c.l.s4 1934713408
    %v942 = vunpack.c.0.s8 %v941
    %v943 = vlaneseq
    %v944 = vshrl.u32 %v943, 7
    %v945 = vsub.s32 %v942, %v944
    %v946 = vrot.slane %v938, %v945
    %v948 = vunpack.c.l.s4 1934713408
    %v949 = vunpack.c.0.s8 %v948
    %v950 = vlaneseq
    %v951 = vshrl.u32 %v950, 7
    %v952 = vsub.s32 %v949, %v951
    %v953 = vrot.slane %v939, %v952
    %v954 = vcombine.low %v930, %v946
    %v955 = vcombine.high %v930, %v946
    %v956 = vcombine.low %v937, %v953
    %v957 = vcombine.high %v937, %v953
    %v958 = vcombine.low %v862, %v869
    %v960 = vunpack.c.l.s4 1983009808
    %v961 = vunpack.c.0.s8 %v960
    %v962 = vlaneseq
    %v963 = vshrl.u32 %v962, 7
    %v964 = vsub.s32 %v961, %v963
    %v965 = vrot.slane %v958, %v964
    %v966 = vcombine.low %v886, %v887
    %v968 = vunpack.c.l.s4 1983009808
    %v969 = vunpack.c.0.s8 %v968
    %v970 = vlaneseq
    %v971 = vshrl.u32 %v970, 7
    %v972 = vsub.s32 %v969, %v971
    %v973 = vrot.slane %v966, %v972
    %v974 = vcombine.low %v878, %v885
    %v976 = vunpack.c.l.s4 1983009808
    %v977 = vunpack.c.0.s8 %v976
    %v978 = vlaneseq
    %v979 = vshrl.u32 %v978, 7
    %v980 = vsub.s32 %v977, %v979
    %v981 = vrot.slane %v974, %v980
    %v982 = vcombine.low %v888, %v889
    %v984 = vunpack.c.l.s4 1983009808
    %v985 = vunpack.c.0.s8 %v984
    %v986 = vlaneseq
    %v987 = vshrl.u32 %v986, 7
    %v988 = vsub.s32 %v985, %v987
    %v989 = vrot.slane %v982, %v988
    %v990 = vcombine.low %v965, %v973
    %v991 = vcombine.high %v965, %v973
    %v993 = vunpack.c.l.s4 1934713408
    %v994 = vunpack.c.0.s8 %v993
    %v995 = vlaneseq
    %v996 = vshrl.u32 %v995, 7
    %v997 = vsub.s32 %v994, %v996
    %v998 = vrot.slane %v990, %v997
    %v1000 = vunpack.c.l.s4 1934713408
    %v1001 = vunpack.c.0.s8 %v1000
    %v1002 = vlaneseq
    %v1003 = vshrl.u32 %v1002, 7
    %v1004 = vsub.s32 %v1001, %v1003
    %v1005 = vrot.slane %v991, %v1004
    %v1006 = vcombine.low %v981, %v989
    %v1007 = vcombine.high %v981, %v989
    %v1009 = vunpack.c.l.s4 1934713408
    %v1010 = vunpack.c.0.s8 %v1009
    %v1011 = vlaneseq
    %v1012 = vshrl.u32 %v1011, 7
    %v1013 = vsub.s32 %v1010, %v1012
    %v1014 = vrot.slane %v1006, %v1013
    %v1016 = vunpack.c.l.s4 1934713408
    %v1017 = vunpack.c.0.s8 %v1016
    %v1018 = vlaneseq
    %v1019 = vshrl.u32 %v1018, 7
    %v1020 = vsub.s32 %v1017, %v1019
    %v1021 = vrot.slane %v1007, %v1020
    %v1022 = vcombine.low %v998, %v1014
    %v1023 = vcombine.high %v998, %v1014
    %v1024 = vcombine.low %v1005, %v1021
    %v1025 = vcombine.high %v1005, %v1021
    %vm1026 = vcmask 64512
    %v1028 = vsel %vm1026, %v362, 0
    %v1031 = vsel %vm1026, %v658, 0
    %1033 = vmatprep.subr.mxu0 0.0
    %1034 = vmatpush1.xpose.msra.mxu0 0.0
    %1035 = vmatprep.subr.mxu0 0.0
    %1036 = vmatpush1.xpose.msra.mxu0 0.0
    %1037 = vmatprep.subr.mxu0 0.0
    %1038 = vmatpush1.xpose.msra.mxu0 0.0
    %1039 = vmatprep.subr.mxu0 0.0
    %1040 = vmatpush1.xpose.msra.mxu0 0.0
    %1041 = vmatprep.subr.mxu0 0.0
    %1042 = vmatpush1.xpose.msra.mxu0 0.0
    %1043 = vmatprep.subr.mxu0 0.0
    %1044 = vmatpush1.xpose.msra.mxu0 0.0
    %1045 = vmatprep.subr.mxu0 0.0
    %1046 = vmatpush1.xpose.msra.mxu0 0.0
    %1047 = vmatprep.subr.mxu0 0.0
    %1048 = vmatpush1.xpose.msra.mxu0 0.0
    %1049 = vmatprep.subr.mxu0 0.0
    %1050 = vmatpush1.xpose.msra.mxu0 0.0
    %1051 = vmatprep.subr.mxu0 0.0
    %1052 = vmatpush1.xpose.msra.mxu0 0.0
    %1053 = vmatprep.subr.mxu0 0.0
    %1054 = vmatpush1.xpose.msra.mxu0 0.0
    %1055 = vmatprep.subr.mxu0 0.0
    %1056 = vmatpush1.xpose.msra.mxu0 0.0
    %1057 = vmatprep.subr.mxu0 0.0
    %1058 = vmatpush1.xpose.msra.mxu0 0.0
    %1059 = vmatprep.subr.mxu0 0.0
    %1060 = vmatpush1.xpose.msra.mxu0 0.0
    %1061 = vmatprep.subr.mxu0 0.0
    %1062 = vmatpush1.xpose.msra.mxu0 0.0
    %1063 = vmatprep.subr.mxu0 0.0
    %1064 = vmatpush1.xpose.msra.mxu0 %v1031
    %1065 = vmatprep.subr.mxu0 0.0
    %1066 = vmatpush2.xpose.msra.mxu0 0.0
    %1067 = vmatprep.subr.mxu0 0.0
    %1068 = vmatpush2.xpose.msra.mxu0 0.0
    %1069 = vmatprep.subr.mxu0 0.0
    %1070 = vmatpush2.xpose.msra.mxu0 0.0
    %1071 = vmatprep.subr.mxu0 0.0
    %1072 = vmatpush2.xpose.msra.mxu0 0.0
    %1073 = vmatprep.subr.mxu0 0.0
    %1074 = vmatpush2.xpose.msra.mxu0 0.0
    %1075 = vmatprep.subr.mxu0 0.0
    %1076 = vmatpush2.xpose.msra.mxu0 0.0
    %1077 = vmatprep.subr.mxu0 0.0
    %1078 = vmatpush2.xpose.msra.mxu0 0.0
    %1079 = vmatprep.subr.mxu0 0.0
    %1080 = vmatpush2.xpose.msra.mxu0 0.0
    %1081 = vmatprep.subr.mxu0 0.0
    %1082 = vmatpush2.xpose.msra.mxu0 0.0
    %1083 = vmatprep.subr.mxu0 0.0
    %1084 = vmatpush2.xpose.msra.mxu0 0.0
    %1085 = vmatprep.subr.mxu0 0.0
    %1086 = vmatpush2.xpose.msra.mxu0 0.0
    %1087 = vmatprep.subr.mxu0 0.0
    %1088 = vmatpush2.xpose.msra.mxu0 0.0
    %1089 = vmatprep.subr.mxu0 0.0
    %1090 = vmatpush2.xpose.msra.mxu0 0.0
    %1091 = vmatprep.subr.mxu0 0.0
    %1092 = vmatpush2.xpose.msra.mxu0 0.0
    %1093 = vmatprep.subr.mxu0 0.0
    %1094 = vmatpush2.xpose.msra.mxu0 0.0
    %1095 = vmatprep.subr.mxu0 0.0
    %1096 = vmatpush2.xpose.msra.mxu0 0.0
    %1097 = vmatprep.mubr.f32.mxu0 0.0
    %1098 = vmatmul.mubr.f32.gmra.mxu0 %v1028
    %v1099 = vpop.f32.mrf.mxu0
    %v1100 = vadd.f32 0.0, %v1099
    %v1101 = vpop.f32.mrf.mxu0
    %1102 = vdwg.mxu0
    %v1104 = vsel %vm1026, %v430, 0
    %v1107 = vsel %vm1026, %v726, 0
    %1109 = vmatprep.subr.mxu0 0.0
    %1110 = vmatpush1.xpose.msra.mxu0 0.0
    %1111 = vmatprep.subr.mxu0 0.0
    %1112 = vmatpush1.xpose.msra.mxu0 0.0
    %1113 = vmatprep.subr.mxu0 0.0
    %1114 = vmatpush1.xpose.msra.mxu0 0.0
    %1115 = vmatprep.subr.mxu0 0.0
    %1116 = vmatpush1.xpose.msra.mxu0 0.0
    %1117 = vmatprep.subr.mxu0 0.0
    %1118 = vmatpush1.xpose.msra.mxu0 0.0
    %1119 = vmatprep.subr.mxu0 0.0
    %1120 = vmatpush1.xpose.msra.mxu0 0.0
    %1121 = vmatprep.subr.mxu0 0.0
    %1122 = vmatpush1.xpose.msra.mxu0 0.0
    %1123 = vmatprep.subr.mxu0 0.0
    %1124 = vmatpush1.xpose.msra.mxu0 0.0
    %1125 = vmatprep.subr.mxu0 0.0
    %1126 = vmatpush1.xpose.msra.mxu0 0.0
    %1127 = vmatprep.subr.mxu0 0.0
    %1128 = vmatpush1.xpose.msra.mxu0 0.0
    %1129 = vmatprep.subr.mxu0 0.0
    %1130 = vmatpush1.xpose.msra.mxu0 0.0
    %1131 = vmatprep.subr.mxu0 0.0
    %1132 = vmatpush1.xpose.msra.mxu0 0.0
    %1133 = vmatprep.subr.mxu0 0.0
    %1134 = vmatpush1.xpose.msra.mxu0 0.0
    %1135 = vmatprep.subr.mxu0 0.0
    %1136 = vmatpush1.xpose.msra.mxu0 0.0
    %1137 = vmatprep.subr.mxu0 0.0
    %1138 = vmatpush1.xpose.msra.mxu0 0.0
    %1139 = vmatprep.subr.mxu0 0.0
    %1140 = vmatpush1.xpose.msra.mxu0 %v1107
    %1141 = vmatprep.subr.mxu0 0.0
    %1142 = vmatpush2.xpose.msra.mxu0 0.0
    %1143 = vmatprep.subr.mxu0 0.0
    %1144 = vmatpush2.xpose.msra.mxu0 0.0
    %1145 = vmatprep.subr.mxu0 0.0
    %1146 = vmatpush2.xpose.msra.mxu0 0.0
    %1147 = vmatprep.subr.mxu0 0.0
    %1148 = vmatpush2.xpose.msra.mxu0 0.0
    %1149 = vmatprep.subr.mxu0 0.0
    %1150 = vmatpush2.xpose.msra.mxu0 0.0
    %1151 = vmatprep.subr.mxu0 0.0
    %1152 = vmatpush2.xpose.msra.mxu0 0.0
    %1153 = vmatprep.subr.mxu0 0.0
    %1154 = vmatpush2.xpose.msra.mxu0 0.0
    %1155 = vmatprep.subr.mxu0 0.0
    %1156 = vmatpush2.xpose.msra.mxu0 0.0
    %1157 = vmatprep.subr.mxu0 0.0
    %1158 = vmatpush2.xpose.msra.mxu0 0.0
    %1159 = vmatprep.subr.mxu0 0.0
    %1160 = vmatpush2.xpose.msra.mxu0 0.0
    %1161 = vmatprep.subr.mxu0 0.0
    %1162 = vmatpush2.xpose.msra.mxu0 0.0
    %1163 = vmatprep.subr.mxu0 0.0
    %1164 = vmatpush2.xpose.msra.mxu0 0.0
    %1165 = vmatprep.subr.mxu0 0.0
    %1166 = vmatpush2.xpose.msra.mxu0 0.0
    %1167 = vmatprep.subr.mxu0 0.0
    %1168 = vmatpush2.xpose.msra.mxu0 0.0
    %1169 = vmatprep.subr.mxu0 0.0
    %1170 = vmatpush2.xpose.msra.mxu0 0.0
    %1171 = vmatprep.subr.mxu0 0.0
    %1172 = vmatpush2.xpose.msra.mxu0 0.0
    %1173 = vmatprep.mubr.f32.mxu0 0.0
    %1174 = vmatmul.mubr.f32.gmra.mxu0 %v1104
    %v1175 = vpop.f32.mrf.mxu0
    %v1176 = vadd.f32 0.0, %v1175
    %v1177 = vpop.f32.mrf.mxu0
    %1178 = vdwg.mxu0
    %v1180 = vsel %vm1026, %v363, 0
    %v1183 = vsel %vm1026, %v659, 0
    %1185 = vmatprep.subr.mxu0 0.0
    %1186 = vmatpush1.xpose.msra.mxu0 0.0
    %1187 = vmatprep.subr.mxu0 0.0
    %1188 = vmatpush1.xpose.msra.mxu0 0.0
    %1189 = vmatprep.subr.mxu0 0.0
    %1190 = vmatpush1.xpose.msra.mxu0 0.0
    %1191 = vmatprep.subr.mxu0 0.0
    %1192 = vmatpush1.xpose.msra.mxu0 0.0
    %1193 = vmatprep.subr.mxu0 0.0
    %1194 = vmatpush1.xpose.msra.mxu0 0.0
    %1195 = vmatprep.subr.mxu0 0.0
    %1196 = vmatpush1.xpose.msra.mxu0 0.0
    %1197 = vmatprep.subr.mxu0 0.0
    %1198 = vmatpush1.xpose.msra.mxu0 0.0
    %1199 = vmatprep.subr.mxu0 0.0
    %1200 = vmatpush1.xpose.msra.mxu0 0.0
    %1201 = vmatprep.subr.mxu0 0.0
    %1202 = vmatpush1.xpose.msra.mxu0 0.0
    %1203 = vmatprep.subr.mxu0 0.0
    %1204 = vmatpush1.xpose.msra.mxu0 0.0
    %1205 = vmatprep.subr.mxu0 0.0
    %1206 = vmatpush1.xpose.msra.mxu0 0.0
    %1207 = vmatprep.subr.mxu0 0.0
    %1208 = vmatpush1.xpose.msra.mxu0 0.0
    %1209 = vmatprep.subr.mxu0 0.0
    %1210 = vmatpush1.xpose.msra.mxu0 0.0
    %1211 = vmatprep.subr.mxu0 0.0
    %1212 = vmatpush1.xpose.msra.mxu0 0.0
    %1213 = vmatprep.subr.mxu0 0.0
    %1214 = vmatpush1.xpose.msra.mxu0 0.0
    %1215 = vmatprep.subr.mxu0 0.0
    %1216 = vmatpush1.xpose.msra.mxu0 %v1183
    %1217 = vmatprep.subr.mxu0 0.0
    %1218 = vmatpush2.xpose.msra.mxu0 0.0
    %1219 = vmatprep.subr.mxu0 0.0
    %1220 = vmatpush2.xpose.msra.mxu0 0.0
    %1221 = vmatprep.subr.mxu0 0.0
    %1222 = vmatpush2.xpose.msra.mxu0 0.0
    %1223 = vmatprep.subr.mxu0 0.0
    %1224 = vmatpush2.xpose.msra.mxu0 0.0
    %1225 = vmatprep.subr.mxu0 0.0
    %1226 = vmatpush2.xpose.msra.mxu0 0.0
    %1227 = vmatprep.subr.mxu0 0.0
    %1228 = vmatpush2.xpose.msra.mxu0 0.0
    %1229 = vmatprep.subr.mxu0 0.0
    %1230 = vmatpush2.xpose.msra.mxu0 0.0
    %1231 = vmatprep.subr.mxu0 0.0
    %1232 = vmatpush2.xpose.msra.mxu0 0.0
    %1233 = vmatprep.subr.mxu0 0.0
    %1234 = vmatpush2.xpose.msra.mxu0 0.0
    %1235 = vmatprep.subr.mxu0 0.0
    %1236 = vmatpush2.xpose.msra.mxu0 0.0
    %1237 = vmatprep.subr.mxu0 0.0
    %1238 = vmatpush2.xpose.msra.mxu0 0.0
    %1239 = vmatprep.subr.mxu0 0.0
    %1240 = vmatpush2.xpose.msra.mxu0 0.0
    %1241 = vmatprep.subr.mxu0 0.0
    %1242 = vmatpush2.xpose.msra.mxu0 0.0
    %1243 = vmatprep.subr.mxu0 0.0
    %1244 = vmatpush2.xpose.msra.mxu0 0.0
    %1245 = vmatprep.subr.mxu0 0.0
    %1246 = vmatpush2.xpose.msra.mxu0 0.0
    %1247 = vmatprep.subr.mxu0 0.0
    %1248 = vmatpush2.xpose.msra.mxu0 0.0
    %1249 = vmatprep.mubr.f32.mxu0 0.0
    %1250 = vmatmul.mubr.f32.gmra.mxu0 %v1180
    %v1251 = vpop.f32.mrf.mxu0
    %v1252 = vadd.f32 0.0, %v1251
    %v1253 = vpop.f32.mrf.mxu0
    %1254 = vdwg.mxu0
    %v1256 = vsel %vm1026, %v431, 0
    %v1259 = vsel %vm1026, %v727, 0
    %1261 = vmatprep.subr.mxu0 0.0
    %1262 = vmatpush1.xpose.msra.mxu0 0.0
    %1263 = vmatprep.subr.mxu0 0.0
    %1264 = vmatpush1.xpose.msra.mxu0 0.0
    %1265 = vmatprep.subr.mxu0 0.0
    %1266 = vmatpush1.xpose.msra.mxu0 0.0
    %1267 = vmatprep.subr.mxu0 0.0
    %1268 = vmatpush1.xpose.msra.mxu0 0.0
    %1269 = vmatprep.subr.mxu0 0.0
    %1270 = vmatpush1.xpose.msra.mxu0 0.0
    %1271 = vmatprep.subr.mxu0 0.0
    %1272 = vmatpush1.xpose.msra.mxu0 0.0
    %1273 = vmatprep.subr.mxu0 0.0
    %1274 = vmatpush1.xpose.msra.mxu0 0.0
    %1275 = vmatprep.subr.mxu0 0.0
    %1276 = vmatpush1.xpose.msra.mxu0 0.0
    %1277 = vmatprep.subr.mxu0 0.0
    %1278 = vmatpush1.xpose.msra.mxu0 0.0
    %1279 = vmatprep.subr.mxu0 0.0
    %1280 = vmatpush1.xpose.msra.mxu0 0.0
    %1281 = vmatprep.subr.mxu0 0.0
    %1282 = vmatpush1.xpose.msra.mxu0 0.0
    %1283 = vmatprep.subr.mxu0 0.0
    %1284 = vmatpush1.xpose.msra.mxu0 0.0
    %1285 = vmatprep.subr.mxu0 0.0
    %1286 = vmatpush1.xpose.msra.mxu0 0.0
    %1287 = vmatprep.subr.mxu0 0.0
    %1288 = vmatpush1.xpose.msra.mxu0 0.0
    %1289 = vmatprep.subr.mxu0 0.0
    %1290 = vmatpush1.xpose.msra.mxu0 0.0
    %1291 = vmatprep.subr.mxu0 0.0
    %1292 = vmatpush1.xpose.msra.mxu0 %v1259
    %1293 = vmatprep.subr.mxu0 0.0
    %1294 = vmatpush2.xpose.msra.mxu0 0.0
    %1295 = vmatprep.subr.mxu0 0.0
    %1296 = vmatpush2.xpose.msra.mxu0 0.0
    %1297 = vmatprep.subr.mxu0 0.0
    %1298 = vmatpush2.xpose.msra.mxu0 0.0
    %1299 = vmatprep.subr.mxu0 0.0
    %1300 = vmatpush2.xpose.msra.mxu0 0.0
    %1301 = vmatprep.subr.mxu0 0.0
    %1302 = vmatpush2.xpose.msra.mxu0 0.0
    %1303 = vmatprep.subr.mxu0 0.0
    %1304 = vmatpush2.xpose.msra.mxu0 0.0
    %1305 = vmatprep.subr.mxu0 0.0
    %1306 = vmatpush2.xpose.msra.mxu0 0.0
    %1307 = vmatprep.subr.mxu0 0.0
    %1308 = vmatpush2.xpose.msra.mxu0 0.0
    %1309 = vmatprep.subr.mxu0 0.0
    %1310 = vmatpush2.xpose.msra.mxu0 0.0
    %1311 = vmatprep.subr.mxu0 0.0
    %1312 = vmatpush2.xpose.msra.mxu0 0.0
    %1313 = vmatprep.subr.mxu0 0.0
    %1314 = vmatpush2.xpose.msra.mxu0 0.0
    %1315 = vmatprep.subr.mxu0 0.0
    %1316 = vmatpush2.xpose.msra.mxu0 0.0
    %1317 = vmatprep.subr.mxu0 0.0
    %1318 = vmatpush2.xpose.msra.mxu0 0.0
    %1319 = vmatprep.subr.mxu0 0.0
    %1320 = vmatpush2.xpose.msra.mxu0 0.0
    %1321 = vmatprep.subr.mxu0 0.0
    %1322 = vmatpush2.xpose.msra.mxu0 0.0
    %1323 = vmatprep.subr.mxu0 0.0
    %1324 = vmatpush2.xpose.msra.mxu0 0.0
    %1325 = vmatprep.mubr.f32.mxu0 0.0
    %1326 = vmatmul.mubr.f32.gmra.mxu0 %v1256
    %v1327 = vpop.f32.mrf.mxu0
    %v1328 = vadd.f32 0.0, %v1327
    %v1329 = vpop.f32.mrf.mxu0
    %1330 = vdwg.mxu0
    %v1332 = vsel %vm1026, %v364, 0
    %v1335 = vsel %vm1026, %v660, 0
    %1337 = vmatprep.subr.mxu0 0.0
    %1338 = vmatpush1.xpose.msra.mxu0 0.0
    %1339 = vmatprep.subr.mxu0 0.0
    %1340 = vmatpush1.xpose.msra.mxu0 0.0
    %1341 = vmatprep.subr.mxu0 0.0
    %1342 = vmatpush1.xpose.msra.mxu0 0.0
    %1343 = vmatprep.subr.mxu0 0.0
    %1344 = vmatpush1.xpose.msra.mxu0 0.0
    %1345 = vmatprep.subr.mxu0 0.0
    %1346 = vmatpush1.xpose.msra.mxu0 0.0
    %1347 = vmatprep.subr.mxu0 0.0
    %1348 = vmatpush1.xpose.msra.mxu0 0.0
    %1349 = vmatprep.subr.mxu0 0.0
    %1350 = vmatpush1.xpose.msra.mxu0 0.0
    %1351 = vmatprep.subr.mxu0 0.0
    %1352 = vmatpush1.xpose.msra.mxu0 0.0
    %1353 = vmatprep.subr.mxu0 0.0
    %1354 = vmatpush1.xpose.msra.mxu0 0.0
    %1355 = vmatprep.subr.mxu0 0.0
    %1356 = vmatpush1.xpose.msra.mxu0 0.0
    %1357 = vmatprep.subr.mxu0 0.0
    %1358 = vmatpush1.xpose.msra.mxu0 0.0
    %1359 = vmatprep.subr.mxu0 0.0
    %1360 = vmatpush1.xpose.msra.mxu0 0.0
    %1361 = vmatprep.subr.mxu0 0.0
    %1362 = vmatpush1.xpose.msra.mxu0 0.0
    %1363 = vmatprep.subr.mxu0 0.0
    %1364 = vmatpush1.xpose.msra.mxu0 0.0
    %1365 = vmatprep.subr.mxu0 0.0
    %1366 = vmatpush1.xpose.msra.mxu0 0.0
    %1367 = vmatprep.subr.mxu0 0.0
    %1368 = vmatpush1.xpose.msra.mxu0 %v1335
    %1369 = vmatprep.subr.mxu0 0.0
    %1370 = vmatpush2.xpose.msra.mxu0 0.0
    %1371 = vmatprep.subr.mxu0 0.0
    %1372 = vmatpush2.xpose.msra.mxu0 0.0
    %1373 = vmatprep.subr.mxu0 0.0
    %1374 = vmatpush2.xpose.msra.mxu0 0.0
    %1375 = vmatprep.subr.mxu0 0.0
    %1376 = vmatpush2.xpose.msra.mxu0 0.0
    %1377 = vmatprep.subr.mxu0 0.0
    %1378 = vmatpush2.xpose.msra.mxu0 0.0
    %1379 = vmatprep.subr.mxu0 0.0
    %1380 = vmatpush2.xpose.msra.mxu0 0.0
    %1381 = vmatprep.subr.mxu0 0.0
    %1382 = vmatpush2.xpose.msra.mxu0 0.0
    %1383 = vmatprep.subr.mxu0 0.0
    %1384 = vmatpush2.xpose.msra.mxu0 0.0
    %1385 = vmatprep.subr.mxu0 0.0
    %1386 = vmatpush2.xpose.msra.mxu0 0.0
    %1387 = vmatprep.subr.mxu0 0.0
    %1388 = vmatpush2.xpose.msra.mxu0 0.0
    %1389 = vmatprep.subr.mxu0 0.0
    %1390 = vmatpush2.xpose.msra.mxu0 0.0
    %1391 = vmatprep.subr.mxu0 0.0
    %1392 = vmatpush2.xpose.msra.mxu0 0.0
    %1393 = vmatprep.subr.mxu0 0.0
    %1394 = vmatpush2.xpose.msra.mxu0 0.0
    %1395 = vmatprep.subr.mxu0 0.0
    %1396 = vmatpush2.xpose.msra.mxu0 0.0
    %1397 = vmatprep.subr.mxu0 0.0
    %1398 = vmatpush2.xpose.msra.mxu0 0.0
    %1399 = vmatprep.subr.mxu0 0.0
    %1400 = vmatpush2.xpose.msra.mxu0 0.0
    %1401 = vmatprep.mubr.f32.mxu0 0.0
    %1402 = vmatmul.mubr.f32.gmra.mxu0 %v1332
    %v1403 = vpop.f32.mrf.mxu0
    %v1404 = vadd.f32 0.0, %v1403
    %v1405 = vpop.f32.mrf.mxu0
    %1406 = vdwg.mxu0
    %v1408 = vsel %vm1026, %v432, 0
    %v1411 = vsel %vm1026, %v728, 0
    %1413 = vmatprep.subr.mxu0 0.0
    %1414 = vmatpush1.xpose.msra.mxu0 0.0
    %1415 = vmatprep.subr.mxu0 0.0
    %1416 = vmatpush1.xpose.msra.mxu0 0.0
    %1417 = vmatprep.subr.mxu0 0.0
    %1418 = vmatpush1.xpose.msra.mxu0 0.0
    %1419 = vmatprep.subr.mxu0 0.0
    %1420 = vmatpush1.xpose.msra.mxu0 0.0
    %1421 = vmatprep.subr.mxu0 0.0
    %1422 = vmatpush1.xpose.msra.mxu0 0.0
    %1423 = vmatprep.subr.mxu0 0.0
    %1424 = vmatpush1.xpose.msra.mxu0 0.0
    %1425 = vmatprep.subr.mxu0 0.0
    %1426 = vmatpush1.xpose.msra.mxu0 0.0
    %1427 = vmatprep.subr.mxu0 0.0
    %1428 = vmatpush1.xpose.msra.mxu0 0.0
    %1429 = vmatprep.subr.mxu0 0.0
    %1430 = vmatpush1.xpose.msra.mxu0 0.0
    %1431 = vmatprep.subr.mxu0 0.0
    %1432 = vmatpush1.xpose.msra.mxu0 0.0
    %1433 = vmatprep.subr.mxu0 0.0
    %1434 = vmatpush1.xpose.msra.mxu0 0.0
    %1435 = vmatprep.subr.mxu0 0.0
    %1436 = vmatpush1.xpose.msra.mxu0 0.0
    %1437 = vmatprep.subr.mxu0 0.0
    %1438 = vmatpush1.xpose.msra.mxu0 0.0
    %1439 = vmatprep.subr.mxu0 0.0
    %1440 = vmatpush1.xpose.msra.mxu0 0.0
    %1441 = vmatprep.subr.mxu0 0.0
    %1442 = vmatpush1.xpose.msra.mxu0 0.0
    %1443 = vmatprep.subr.mxu0 0.0
    %1444 = vmatpush1.xpose.msra.mxu0 %v1411
    %1445 = vmatprep.subr.mxu0 0.0
    %1446 = vmatpush2.xpose.msra.mxu0 0.0
    %1447 = vmatprep.subr.mxu0 0.0
    %1448 = vmatpush2.xpose.msra.mxu0 0.0
    %1449 = vmatprep.subr.mxu0 0.0
    %1450 = vmatpush2.xpose.msra.mxu0 0.0
    %1451 = vmatprep.subr.mxu0 0.0
    %1452 = vmatpush2.xpose.msra.mxu0 0.0
    %1453 = vmatprep.subr.mxu0 0.0
    %1454 = vmatpush2.xpose.msra.mxu0 0.0
    %1455 = vmatprep.subr.mxu0 0.0
    %1456 = vmatpush2.xpose.msra.mxu0 0.0
    %1457 = vmatprep.subr.mxu0 0.0
    %1458 = vmatpush2.xpose.msra.mxu0 0.0
    %1459 = vmatprep.subr.mxu0 0.0
    %1460 = vmatpush2.xpose.msra.mxu0 0.0
    %1461 = vmatprep.subr.mxu0 0.0
    %1462 = vmatpush2.xpose.msra.mxu0 0.0
    %1463 = vmatprep.subr.mxu0 0.0
    %1464 = vmatpush2.xpose.msra.mxu0 0.0
    %1465 = vmatprep.subr.mxu0 0.0
    %1466 = vmatpush2.xpose.msra.mxu0 0.0
    %1467 = vmatprep.subr.mxu0 0.0
    %1468 = vmatpush2.xpose.msra.mxu0 0.0
    %1469 = vmatprep.subr.mxu0 0.0
    %1470 = vmatpush2.xpose.msra.mxu0 0.0
    %1471 = vmatprep.subr.mxu0 0.0
    %1472 = vmatpush2.xpose.msra.mxu0 0.0
    %1473 = vmatprep.subr.mxu0 0.0
    %1474 = vmatpush2.xpose.msra.mxu0 0.0
    %1475 = vmatprep.subr.mxu0 0.0
    %1476 = vmatpush2.xpose.msra.mxu0 0.0
    %1477 = vmatprep.mubr.f32.mxu0 0.0
    %1478 = vmatmul.mubr.f32.gmra.mxu0 %v1408
    %v1479 = vpop.f32.mrf.mxu0
    %v1480 = vadd.f32 0.0, %v1479
    %v1481 = vpop.f32.mrf.mxu0
    %1482 = vdwg.mxu0
    %v1484 = vsel %vm1026, %v365, 0
    %v1487 = vsel %vm1026, %v661, 0
    %1489 = vmatprep.subr.mxu0 0.0
    %1490 = vmatpush1.xpose.msra.mxu0 0.0
    %1491 = vmatprep.subr.mxu0 0.0
    %1492 = vmatpush1.xpose.msra.mxu0 0.0
    %1493 = vmatprep.subr.mxu0 0.0
    %1494 = vmatpush1.xpose.msra.mxu0 0.0
    %1495 = vmatprep.subr.mxu0 0.0
    %1496 = vmatpush1.xpose.msra.mxu0 0.0
    %1497 = vmatprep.subr.mxu0 0.0
    %1498 = vmatpush1.xpose.msra.mxu0 0.0
    %1499 = vmatprep.subr.mxu0 0.0
    %1500 = vmatpush1.xpose.msra.mxu0 0.0
    %1501 = vmatprep.subr.mxu0 0.0
    %1502 = vmatpush1.xpose.msra.mxu0 0.0
    %1503 = vmatprep.subr.mxu0 0.0
    %1504 = vmatpush1.xpose.msra.mxu0 0.0
    %1505 = vmatprep.subr.mxu0 0.0
    %1506 = vmatpush1.xpose.msra.mxu0 0.0
    %1507 = vmatprep.subr.mxu0 0.0
    %1508 = vmatpush1.xpose.msra.mxu0 0.0
    %1509 = vmatprep.subr.mxu0 0.0
    %1510 = vmatpush1.xpose.msra.mxu0 0.0
    %1511 = vmatprep.subr.mxu0 0.0
    %1512 = vmatpush1.xpose.msra.mxu0 0.0
    %1513 = vmatprep.subr.mxu0 0.0
    %1514 = vmatpush1.xpose.msra.mxu0 0.0
    %1515 = vmatprep.subr.mxu0 0.0
    %1516 = vmatpush1.xpose.msra.mxu0 0.0
    %1517 = vmatprep.subr.mxu0 0.0
    %1518 = vmatpush1.xpose.msra.mxu0 0.0
    %1519 = vmatprep.subr.mxu0 0.0
    %1520 = vmatpush1.xpose.msra.mxu0 %v1487
    %1521 = vmatprep.subr.mxu0 0.0
    %1522 = vmatpush2.xpose.msra.mxu0 0.0
    %1523 = vmatprep.subr.mxu0 0.0
    %1524 = vmatpush2.xpose.msra.mxu0 0.0
    %1525 = vmatprep.subr.mxu0 0.0
    %1526 = vmatpush2.xpose.msra.mxu0 0.0
    %1527 = vmatprep.subr.mxu0 0.0
    %1528 = vmatpush2.xpose.msra.mxu0 0.0
    %1529 = vmatprep.subr.mxu0 0.0
    %1530 = vmatpush2.xpose.msra.mxu0 0.0
    %1531 = vmatprep.subr.mxu0 0.0
    %1532 = vmatpush2.xpose.msra.mxu0 0.0
    %1533 = vmatprep.subr.mxu0 0.0
    %1534 = vmatpush2.xpose.msra.mxu0 0.0
    %1535 = vmatprep.subr.mxu0 0.0
    %1536 = vmatpush2.xpose.msra.mxu0 0.0
    %1537 = vmatprep.subr.mxu0 0.0
    %1538 = vmatpush2.xpose.msra.mxu0 0.0
    %1539 = vmatprep.subr.mxu0 0.0
    %1540 = vmatpush2.xpose.msra.mxu0 0.0
    %1541 = vmatprep.subr.mxu0 0.0
    %1542 = vmatpush2.xpose.msra.mxu0 0.0
    %1543 = vmatprep.subr.mxu0 0.0
    %1544 = vmatpush2.xpose.msra.mxu0 0.0
    %1545 = vmatprep.subr.mxu0 0.0
    %1546 = vmatpush2.xpose.msra.mxu0 0.0
    %1547 = vmatprep.subr.mxu0 0.0
    %1548 = vmatpush2.xpose.msra.mxu0 0.0
    %1549 = vmatprep.subr.mxu0 0.0
    %1550 = vmatpush2.xpose.msra.mxu0 0.0
    %1551 = vmatprep.subr.mxu0 0.0
    %1552 = vmatpush2.xpose.msra.mxu0 0.0
    %1553 = vmatprep.mubr.f32.mxu0 0.0
    %1554 = vmatmul.mubr.f32.gmra.mxu0 %v1484
    %v1555 = vpop.f32.mrf.mxu0
    %v1556 = vadd.f32 0.0, %v1555
    %v1557 = vpop.f32.mrf.mxu0
    %1558 = vdwg.mxu0
    %v1560 = vsel %vm1026, %v433, 0
    %v1563 = vsel %vm1026, %v729, 0
    %1565 = vmatprep.subr.mxu0 0.0
    %1566 = vmatpush1.xpose.msra.mxu0 0.0
    %1567 = vmatprep.subr.mxu0 0.0
    %1568 = vmatpush1.xpose.msra.mxu0 0.0
    %1569 = vmatprep.subr.mxu0 0.0
    %1570 = vmatpush1.xpose.msra.mxu0 0.0
    %1571 = vmatprep.subr.mxu0 0.0
    %1572 = vmatpush1.xpose.msra.mxu0 0.0
    %1573 = vmatprep.subr.mxu0 0.0
    %1574 = vmatpush1.xpose.msra.mxu0 0.0
    %1575 = vmatprep.subr.mxu0 0.0
    %1576 = vmatpush1.xpose.msra.mxu0 0.0
    %1577 = vmatprep.subr.mxu0 0.0
    %1578 = vmatpush1.xpose.msra.mxu0 0.0
    %1579 = vmatprep.subr.mxu0 0.0
    %1580 = vmatpush1.xpose.msra.mxu0 0.0
    %1581 = vmatprep.subr.mxu0 0.0
    %1582 = vmatpush1.xpose.msra.mxu0 0.0
    %1583 = vmatprep.subr.mxu0 0.0
    %1584 = vmatpush1.xpose.msra.mxu0 0.0
    %1585 = vmatprep.subr.mxu0 0.0
    %1586 = vmatpush1.xpose.msra.mxu0 0.0
    %1587 = vmatprep.subr.mxu0 0.0
    %1588 = vmatpush1.xpose.msra.mxu0 0.0
    %1589 = vmatprep.subr.mxu0 0.0
    %1590 = vmatpush1.xpose.msra.mxu0 0.0
    %1591 = vmatprep.subr.mxu0 0.0
    %1592 = vmatpush1.xpose.msra.mxu0 0.0
    %1593 = vmatprep.subr.mxu0 0.0
    %1594 = vmatpush1.xpose.msra.mxu0 0.0
    %1595 = vmatprep.subr.mxu0 0.0
    %1596 = vmatpush1.xpose.msra.mxu0 %v1563
    %1597 = vmatprep.subr.mxu0 0.0
    %1598 = vmatpush2.xpose.msra.mxu0 0.0
    %1599 = vmatprep.subr.mxu0 0.0
    %1600 = vmatpush2.xpose.msra.mxu0 0.0
    %1601 = vmatprep.subr.mxu0 0.0
    %1602 = vmatpush2.xpose.msra.mxu0 0.0
    %1603 = vmatprep.subr.mxu0 0.0
    %1604 = vmatpush2.xpose.msra.mxu0 0.0
    %1605 = vmatprep.subr.mxu0 0.0
    %1606 = vmatpush2.xpose.msra.mxu0 0.0
    %1607 = vmatprep.subr.mxu0 0.0
    %1608 = vmatpush2.xpose.msra.mxu0 0.0
    %1609 = vmatprep.subr.mxu0 0.0
    %1610 = vmatpush2.xpose.msra.mxu0 0.0
    %1611 = vmatprep.subr.mxu0 0.0
    %1612 = vmatpush2.xpose.msra.mxu0 0.0
    %1613 = vmatprep.subr.mxu0 0.0
    %1614 = vmatpush2.xpose.msra.mxu0 0.0
    %1615 = vmatprep.subr.mxu0 0.0
    %1616 = vmatpush2.xpose.msra.mxu0 0.0
    %1617 = vmatprep.subr.mxu0 0.0
    %1618 = vmatpush2.xpose.msra.mxu0 0.0
    %1619 = vmatprep.subr.mxu0 0.0
    %1620 = vmatpush2.xpose.msra.mxu0 0.0
    %1621 = vmatprep.subr.mxu0 0.0
    %1622 = vmatpush2.xpose.msra.mxu0 0.0
    %1623 = vmatprep.subr.mxu0 0.0
    %1624 = vmatpush2.xpose.msra.mxu0 0.0
    %1625 = vmatprep.subr.mxu0 0.0
    %1626 = vmatpush2.xpose.msra.mxu0 0.0
    %1627 = vmatprep.subr.mxu0 0.0
    %1628 = vmatpush2.xpose.msra.mxu0 0.0
    %1629 = vmatprep.mubr.f32.mxu0 0.0
    %1630 = vmatmul.mubr.f32.gmra.mxu0 %v1560
    %v1631 = vpop.f32.mrf.mxu0
    %v1632 = vadd.f32 0.0, %v1631
    %v1633 = vpop.f32.mrf.mxu0
    %1634 = vdwg.mxu0
    %v1635 = vsel %vm1026, %v1100, -inf
    %1636 = vmax.xlane.f32.xlu0 %v1635
    %v1637 = vpop.xlane.xlu0 %1636
    %v1638 = vsel %vm1026, %v1176, -inf
    %1639 = vmax.xlane.f32.xlu0 %v1638
    %v1640 = vpop.xlane.xlu0 %1639
    %v1641 = vsel %vm1026, %v1252, -inf
    %1642 = vmax.xlane.f32.xlu0 %v1641
    %v1643 = vpop.xlane.xlu0 %1642
    %v1644 = vsel %vm1026, %v1328, -inf
    %1645 = vmax.xlane.f32.xlu0 %v1644
    %v1646 = vpop.xlane.xlu0 %1645
    %v1647 = vsel %vm1026, %v1404, -inf
    %1648 = vmax.xlane.f32.xlu0 %v1647
    %v1649 = vpop.xlane.xlu0 %1648
    %v1650 = vsel %vm1026, %v1480, -inf
    %1651 = vmax.xlane.f32.xlu0 %v1650
    %v1652 = vpop.xlane.xlu0 %1651
    %v1653 = vsel %vm1026, %v1556, -inf
    %1654 = vmax.xlane.f32.xlu0 %v1653
    %v1655 = vpop.xlane.xlu0 %1654
    %v1656 = vsel %vm1026, %v1632, -inf
    %1657 = vmax.xlane.f32.xlu0 %v1656
    %v1658 = vpop.xlane.xlu0 %1657
    %v1659 = vsub.f32 %v1100, %v1637
    %v1660 = vsub.f32 %v1176, %v1640
    %v1661 = vsub.f32 %v1252, %v1643
    %v1662 = vsub.f32 %v1328, %v1646
    %v1663 = vsub.f32 %v1404, %v1649
    %v1664 = vsub.f32 %v1480, %v1652
    %v1665 = vsub.f32 %v1556, %v1655
    %v1666 = vsub.f32 %v1632, %v1658
    %v1667 = vmul.f32 %v1659, 1.442695
    %v1668 = vpow.pop %v1667
    %v1669 = vmul.f32 %v1660, 1.442695
    %v1670 = vpow.pop %v1669
    %v1671 = vmul.f32 %v1661, 1.442695
    %v1672 = vpow.pop %v1671
    %v1673 = vmul.f32 %v1662, 1.442695
    %v1674 = vpow.pop %v1673
    %v1675 = vmul.f32 %v1663, 1.442695
    %v1676 = vpow.pop %v1675
    %v1677 = vmul.f32 %v1664, 1.442695
    %v1678 = vpow.pop %v1677
    %v1679 = vmul.f32 %v1665, 1.442695
    %v1680 = vpow.pop %v1679
    %v1681 = vmul.f32 %v1666, 1.442695
    %v1682 = vpow.pop %v1681
    %v1683 = vsel %vm1026, %v1668, 0.0
    %1684 = vadd.xlane.f32.xlu0 %v1683
    %v1685 = vpop.xlane.xlu0 %1684
    %v1686 = vsel %vm1026, %v1670, 0.0
    %1687 = vadd.xlane.f32.xlu0 %v1686
    %v1688 = vpop.xlane.xlu0 %1687
    %v1689 = vsel %vm1026, %v1672, 0.0
    %1690 = vadd.xlane.f32.xlu0 %v1689
    %v1691 = vpop.xlane.xlu0 %1690
    %v1692 = vsel %vm1026, %v1674, 0.0
    %1693 = vadd.xlane.f32.xlu0 %v1692
    %v1694 = vpop.xlane.xlu0 %1693
    %v1695 = vsel %vm1026, %v1676, 0.0
    %1696 = vadd.xlane.f32.xlu0 %v1695
    %v1697 = vpop.xlane.xlu0 %1696
    %v1698 = vsel %vm1026, %v1678, 0.0
    %1699 = vadd.xlane.f32.xlu0 %v1698
    %v1700 = vpop.xlane.xlu0 %1699
    %v1701 = vsel %vm1026, %v1680, 0.0
    %1702 = vadd.xlane.f32.xlu0 %v1701
    %v1703 = vpop.xlane.xlu0 %1702
    %v1704 = vsel %vm1026, %v1682, 0.0
    %1705 = vadd.xlane.f32.xlu0 %v1704
    %v1706 = vpop.xlane.xlu0 %1705
    %v1707 = vrcp.pop %v1685
    %v1708 = vrcp.pop %v1688
    %v1709 = vrcp.pop %v1691
    %v1710 = vrcp.pop %v1694
    %v1711 = vrcp.pop %v1697
    %v1712 = vrcp.pop %v1700
    %v1713 = vrcp.pop %v1703
    %v1714 = vrcp.pop %v1706
    %v1715 = vmul.f32 %v1668, %v1707
    %v1716 = vmul.f32 %v1670, %v1708
    %v1717 = vmul.f32 %v1672, %v1709
    %v1718 = vmul.f32 %v1674, %v1710
    %v1719 = vmul.f32 %v1676, %v1711
    %v1720 = vmul.f32 %v1678, %v1712
    %v1721 = vmul.f32 %v1680, %v1713
    %v1722 = vmul.f32 %v1682, %v1714
    %v1724 = vsel %vm1026, %v1715, 0
    %1726 = vmatprep.subr.mxu0 0.0
    %1727 = vmatpush1.msra.mxu0 0.0
    %1728 = vmatprep.subr.mxu0 0.0
    %1729 = vmatpush1.msra.mxu0 0.0
    %1730 = vmatprep.subr.mxu0 0.0
    %1731 = vmatpush1.msra.mxu0 0.0
    %1732 = vmatprep.subr.mxu0 0.0
    %1733 = vmatpush1.msra.mxu0 0.0
    %1734 = vmatprep.subr.mxu0 0.0
    %1735 = vmatpush1.msra.mxu0 0.0
    %1736 = vmatprep.subr.mxu0 0.0
    %1737 = vmatpush1.msra.mxu0 0.0
    %1738 = vmatprep.subr.mxu0 0.0
    %1739 = vmatpush1.msra.mxu0 0.0
    %1740 = vmatprep.subr.mxu0 0.0
    %1741 = vmatpush1.msra.mxu0 0.0
    %1742 = vmatprep.subr.mxu0 0.0
    %1743 = vmatpush1.msra.mxu0 0.0
    %1744 = vmatprep.subr.mxu0 0.0
    %1745 = vmatpush1.msra.mxu0 0.0
    %1746 = vmatprep.subr.mxu0 0.0
    %1747 = vmatpush1.msra.mxu0 0.0
    %1748 = vmatprep.subr.mxu0 0.0
    %1749 = vmatpush1.msra.mxu0 0.0
    %1750 = vmatprep.subr.mxu0 0.0
    %1751 = vmatpush1.msra.mxu0 0.0
    %1752 = vmatprep.subr.mxu0 0.0
    %1753 = vmatpush1.msra.mxu0 0.0
    %1754 = vmatprep.subr.mxu0 0.0
    %1755 = vmatpush1.msra.mxu0 0.0
    %1756 = vmatprep.subr.mxu0 0.0
    %1757 = vmatpush1.msra.mxu0 %v954
    %1758 = vmatprep.subr.mxu0 0.0
    %1759 = vmatpush2.msra.mxu0 0.0
    %1760 = vmatprep.subr.mxu0 0.0
    %1761 = vmatpush2.msra.mxu0 0.0
    %1762 = vmatprep.subr.mxu0 0.0
    %1763 = vmatpush2.msra.mxu0 0.0
    %1764 = vmatprep.subr.mxu0 0.0
    %1765 = vmatpush2.msra.mxu0 0.0
    %1766 = vmatprep.subr.mxu0 0.0
    %1767 = vmatpush2.msra.mxu0 0.0
    %1768 = vmatprep.subr.mxu0 0.0
    %1769 = vmatpush2.msra.mxu0 0.0
    %1770 = vmatprep.subr.mxu0 0.0
    %1771 = vmatpush2.msra.mxu0 0.0
    %1772 = vmatprep.subr.mxu0 0.0
    %1773 = vmatpush2.msra.mxu0 0.0
    %1774 = vmatprep.subr.mxu0 0.0
    %1775 = vmatpush2.msra.mxu0 0.0
    %1776 = vmatprep.subr.mxu0 0.0
    %1777 = vmatpush2.msra.mxu0 0.0
    %1778 = vmatprep.subr.mxu0 0.0
    %1779 = vmatpush2.msra.mxu0 0.0
    %1780 = vmatprep.subr.mxu0 0.0
    %1781 = vmatpush2.msra.mxu0 0.0
    %1782 = vmatprep.subr.mxu0 0.0
    %1783 = vmatpush2.msra.mxu0 0.0
    %1784 = vmatprep.subr.mxu0 0.0
    %1785 = vmatpush2.msra.mxu0 0.0
    %1786 = vmatprep.subr.mxu0 0.0
    %1787 = vmatpush2.msra.mxu0 0.0
    %1788 = vmatprep.subr.mxu0 0.0
    %1789 = vmatpush2.msra.mxu0 0.0
    %1790 = vmatprep.mubr.f32.mxu0 0.0
    %1791 = vmatmul.mubr.f32.gmra.mxu0 %v1724
    %v1792 = vpop.f32.mrf.mxu0
    %v1793 = vadd.f32 0.0, %v1792
    %v1794 = vpop.f32.mrf.mxu0
    %1795 = vdwg.mxu0
    %v1797 = vsel %vm1026, %v1716, 0
    %1799 = vmatprep.subr.mxu0 0.0
    %1800 = vmatpush1.msra.mxu0 0.0
    %1801 = vmatprep.subr.mxu0 0.0
    %1802 = vmatpush1.msra.mxu0 0.0
    %1803 = vmatprep.subr.mxu0 0.0
    %1804 = vmatpush1.msra.mxu0 0.0
    %1805 = vmatprep.subr.mxu0 0.0
    %1806 = vmatpush1.msra.mxu0 0.0
    %1807 = vmatprep.subr.mxu0 0.0
    %1808 = vmatpush1.msra.mxu0 0.0
    %1809 = vmatprep.subr.mxu0 0.0
    %1810 = vmatpush1.msra.mxu0 0.0
    %1811 = vmatprep.subr.mxu0 0.0
    %1812 = vmatpush1.msra.mxu0 0.0
    %1813 = vmatprep.subr.mxu0 0.0
    %1814 = vmatpush1.msra.mxu0 0.0
    %1815 = vmatprep.subr.mxu0 0.0
    %1816 = vmatpush1.msra.mxu0 0.0
    %1817 = vmatprep.subr.mxu0 0.0
    %1818 = vmatpush1.msra.mxu0 0.0
    %1819 = vmatprep.subr.mxu0 0.0
    %1820 = vmatpush1.msra.mxu0 0.0
    %1821 = vmatprep.subr.mxu0 0.0
    %1822 = vmatpush1.msra.mxu0 0.0
    %1823 = vmatprep.subr.mxu0 0.0
    %1824 = vmatpush1.msra.mxu0 0.0
    %1825 = vmatprep.subr.mxu0 0.0
    %1826 = vmatpush1.msra.mxu0 0.0
    %1827 = vmatprep.subr.mxu0 0.0
    %1828 = vmatpush1.msra.mxu0 0.0
    %1829 = vmatprep.subr.mxu0 0.0
    %1830 = vmatpush1.msra.mxu0 %v1022
    %1831 = vmatprep.subr.mxu0 0.0
    %1832 = vmatpush2.msra.mxu0 0.0
    %1833 = vmatprep.subr.mxu0 0.0
    %1834 = vmatpush2.msra.mxu0 0.0
    %1835 = vmatprep.subr.mxu0 0.0
    %1836 = vmatpush2.msra.mxu0 0.0
    %1837 = vmatprep.subr.mxu0 0.0
    %1838 = vmatpush2.msra.mxu0 0.0
    %1839 = vmatprep.subr.mxu0 0.0
    %1840 = vmatpush2.msra.mxu0 0.0
    %1841 = vmatprep.subr.mxu0 0.0
    %1842 = vmatpush2.msra.mxu0 0.0
    %1843 = vmatprep.subr.mxu0 0.0
    %1844 = vmatpush2.msra.mxu0 0.0
    %1845 = vmatprep.subr.mxu0 0.0
    %1846 = vmatpush2.msra.mxu0 0.0
    %1847 = vmatprep.subr.mxu0 0.0
    %1848 = vmatpush2.msra.mxu0 0.0
    %1849 = vmatprep.subr.mxu0 0.0
    %1850 = vmatpush2.msra.mxu0 0.0
    %1851 = vmatprep.subr.mxu0 0.0
    %1852 = vmatpush2.msra.mxu0 0.0
    %1853 = vmatprep.subr.mxu0 0.0
    %1854 = vmatpush2.msra.mxu0 0.0
    %1855 = vmatprep.subr.mxu0 0.0
    %1856 = vmatpush2.msra.mxu0 0.0
    %1857 = vmatprep.subr.mxu0 0.0
    %1858 = vmatpush2.msra.mxu0 0.0
    %1859 = vmatprep.subr.mxu0 0.0
    %1860 = vmatpush2.msra.mxu0 0.0
    %1861 = vmatprep.subr.mxu0 0.0
    %1862 = vmatpush2.msra.mxu0 0.0
    %1863 = vmatprep.mubr.f32.mxu0 0.0
    %1864 = vmatmul.mubr.f32.gmra.mxu0 %v1797
    %v1865 = vpop.f32.mrf.mxu0
    %v1866 = vadd.f32 0.0, %v1865
    %v1867 = vpop.f32.mrf.mxu0
    %1868 = vdwg.mxu0
    %v1870 = vsel %vm1026, %v1717, 0
    %1872 = vmatprep.subr.mxu0 0.0
    %1873 = vmatpush1.msra.mxu0 0.0
    %1874 = vmatprep.subr.mxu0 0.0
    %1875 = vmatpush1.msra.mxu0 0.0
    %1876 = vmatprep.subr.mxu0 0.0
    %1877 = vmatpush1.msra.mxu0 0.0
    %1878 = vmatprep.subr.mxu0 0.0
    %1879 = vmatpush1.msra.mxu0 0.0
    %1880 = vmatprep.subr.mxu0 0.0
    %1881 = vmatpush1.msra.mxu0 0.0
    %1882 = vmatprep.subr.mxu0 0.0
    %1883 = vmatpush1.msra.mxu0 0.0
    %1884 = vmatprep.subr.mxu0 0.0
    %1885 = vmatpush1.msra.mxu0 0.0
    %1886 = vmatprep.subr.mxu0 0.0
    %1887 = vmatpush1.msra.mxu0 0.0
    %1888 = vmatprep.subr.mxu0 0.0
    %1889 = vmatpush1.msra.mxu0 0.0
    %1890 = vmatprep.subr.mxu0 0.0
    %1891 = vmatpush1.msra.mxu0 0.0
    %1892 = vmatprep.subr.mxu0 0.0
    %1893 = vmatpush1.msra.mxu0 0.0
    %1894 = vmatprep.subr.mxu0 0.0
    %1895 = vmatpush1.msra.mxu0 0.0
    %1896 = vmatprep.subr.mxu0 0.0
    %1897 = vmatpush1.msra.mxu0 0.0
    %1898 = vmatprep.subr.mxu0 0.0
    %1899 = vmatpush1.msra.mxu0 0.0
    %1900 = vmatprep.subr.mxu0 0.0
    %1901 = vmatpush1.msra.mxu0 0.0
    %1902 = vmatprep.subr.mxu0 0.0
    %1903 = vmatpush1.msra.mxu0 %v955
    %1904 = vmatprep.subr.mxu0 0.0
    %1905 = vmatpush2.msra.mxu0 0.0
    %1906 = vmatprep.subr.mxu0 0.0
    %1907 = vmatpush2.msra.mxu0 0.0
    %1908 = vmatprep.subr.mxu0 0.0
    %1909 = vmatpush2.msra.mxu0 0.0
    %1910 = vmatprep.subr.mxu0 0.0
    %1911 = vmatpush2.msra.mxu0 0.0
    %1912 = vmatprep.subr.mxu0 0.0
    %1913 = vmatpush2.msra.mxu0 0.0
    %1914 = vmatprep.subr.mxu0 0.0
    %1915 = vmatpush2.msra.mxu0 0.0
    %1916 = vmatprep.subr.mxu0 0.0
    %1917 = vmatpush2.msra.mxu0 0.0
    %1918 = vmatprep.subr.mxu0 0.0
    %1919 = vmatpush2.msra.mxu0 0.0
    %1920 = vmatprep.subr.mxu0 0.0
    %1921 = vmatpush2.msra.mxu0 0.0
    %1922 = vmatprep.subr.mxu0 0.0
    %1923 = vmatpush2.msra.mxu0 0.0
    %1924 = vmatprep.subr.mxu0 0.0
    %1925 = vmatpush2.msra.mxu0 0.0
    %1926 = vmatprep.subr.mxu0 0.0
    %1927 = vmatpush2.msra.mxu0 0.0
    %1928 = vmatprep.subr.mxu0 0.0
    %1929 = vmatpush2.msra.mxu0 0.0
    %1930 = vmatprep.subr.mxu0 0.0
    %1931 = vmatpush2.msra.mxu0 0.0
    %1932 = vmatprep.subr.mxu0 0.0
    %1933 = vmatpush2.msra.mxu0 0.0
    %1934 = vmatprep.subr.mxu0 0.0
    %1935 = vmatpush2.msra.mxu0 0.0
    %1936 = vmatprep.mubr.f32.mxu0 0.0
    %1937 = vmatmul.mubr.f32.gmra.mxu0 %v1870
    %v1938 = vpop.f32.mrf.mxu0
    %v1939 = vadd.f32 0.0, %v1938
    %v1940 = vpop.f32.mrf.mxu0
    %1941 = vdwg.mxu0
    %v1943 = vsel %vm1026, %v1718, 0
    %1945 = vmatprep.subr.mxu0 0.0
    %1946 = vmatpush1.msra.mxu0 0.0
    %1947 = vmatprep.subr.mxu0 0.0
    %1948 = vmatpush1.msra.mxu0 0.0
    %1949 = vmatprep.subr.mxu0 0.0
    %1950 = vmatpush1.msra.mxu0 0.0
    %1951 = vmatprep.subr.mxu0 0.0
    %1952 = vmatpush1.msra.mxu0 0.0
    %1953 = vmatprep.subr.mxu0 0.0
    %1954 = vmatpush1.msra.mxu0 0.0
    %1955 = vmatprep.subr.mxu0 0.0
    %1956 = vmatpush1.msra.mxu0 0.0
    %1957 = vmatprep.subr.mxu0 0.0
    %1958 = vmatpush1.msra.mxu0 0.0
    %1959 = vmatprep.subr.mxu0 0.0
    %1960 = vmatpush1.msra.mxu0 0.0
    %1961 = vmatprep.subr.mxu0 0.0
    %1962 = vmatpush1.msra.mxu0 0.0
    %1963 = vmatprep.subr.mxu0 0.0
    %1964 = vmatpush1.msra.mxu0 0.0
    %1965 = vmatprep.subr.mxu0 0.0
    %1966 = vmatpush1.msra.mxu0 0.0
    %1967 = vmatprep.subr.mxu0 0.0
    %1968 = vmatpush1.msra.mxu0 0.0
    %1969 = vmatprep.subr.mxu0 0.0
    %1970 = vmatpush1.msra.mxu0 0.0
    %1971 = vmatprep.subr.mxu0 0.0
    %1972 = vmatpush1.msra.mxu0 0.0
    %1973 = vmatprep.subr.mxu0 0.0
    %1974 = vmatpush1.msra.mxu0 0.0
    %1975 = vmatprep.subr.mxu0 0.0
    %1976 = vmatpush1.msra.mxu0 %v1023
    %1977 = vmatprep.subr.mxu0 0.0
    %1978 = vmatpush2.msra.mxu0 0.0
    %1979 = vmatprep.subr.mxu0 0.0
    %1980 = vmatpush2.msra.mxu0 0.0
    %1981 = vmatprep.subr.mxu0 0.0
    %1982 = vmatpush2.msra.mxu0 0.0
    %1983 = vmatprep.subr.mxu0 0.0
    %1984 = vmatpush2.msra.mxu0 0.0
    %1985 = vmatprep.subr.mxu0 0.0
    %1986 = vmatpush2.msra.mxu0 0.0
    %1987 = vmatprep.subr.mxu0 0.0
    %1988 = vmatpush2.msra.mxu0 0.0
    %1989 = vmatprep.subr.mxu0 0.0
    %1990 = vmatpush2.msra.mxu0 0.0
    %1991 = vmatprep.subr.mxu0 0.0
    %1992 = vmatpush2.msra.mxu0 0.0
    %1993 = vmatprep.subr.mxu0 0.0
    %1994 = vmatpush2.msra.mxu0 0.0
    %1995 = vmatprep.subr.mxu0 0.0
    %1996 = vmatpush2.msra.mxu0 0.0
    %1997 = vmatprep.subr.mxu0 0.0
    %1998 = vmatpush2.msra.mxu0 0.0
    %1999 = vmatprep.subr.mxu0 0.0
    %2000 = vmatpush2.msra.mxu0 0.0
    %2001 = vmatprep.subr.mxu0 0.0
    %2002 = vmatpush2.msra.mxu0 0.0
    %2003 = vmatprep.subr.mxu0 0.0
    %2004 = vmatpush2.msra.mxu0 0.0
    %2005 = vmatprep.subr.mxu0 0.0
    %2006 = vmatpush2.msra.mxu0 0.0
    %2007 = vmatprep.subr.mxu0 0.0
    %2008 = vmatpush2.msra.mxu0 0.0
    %2009 = vmatprep.mubr.f32.mxu0 0.0
    %2010 = vmatmul.mubr.f32.gmra.mxu0 %v1943
    %v2011 = vpop.f32.mrf.mxu0
    %v2012 = vadd.f32 0.0, %v2011
    %v2013 = vpop.f32.mrf.mxu0
    %2014 = vdwg.mxu0
    %v2016 = vsel %vm1026, %v1719, 0
    %2018 = vmatprep.subr.mxu0 0.0
    %2019 = vmatpush1.msra.mxu0 0.0
    %2020 = vmatprep.subr.mxu0 0.0
    %2021 = vmatpush1.msra.mxu0 0.0
    %2022 = vmatprep.subr.mxu0 0.0
    %2023 = vmatpush1.msra.mxu0 0.0
    %2024 = vmatprep.subr.mxu0 0.0
    %2025 = vmatpush1.msra.mxu0 0.0
    %2026 = vmatprep.subr.mxu0 0.0
    %2027 = vmatpush1.msra.mxu0 0.0
    %2028 = vmatprep.subr.mxu0 0.0
    %2029 = vmatpush1.msra.mxu0 0.0
    %2030 = vmatprep.subr.mxu0 0.0
    %2031 = vmatpush1.msra.mxu0 0.0
    %2032 = vmatprep.subr.mxu0 0.0
    %2033 = vmatpush1.msra.mxu0 0.0
    %2034 = vmatprep.subr.mxu0 0.0
    %2035 = vmatpush1.msra.mxu0 0.0
    %2036 = vmatprep.subr.mxu0 0.0
    %2037 = vmatpush1.msra.mxu0 0.0
    %2038 = vmatprep.subr.mxu0 0.0
    %2039 = vmatpush1.msra.mxu0 0.0
    %2040 = vmatprep.subr.mxu0 0.0
    %2041 = vmatpush1.msra.mxu0 0.0
    %2042 = vmatprep.subr.mxu0 0.0
    %2043 = vmatpush1.msra.mxu0 0.0
    %2044 = vmatprep.subr.mxu0 0.0
    %2045 = vmatpush1.msra.mxu0 0.0
    %2046 = vmatprep.subr.mxu0 0.0
    %2047 = vmatpush1.msra.mxu0 0.0
    %2048 = vmatprep.subr.mxu0 0.0
    %2049 = vmatpush1.msra.mxu0 %v956
    %2050 = vmatprep.subr.mxu0 0.0
    %2051 = vmatpush2.msra.mxu0 0.0
    %2052 = vmatprep.subr.mxu0 0.0
    %2053 = vmatpush2.msra.mxu0 0.0
    %2054 = vmatprep.subr.mxu0 0.0
    %2055 = vmatpush2.msra.mxu0 0.0
    %2056 = vmatprep.subr.mxu0 0.0
    %2057 = vmatpush2.msra.mxu0 0.0
    %2058 = vmatprep.subr.mxu0 0.0
    %2059 = vmatpush2.msra.mxu0 0.0
    %2060 = vmatprep.subr.mxu0 0.0
    %2061 = vmatpush2.msra.mxu0 0.0
    %2062 = vmatprep.subr.mxu0 0.0
    %2063 = vmatpush2.msra.mxu0 0.0
    %2064 = vmatprep.subr.mxu0 0.0
    %2065 = vmatpush2.msra.mxu0 0.0
    %2066 = vmatprep.subr.mxu0 0.0
    %2067 = vmatpush2.msra.mxu0 0.0
    %2068 = vmatprep.subr.mxu0 0.0
    %2069 = vmatpush2.msra.mxu0 0.0
    %2070 = vmatprep.subr.mxu0 0.0
    %2071 = vmatpush2.msra.mxu0 0.0
    %2072 = vmatprep.subr.mxu0 0.0
    %2073 = vmatpush2.msra.mxu0 0.0
    %2074 = vmatprep.subr.mxu0 0.0
    %2075 = vmatpush2.msra.mxu0 0.0
    %2076 = vmatprep.subr.mxu0 0.0
    %2077 = vmatpush2.msra.mxu0 0.0
    %2078 = vmatprep.subr.mxu0 0.0
    %2079 = vmatpush2.msra.mxu0 0.0
    %2080 = vmatprep.subr.mxu0 0.0
    %2081 = vmatpush2.msra.mxu0 0.0
    %2082 = vmatprep.mubr.f32.mxu0 0.0
    %2083 = vmatmul.mubr.f32.gmra.mxu0 %v2016
    %v2084 = vpop.f32.mrf.mxu0
    %v2085 = vadd.f32 0.0, %v2084
    %v2086 = vpop.f32.mrf.mxu0
    %2087 = vdwg.mxu0
    %v2089 = vsel %vm1026, %v1720, 0
    %2091 = vmatprep.subr.mxu0 0.0
    %2092 = vmatpush1.msra.mxu0 0.0
    %2093 = vmatprep.subr.mxu0 0.0
    %2094 = vmatpush1.msra.mxu0 0.0
    %2095 = vmatprep.subr.mxu0 0.0
    %2096 = vmatpush1.msra.mxu0 0.0
    %2097 = vmatprep.subr.mxu0 0.0
    %2098 = vmatpush1.msra.mxu0 0.0
    %2099 = vmatprep.subr.mxu0 0.0
    %2100 = vmatpush1.msra.mxu0 0.0
    %2101 = vmatprep.subr.mxu0 0.0
    %2102 = vmatpush1.msra.mxu0 0.0
    %2103 = vmatprep.subr.mxu0 0.0
    %2104 = vmatpush1.msra.mxu0 0.0
    %2105 = vmatprep.subr.mxu0 0.0
    %2106 = vmatpush1.msra.mxu0 0.0
    %2107 = vmatprep.subr.mxu0 0.0
    %2108 = vmatpush1.msra.mxu0 0.0
    %2109 = vmatprep.subr.mxu0 0.0
    %2110 = vmatpush1.msra.mxu0 0.0
    %2111 = vmatprep.subr.mxu0 0.0
    %2112 = vmatpush1.msra.mxu0 0.0
    %2113 = vmatprep.subr.mxu0 0.0
    %2114 = vmatpush1.msra.mxu0 0.0
    %2115 = vmatprep.subr.mxu0 0.0
    %2116 = vmatpush1.msra.mxu0 0.0
    %2117 = vmatprep.subr.mxu0 0.0
    %2118 = vmatpush1.msra.mxu0 0.0
    %2119 = vmatprep.subr.mxu0 0.0
    %2120 = vmatpush1.msra.mxu0 0.0
    %2121 = vmatprep.subr.mxu0 0.0
    %2122 = vmatpush1.msra.mxu0 %v1024
    %2123 = vmatprep.subr.mxu0 0.0
    %2124 = vmatpush2.msra.mxu0 0.0
    %2125 = vmatprep.subr.mxu0 0.0
    %2126 = vmatpush2.msra.mxu0 0.0
    %2127 = vmatprep.subr.mxu0 0.0
    %2128 = vmatpush2.msra.mxu0 0.0
    %2129 = vmatprep.subr.mxu0 0.0
    %2130 = vmatpush2.msra.mxu0 0.0
    %2131 = vmatprep.subr.mxu0 0.0
    %2132 = vmatpush2.msra.mxu0 0.0
    %2133 = vmatprep.subr.mxu0 0.0
    %2134 = vmatpush2.msra.mxu0 0.0
    %2135 = vmatprep.subr.mxu0 0.0
    %2136 = vmatpush2.msra.mxu0 0.0
    %2137 = vmatprep.subr.mxu0 0.0
    %2138 = vmatpush2.msra.mxu0 0.0
    %2139 = vmatprep.subr.mxu0 0.0
    %2140 = vmatpush2.msra.mxu0 0.0
    %2141 = vmatprep.subr.mxu0 0.0
    %2142 = vmatpush2.msra.mxu0 0.0
    %2143 = vmatprep.subr.mxu0 0.0
    %2144 = vmatpush2.msra.mxu0 0.0
    %2145 = vmatprep.subr.mxu0 0.0
    %2146 = vmatpush2.msra.mxu0 0.0
    %2147 = vmatprep.subr.mxu0 0.0
    %2148 = vmatpush2.msra.mxu0 0.0
    %2149 = vmatprep.subr.mxu0 0.0
    %2150 = vmatpush2.msra.mxu0 0.0
    %2151 = vmatprep.subr.mxu0 0.0
    %2152 = vmatpush2.msra.mxu0 0.0
    %2153 = vmatprep.subr.mxu0 0.0
    %2154 = vmatpush2.msra.mxu0 0.0
    %2155 = vmatprep.mubr.f32.mxu0 0.0
    %2156 = vmatmul.mubr.f32.gmra.mxu0 %v2089
    %v2157 = vpop.f32.mrf.mxu0
    %v2158 = vadd.f32 0.0, %v2157
    %v2159 = vpop.f32.mrf.mxu0
    %2160 = vdwg.mxu0
    %v2162 = vsel %vm1026, %v1721, 0
    %2164 = vmatprep.subr.mxu0 0.0
    %2165 = vmatpush1.msra.mxu0 0.0
    %2166 = vmatprep.subr.mxu0 0.0
    %2167 = vmatpush1.msra.mxu0 0.0
    %2168 = vmatprep.subr.mxu0 0.0
    %2169 = vmatpush1.msra.mxu0 0.0
    %2170 = vmatprep.subr.mxu0 0.0
    %2171 = vmatpush1.msra.mxu0 0.0
    %2172 = vmatprep.subr.mxu0 0.0
    %2173 = vmatpush1.msra.mxu0 0.0
    %2174 = vmatprep.subr.mxu0 0.0
    %2175 = vmatpush1.msra.mxu0 0.0
    %2176 = vmatprep.subr.mxu0 0.0
    %2177 = vmatpush1.msra.mxu0 0.0
    %2178 = vmatprep.subr.mxu0 0.0
    %2179 = vmatpush1.msra.mxu0 0.0
    %2180 = vmatprep.subr.mxu0 0.0
    %2181 = vmatpush1.msra.mxu0 0.0
    %2182 = vmatprep.subr.mxu0 0.0
    %2183 = vmatpush1.msra.mxu0 0.0
    %2184 = vmatprep.subr.mxu0 0.0
    %2185 = vmatpush1.msra.mxu0 0.0
    %2186 = vmatprep.subr.mxu0 0.0
    %2187 = vmatpush1.msra.mxu0 0.0
    %2188 = vmatprep.subr.mxu0 0.0
    %2189 = vmatpush1.msra.mxu0 0.0
    %2190 = vmatprep.subr.mxu0 0.0
    %2191 = vmatpush1.msra.mxu0 0.0
    %2192 = vmatprep.subr.mxu0 0.0
    %2193 = vmatpush1.msra.mxu0 0.0
    %2194 = vmatprep.subr.mxu0 0.0
    %2195 = vmatpush1.msra.mxu0 %v957
    %2196 = vmatprep.subr.mxu0 0.0
    %2197 = vmatpush2.msra.mxu0 0.0
    %2198 = vmatprep.subr.mxu0 0.0
    %2199 = vmatpush2.msra.mxu0 0.0
    %2200 = vmatprep.subr.mxu0 0.0
    %2201 = vmatpush2.msra.mxu0 0.0
    %2202 = vmatprep.subr.mxu0 0.0
    %2203 = vmatpush2.msra.mxu0 0.0
    %2204 = vmatprep.subr.mxu0 0.0
    %2205 = vmatpush2.msra.mxu0 0.0
    %2206 = vmatprep.subr.mxu0 0.0
    %2207 = vmatpush2.msra.mxu0 0.0
    %2208 = vmatprep.subr.mxu0 0.0
    %2209 = vmatpush2.msra.mxu0 0.0
    %2210 = vmatprep.subr.mxu0 0.0
    %2211 = vmatpush2.msra.mxu0 0.0
    %2212 = vmatprep.subr.mxu0 0.0
    %2213 = vmatpush2.msra.mxu0 0.0
    %2214 = vmatprep.subr.mxu0 0.0
    %2215 = vmatpush2.msra.mxu0 0.0
    %2216 = vmatprep.subr.mxu0 0.0
    %2217 = vmatpush2.msra.mxu0 0.0
    %2218 = vmatprep.subr.mxu0 0.0
    %2219 = vmatpush2.msra.mxu0 0.0
    %2220 = vmatprep.subr.mxu0 0.0
    %2221 = vmatpush2.msra.mxu0 0.0
    %2222 = vmatprep.subr.mxu0 0.0
    %2223 = vmatpush2.msra.mxu0 0.0
    %2224 = vmatprep.subr.mxu0 0.0
    %2225 = vmatpush2.msra.mxu0 0.0
    %2226 = vmatprep.subr.mxu0 0.0
    %2227 = vmatpush2.msra.mxu0 0.0
    %2228 = vmatprep.mubr.f32.mxu0 0.0
    %2229 = vmatmul.mubr.f32.gmra.mxu0 %v2162
    %v2230 = vpop.f32.mrf.mxu0
    %v2231 = vadd.f32 0.0, %v2230
    %v2232 = vpop.f32.mrf.mxu0
    %2233 = vdwg.mxu0
    %v2235 = vsel %vm1026, %v1722, 0
    %2237 = vmatprep.subr.mxu0 0.0
    %2238 = vmatpush1.msra.mxu0 0.0
    %2239 = vmatprep.subr.mxu0 0.0
    %2240 = vmatpush1.msra.mxu0 0.0
    %2241 = vmatprep.subr.mxu0 0.0
    %2242 = vmatpush1.msra.mxu0 0.0
    %2243 = vmatprep.subr.mxu0 0.0
    %2244 = vmatpush1.msra.mxu0 0.0
    %2245 = vmatprep.subr.mxu0 0.0
    %2246 = vmatpush1.msra.mxu0 0.0
    %2247 = vmatprep.subr.mxu0 0.0
    %2248 = vmatpush1.msra.mxu0 0.0
    %2249 = vmatprep.subr.mxu0 0.0
    %2250 = vmatpush1.msra.mxu0 0.0
    %2251 = vmatprep.subr.mxu0 0.0
    %2252 = vmatpush1.msra.mxu0 0.0
    %2253 = vmatprep.subr.mxu0 0.0
    %2254 = vmatpush1.msra.mxu0 0.0
    %2255 = vmatprep.subr.mxu0 0.0
    %2256 = vmatpush1.msra.mxu0 0.0
    %2257 = vmatprep.subr.mxu0 0.0
    %2258 = vmatpush1.msra.mxu0 0.0
    %2259 = vmatprep.subr.mxu0 0.0
    %2260 = vmatpush1.msra.mxu0 0.0
    %2261 = vmatprep.subr.mxu0 0.0
    %2262 = vmatpush1.msra.mxu0 0.0
    %2263 = vmatprep.subr.mxu0 0.0
    %2264 = vmatpush1.msra.mxu0 0.0
    %2265 = vmatprep.subr.mxu0 0.0
    %2266 = vmatpush1.msra.mxu0 0.0
    %2267 = vmatprep.subr.mxu0 0.0
    %2268 = vmatpush1.msra.mxu0 %v1025
    %2269 = vmatprep.subr.mxu0 0.0
    %2270 = vmatpush2.msra.mxu0 0.0
    %2271 = vmatprep.subr.mxu0 0.0
    %2272 = vmatpush2.msra.mxu0 0.0
    %2273 = vmatprep.subr.mxu0 0.0
    %2274 = vmatpush2.msra.mxu0 0.0
    %2275 = vmatprep.subr.mxu0 0.0
    %2276 = vmatpush2.msra.mxu0 0.0
    %2277 = vmatprep.subr.mxu0 0.0
    %2278 = vmatpush2.msra.mxu0 0.0
    %2279 = vmatprep.subr.mxu0 0.0
    %2280 = vmatpush2.msra.mxu0 0.0
    %2281 = vmatprep.subr.mxu0 0.0
    %2282 = vmatpush2.msra.mxu0 0.0
    %2283 = vmatprep.subr.mxu0 0.0
    %2284 = vmatpush2.msra.mxu0 0.0
    %2285 = vmatprep.subr.mxu0 0.0
    %2286 = vmatpush2.msra.mxu0 0.0
    %2287 = vmatprep.subr.mxu0 0.0
    %2288 = vmatpush2.msra.mxu0 0.0
    %2289 = vmatprep.subr.mxu0 0.0
    %2290 = vmatpush2.msra.mxu0 0.0
    %2291 = vmatprep.subr.mxu0 0.0
    %2292 = vmatpush2.msra.mxu0 0.0
    %2293 = vmatprep.subr.mxu0 0.0
    %2294 = vmatpush2.msra.mxu0 0.0
    %2295 = vmatprep.subr.mxu0 0.0
    %2296 = vmatpush2.msra.mxu0 0.0
    %2297 = vmatprep.subr.mxu0 0.0
    %2298 = vmatpush2.msra.mxu0 0.0
    %2299 = vmatprep.subr.mxu0 0.0
    %2300 = vmatpush2.msra.mxu0 0.0
    %2301 = vmatprep.mubr.f32.mxu0 0.0
    %2302 = vmatmul.mubr.f32.gmra.mxu0 %v2235
    %v2303 = vpop.f32.mrf.mxu0
    %v2304 = vadd.f32 0.0, %v2303
    %v2305 = vpop.f32.mrf.mxu0
    %2306 = vdwg.mxu0
    %v2307 = vcombine.low %v1793, %v2085
    %v2308 = vcombine.high %v1793, %v2085
    %v2310 = vunpack.c.l.s4 1983009808
    %v2311 = vunpack.c.0.s8 %v2310
    %v2312 = vlaneseq
    %v2313 = vshrl.u32 %v2312, 7
    %v2314 = vsub.s32 %v2311, %v2313
    %v2315 = vrot.slane %v2307, %v2314
    %v2317 = vunpack.c.l.s4 1983009808
    %v2318 = vunpack.c.0.s8 %v2317
    %v2319 = vlaneseq
    %v2320 = vshrl.u32 %v2319, 7
    %v2321 = vsub.s32 %v2318, %v2320
    %v2322 = vrot.slane %v2308, %v2321
    %v2323 = vcombine.low %v1939, %v2231
    %v2324 = vcombine.high %v1939, %v2231
    %v2326 = vunpack.c.l.s4 1983009808
    %v2327 = vunpack.c.0.s8 %v2326
    %v2328 = vlaneseq
    %v2329 = vshrl.u32 %v2328, 7
    %v2330 = vsub.s32 %v2327, %v2329
    %v2331 = vrot.slane %v2323, %v2330
    %v2333 = vunpack.c.l.s4 1983009808
    %v2334 = vunpack.c.0.s8 %v2333
    %v2335 = vlaneseq
    %v2336 = vshrl.u32 %v2335, 7
    %v2337 = vsub.s32 %v2334, %v2336
    %v2338 = vrot.slane %v2324, %v2337
    %v2339 = vcombine.low %v2315, %v2331
    %v2340 = vcombine.high %v2315, %v2331
    %v2342 = vunpack.c.l.s4 1934713408
    %v2343 = vunpack.c.0.s8 %v2342
    %v2344 = vlaneseq
    %v2345 = vshrl.u32 %v2344, 7
    %v2346 = vsub.s32 %v2343, %v2345
    %v2347 = vrot.slane %v2339, %v2346
    %v2349 = vunpack.c.l.s4 1934713408
    %v2350 = vunpack.c.0.s8 %v2349
    %v2351 = vlaneseq
    %v2352 = vshrl.u32 %v2351, 7
    %v2353 = vsub.s32 %v2350, %v2352
    %v2354 = vrot.slane %v2340, %v2353
    %v2355 = vcombine.low %v2322, %v2338
    %v2356 = vcombine.high %v2322, %v2338
    %v2358 = vunpack.c.l.s4 1934713408
    %v2359 = vunpack.c.0.s8 %v2358
    %v2360 = vlaneseq
    %v2361 = vshrl.u32 %v2360, 7
    %v2362 = vsub.s32 %v2359, %v2361
    %v2363 = vrot.slane %v2355, %v2362
    %v2365 = vunpack.c.l.s4 1934713408
    %v2366 = vunpack.c.0.s8 %v2365
    %v2367 = vlaneseq
    %v2368 = vshrl.u32 %v2367, 7
    %v2369 = vsub.s32 %v2366, %v2368
    %v2370 = vrot.slane %v2356, %v2369
    %v2371 = vcombine.high %v2347, 0.0
    %v2372 = vcombine.high %v2354, 0.0
    %v2373 = vcombine.high %v2363, 0.0
    %v2374 = vcombine.high %v2370, 0.0
    %v2375 = vcombine.low %v1866, %v2158
    %v2376 = vcombine.high %v1866, %v2158
    %v2378 = vunpack.c.l.s4 1983009808
    %v2379 = vunpack.c.0.s8 %v2378
    %v2380 = vlaneseq
    %v2381 = vshrl.u32 %v2380, 7
    %v2382 = vsub.s32 %v2379, %v2381
    %v2383 = vrot.slane %v2375, %v2382
    %v2385 = vunpack.c.l.s4 1983009808
    %v2386 = vunpack.c.0.s8 %v2385
    %v2387 = vlaneseq
    %v2388 = vshrl.u32 %v2387, 7
    %v2389 = vsub.s32 %v2386, %v2388
    %v2390 = vrot.slane %v2376, %v2389
    %v2391 = vcombine.low %v2012, %v2304
    %v2392 = vcombine.high %v2012, %v2304
    %v2394 = vunpack.c.l.s4 1983009808
    %v2395 = vunpack.c.0.s8 %v2394
    %v2396 = vlaneseq
    %v2397 = vshrl.u32 %v2396, 7
    %v2398 = vsub.s32 %v2395, %v2397
    %v2399 = vrot.slane %v2391, %v2398
    %v2401 = vunpack.c.l.s4 1983009808
    %v2402 = vunpack.c.0.s8 %v2401
    %v2403 = vlaneseq
    %v2404 = vshrl.u32 %v2403, 7
    %v2405 = vsub.s32 %v2402, %v2404
    %v2406 = vrot.slane %v2392, %v2405
    %v2407 = vcombine.low %v2383, %v2399
    %v2408 = vcombine.high %v2383, %v2399
    %v2410 = vunpack.c.l.s4 1934713408
    %v2411 = vunpack.c.0.s8 %v2410
    %v2412 = vlaneseq
    %v2413 = vshrl.u32 %v2412, 7
    %v2414 = vsub.s32 %v2411, %v2413
    %v2415 = vrot.slane %v2407, %v2414
    %v2417 = vunpack.c.l.s4 1934713408
    %v2418 = vunpack.c.0.s8 %v2417
    %v2419 = vlaneseq
    %v2420 = vshrl.u32 %v2419, 7
    %v2421 = vsub.s32 %v2418, %v2420
    %v2422 = vrot.slane %v2408, %v2421
    %v2423 = vcombine.low %v2390, %v2406
    %v2424 = vcombine.high %v2390, %v2406
    %v2426 = vunpack.c.l.s4 1934713408
    %v2427 = vunpack.c.0.s8 %v2426
    %v2428 = vlaneseq
    %v2429 = vshrl.u32 %v2428, 7
    %v2430 = vsub.s32 %v2427, %v2429
    %v2431 = vrot.slane %v2423, %v2430
    %v2433 = vunpack.c.l.s4 1934713408
    %v2434 = vunpack.c.0.s8 %v2433
    %v2435 = vlaneseq
    %v2436 = vshrl.u32 %v2435, 7
    %v2437 = vsub.s32 %v2434, %v2436
    %v2438 = vrot.slane %v2424, %v2437
    %v2439 = vcombine.high %v2415, 0.0
    %v2440 = vcombine.high %v2422, 0.0
    %v2441 = vcombine.high %v2431, 0.0
    %v2442 = vcombine.high %v2438, 0.0
    %v2443 = vcombine.low %v2347, %v2354
    %v2445 = vunpack.c.l.s4 1983009808
    %v2446 = vunpack.c.0.s8 %v2445
    %v2447 = vlaneseq
    %v2448 = vshrl.u32 %v2447, 7
    %v2449 = vsub.s32 %v2446, %v2448
    %v2450 = vrot.slane %v2443, %v2449
    %v2451 = vcombine.low %v2371, %v2372
    %v2453 = vunpack.c.l.s4 1983009808
    %v2454 = vunpack.c.0.s8 %v2453
    %v2455 = vlaneseq
    %v2456 = vshrl.u32 %v2455, 7
    %v2457 = vsub.s32 %v2454, %v2456
    %v2458 = vrot.slane %v2451, %v2457
    %v2459 = vcombine.low %v2363, %v2370
    %v2461 = vunpack.c.l.s4 1983009808
    %v2462 = vunpack.c.0.s8 %v2461
    %v2463 = vlaneseq
    %v2464 = vshrl.u32 %v2463, 7
    %v2465 = vsub.s32 %v2462, %v2464
    %v2466 = vrot.slane %v2459, %v2465
    %v2467 = vcombine.low %v2373, %v2374
    %v2469 = vunpack.c.l.s4 1983009808
    %v2470 = vunpack.c.0.s8 %v2469
    %v2471 = vlaneseq
    %v2472 = vshrl.u32 %v2471, 7
    %v2473 = vsub.s32 %v2470, %v2472
    %v2474 = vrot.slane %v2467, %v2473
    %v2475 = vcombine.low %v2450, %v2458
    %v2476 = vcombine.high %v2450, %v2458
    %v2478 = vunpack.c.l.s4 1934713408
    %v2479 = vunpack.c.0.s8 %v2478
    %v2480 = vlaneseq
    %v2481 = vshrl.u32 %v2480, 7
    %v2482 = vsub.s32 %v2479, %v2481
    %v2483 = vrot.slane %v2475, %v2482
    %v2485 = vunpack.c.l.s4 1934713408
    %v2486 = vunpack.c.0.s8 %v2485
    %v2487 = vlaneseq
    %v2488 = vshrl.u32 %v2487, 7
    %v2489 = vsub.s32 %v2486, %v2488
    %v2490 = vrot.slane %v2476, %v2489
    %v2491 = vcombine.low %v2466, %v2474
    %v2492 = vcombine.high %v2466, %v2474
    %v2494 = vunpack.c.l.s4 1934713408
    %v2495 = vunpack.c.0.s8 %v2494
    %v2496 = vlaneseq
    %v2497 = vshrl.u32 %v2496, 7
    %v2498 = vsub.s32 %v2495, %v2497
    %v2499 = vrot.slane %v2491, %v2498
    %v2501 = vunpack.c.l.s4 1934713408
    %v2502 = vunpack.c.0.s8 %v2501
    %v2503 = vlaneseq
    %v2504 = vshrl.u32 %v2503, 7
    %v2505 = vsub.s32 %v2502, %v2504
    %v2506 = vrot.slane %v2492, %v2505
    %v2507 = vcombine.low %v2483, %v2499
    %v2508 = vcombine.high %v2483, %v2499
    %v2509 = vcombine.low %v2490, %v2506
    %v2510 = vcombine.high %v2490, %v2506
    %v2511 = vcombine.low %v2415, %v2422
    %v2513 = vunpack.c.l.s4 1983009808
    %v2514 = vunpack.c.0.s8 %v2513
    %v2515 = vlaneseq
    %v2516 = vshrl.u32 %v2515, 7
    %v2517 = vsub.s32 %v2514, %v2516
    %v2518 = vrot.slane %v2511, %v2517
    %v2519 = vcombine.low %v2439, %v2440
    %v2521 = vunpack.c.l.s4 1983009808
    %v2522 = vunpack.c.0.s8 %v2521
    %v2523 = vlaneseq
    %v2524 = vshrl.u32 %v2523, 7
    %v2525 = vsub.s32 %v2522, %v2524
    %v2526 = vrot.slane %v2519, %v2525
    %v2527 = vcombine.low %v2431, %v2438
    %v2529 = vunpack.c.l.s4 1983009808
    %v2530 = vunpack.c.0.s8 %v2529
    %v2531 = vlaneseq
    %v2532 = vshrl.u32 %v2531, 7
    %v2533 = vsub.s32 %v2530, %v2532
    %v2534 = vrot.slane %v2527, %v2533
    %v2535 = vcombine.low %v2441, %v2442
    %v2537 = vunpack.c.l.s4 1983009808
    %v2538 = vunpack.c.0.s8 %v2537
    %v2539 = vlaneseq
    %v2540 = vshrl.u32 %v2539, 7
    %v2541 = vsub.s32 %v2538, %v2540
    %v2542 = vrot.slane %v2535, %v2541
    %v2543 = vcombine.low %v2518, %v2526
    %v2544 = vcombine.high %v2518, %v2526
    %v2546 = vunpack.c.l.s4 1934713408
    %v2547 = vunpack.c.0.s8 %v2546
    %v2548 = vlaneseq
    %v2549 = vshrl.u32 %v2548, 7
    %v2550 = vsub.s32 %v2547, %v2549
    %v2551 = vrot.slane %v2543, %v2550
    %v2553 = vunpack.c.l.s4 1934713408
    %v2554 = vunpack.c.0.s8 %v2553
    %v2555 = vlaneseq
    %v2556 = vshrl.u32 %v2555, 7
    %v2557 = vsub.s32 %v2554, %v2556
    %v2558 = vrot.slane %v2544, %v2557
    %v2559 = vcombine.low %v2534, %v2542
    %v2560 = vcombine.high %v2534, %v2542
    %v2562 = vunpack.c.l.s4 1934713408
    %v2563 = vunpack.c.0.s8 %v2562
    %v2564 = vlaneseq
    %v2565 = vshrl.u32 %v2564, 7
    %v2566 = vsub.s32 %v2563, %v2565
    %v2567 = vrot.slane %v2559, %v2566
    %v2569 = vunpack.c.l.s4 1934713408
    %v2570 = vunpack.c.0.s8 %v2569
    %v2571 = vlaneseq
    %v2572 = vshrl.u32 %v2571, 7
    %v2573 = vsub.s32 %v2570, %v2572
    %v2574 = vrot.slane %v2560, %v2573
    %v2575 = vcombine.low %v2551, %v2567
    %v2576 = vcombine.high %v2551, %v2567
    %v2577 = vcombine.low %v2558, %v2574
    %v2578 = vcombine.high %v2558, %v2574
    %2581 = vrot.lane.b32.xlu0 %v2508, 8
    %v2582 = vpop.permute.xlu0 %2581
    %2583 = vrot.lane.b32.xlu0 %v2576, 8
    %v2584 = vpop.permute.xlu0 %2583
    %2589 = vrot.lane.b32.xlu0 %v2509, 16
    %v2590 = vpop.permute.xlu0 %2589
    %2591 = vrot.lane.b32.xlu0 %v2577, 16
    %v2592 = vpop.permute.xlu0 %2591
    %2597 = vrot.lane.b32.xlu0 %v2510, 24
    %v2598 = vpop.permute.xlu0 %2597
    %2599 = vrot.lane.b32.xlu0 %v2578, 24
    %v2600 = vpop.permute.xlu0 %2599
    %v2603 = vsel %vm1026, %v2507, %v2582
    %v2604 = vsel %vm1026, %v2575, %v2584
    %vm2605 = vcmask 130048
    %v2606 = vsel %vm2605, %v2603, %v2590
    %v2607 = vsel %vm2605, %v2604, %v2592
    %vm2608 = vcmask 195584
    %v2609 = vsel %vm2608, %v2606, %v2598
    %v2610 = vsel %vm2608, %v2607, %v2600
    %v2611 = vld [vmem:[%s3] sm:$0xff]
    %v2612 = vld [vmem:[%s3 + $0x8] sm:$0xff]
    %v2613 = vld [vmem:[%s3 + $0x10] sm:$0xff]
    %v2614 = vld [vmem:[%s3 + $0x18] sm:$0xff]
    %v2616 = vsel %vm60, %v2609, 0
    %v2619 = vsel %vm60, %v2610, 0
    %2621 = vmatprep.subr.mxu0 0.0
    %2622 = vmatpush1.msra.mxu0 0.0
    %2623 = vmatprep.subr.mxu0 0.0
    %2624 = vmatpush1.msra.mxu0 0.0
    %2625 = vmatprep.subr.mxu0 0.0
    %2626 = vmatpush1.msra.mxu0 0.0
    %2627 = vmatprep.subr.mxu0 0.0
    %2628 = vmatpush1.msra.mxu0 0.0
    %2629 = vmatprep.subr.mxu0 0.0
    %2630 = vmatpush1.msra.mxu0 0.0
    %2631 = vmatprep.subr.mxu0 0.0
    %2632 = vmatpush1.msra.mxu0 0.0
    %2633 = vmatprep.subr.mxu0 0.0
    %2634 = vmatpush1.msra.mxu0 0.0
    %2635 = vmatprep.subr.mxu0 0.0
    %2636 = vmatpush1.msra.mxu0 0.0
    %2637 = vmatprep.subr.mxu0 0.0
    %2638 = vmatpush1.msra.mxu0 0.0
    %2639 = vmatprep.subr.mxu0 0.0
    %2640 = vmatpush1.msra.mxu0 0.0
    %2641 = vmatprep.subr.mxu0 0.0
    %2642 = vmatpush1.msra.mxu0 0.0
    %2643 = vmatprep.subr.mxu0 0.0
    %2644 = vmatpush1.msra.mxu0 0.0
    %2645 = vmatprep.subr.mxu0 0.0
    %2646 = vmatpush1.msra.mxu0 %v2614
    %2647 = vmatprep.subr.mxu0 0.0
    %2648 = vmatpush1.msra.mxu0 %v2613
    %2649 = vmatprep.subr.mxu0 0.0
    %2650 = vmatpush1.msra.mxu0 %v2612
    %2651 = vmatprep.subr.mxu0 0.0
    %2652 = vmatpush1.msra.mxu0 %v2611
    %2653 = vmatprep.subr.mxu0 0.0
    %2654 = vmatpush2.msra.mxu0 0.0
    %2655 = vmatprep.subr.mxu0 0.0
    %2656 = vmatpush2.msra.mxu0 0.0
    %2657 = vmatprep.subr.mxu0 0.0
    %2658 = vmatpush2.msra.mxu0 0.0
    %2659 = vmatprep.subr.mxu0 0.0
    %2660 = vmatpush2.msra.mxu0 0.0
    %2661 = vmatprep.subr.mxu0 0.0
    %2662 = vmatpush2.msra.mxu0 0.0
    %2663 = vmatprep.subr.mxu0 0.0
    %2664 = vmatpush2.msra.mxu0 0.0
    %2665 = vmatprep.subr.mxu0 0.0
    %2666 = vmatpush2.msra.mxu0 0.0
    %2667 = vmatprep.subr.mxu0 0.0
    %2668 = vmatpush2.msra.mxu0 0.0
    %2669 = vmatprep.subr.mxu0 0.0
    %2670 = vmatpush2.msra.mxu0 0.0
    %2671 = vmatprep.subr.mxu0 0.0
    %2672 = vmatpush2.msra.mxu0 0.0
    %2673 = vmatprep.subr.mxu0 0.0
    %2674 = vmatpush2.msra.mxu0 0.0
    %2675 = vmatprep.subr.mxu0 0.0
    %2676 = vmatpush2.msra.mxu0 0.0
    %2677 = vmatprep.subr.mxu0 0.0
    %2678 = vmatpush2.msra.mxu0 0.0
    %2679 = vmatprep.subr.mxu0 0.0
    %2680 = vmatpush2.msra.mxu0 0.0
    %2681 = vmatprep.subr.mxu0 0.0
    %2682 = vmatpush2.msra.mxu0 0.0
    %2683 = vmatprep.subr.mxu0 0.0
    %2684 = vmatpush2.msra.mxu0 0.0
    %2685 = vmatprep.mubr.f32.mxu0 0.0
    %2686 = vmatmul.mubr.f32.gmra.mxu0 %v2616
    %v2687 = vpop.f32.mrf.mxu0
    %v2688 = vadd.f32 0.0, %v2687
    %v2689 = vpop.f32.mrf.mxu0
    %2690 = vmatprep.mubr.f32.mxu0 0.0
    %2691 = vmatmul.mubr.f32.gmra.mxu0 %v2619
    %v2692 = vpop.f32.mrf.mxu0
    %v2693 = vadd.f32 0.0, %v2692
    %v2694 = vpop.f32.mrf.mxu0
    %2695 = vdwg.mxu0
    %v2696 = vadd.f32 %v47, %v2688
    %v2697 = vadd.f32 %v48, %v2693
    %v2698 = vld [vmem:[%s4] sm:$0x1]
    %v2700 = vlaneseq
    %v2701 = vshrl.u32 %v2700, 7
    %v2702 = vsub.s32 0, %v2701
    %v2703 = vrot.slane %v2698, %v2702
    %v2705 = vadd.f32 %v2696, %v2703
    %v2706 = vadd.f32 %v2697, %v2703
    %v2707 = vld [vmem:[%s9] sm:$0x1]
    %v2708 = vld [vmem:[%s10] sm:$0x1]
    %v2709 = vsel %vm60, %v2705, 0.0
    %2710 = vadd.xlane.f32.xlu0 %v2709
    %v2711 = vpop.xlane.xlu0 %2710
    %v2712 = vsel %vm60, %v2706, 0.0
    %2713 = vadd.xlane.f32.xlu0 %v2712
    %v2714 = vpop.xlane.xlu0 %2713
    %v2715 = vrcp.pop 32.0
    %v2716 = vmul.f32 %v2711, %v2715
    %v2717 = vmul.f32 %v2714, %v2715
    %v2718 = vsub.f32 %v2705, %v2716
    %v2719 = vsub.f32 %v2706, %v2717
    %v2720 = vmul.f32 %v2718, %v2718
    %v2721 = vmul.f32 %v2719, %v2719
    %v2722 = vsel %vm60, %v2720, 0.0
    %2723 = vadd.xlane.f32.xlu0 %v2722
    %v2724 = vpop.xlane.xlu0 %2723
    %v2725 = vsel %vm60, %v2721, 0.0
    %2726 = vadd.xlane.f32.xlu0 %v2725
    %v2727 = vpop.xlane.xlu0 %2726
    %v2728 = vmul.f32 %v2724, %v2715
    %v2729 = vmul.f32 %v2727, %v2715
    %v2730 = vadd.f32 %v2728, 1e-05
    %v2731 = vadd.f32 %v2729, 1e-05
    %v2732 = vrsqrt.pop %v2730
    %v2733 = vrsqrt.pop %v2731
    %v2734 = vmul.f32 %v2718, %v2732
    %v2735 = vmul.f32 %v2719, %v2733
    %v2737 = vlaneseq
    %v2738 = vshrl.u32 %v2737, 7
    %v2739 = vsub.s32 0, %v2738
    %v2740 = vrot.slane %v2707, %v2739
    %v2742 = vmul.f32 %v2734, %v2740
    %v2743 = vmul.f32 %v2735, %v2740
    %v2745 = vlaneseq
    %v2746 = vshrl.u32 %v2745, 7
    %v2747 = vsub.s32 0, %v2746
    %v2748 = vrot.slane %v2708, %v2747
    %v2750 = vadd.f32 %v2742, %v2748
    %v2751 = vadd.f32 %v2743, %v2748
    %v2752 = vld [vmem:[%s8] sm:$0x1]
    %v2754 = vlaneseq
    %v2755 = vshrl.u32 %v2754, 7
    %v2756 = vsub.s32 0, %v2755
    %v2757 = vrot.slane %v2752, %v2756
    %v2759 = vadd.f32 %v2757, 0.0
    %v2760 = vld [vmem:[%s5] sm:$0xff]
    %v2761 = vld [vmem:[%s5 + $0x8] sm:$0xff]
    %v2762 = vld [vmem:[%s5 + $0x10] sm:$0xff]
    %v2763 = vld [vmem:[%s5 + $0x18] sm:$0xff]
    %v2764 = vld [vmem:[%s6] sm:$0x1]
    %v2766 = vlaneseq
    %v2767 = vshrl.u32 %v2766, 7
    %v2768 = vsub.s32 0, %v2767
    %v2769 = vrot.slane %v2764, %v2768
    %v2772 = vsel %vm60, %v2750, 0
    %v2775 = vsel %vm60, %v2751, 0
    %2777 = vmatprep.subr.mxu0 0.0
    %2778 = vmatpush1.msra.mxu0 0.0
    %2779 = vmatprep.subr.mxu0 0.0
    %2780 = vmatpush1.msra.mxu0 0.0
    %2781 = vmatprep.subr.mxu0 0.0
    %2782 = vmatpush1.msra.mxu0 0.0
    %2783 = vmatprep.subr.mxu0 0.0
    %2784 = vmatpush1.msra.mxu0 0.0
    %2785 = vmatprep.subr.mxu0 0.0
    %2786 = vmatpush1.msra.mxu0 0.0
    %2787 = vmatprep.subr.mxu0 0.0
    %2788 = vmatpush1.msra.mxu0 0.0
    %2789 = vmatprep.subr.mxu0 0.0
    %2790 = vmatpush1.msra.mxu0 0.0
    %2791 = vmatprep.subr.mxu0 0.0
    %2792 = vmatpush1.msra.mxu0 0.0
    %2793 = vmatprep.subr.mxu0 0.0
    %2794 = vmatpush1.msra.mxu0 0.0
    %2795 = vmatprep.subr.mxu0 0.0
    %2796 = vmatpush1.msra.mxu0 0.0
    %2797 = vmatprep.subr.mxu0 0.0
    %2798 = vmatpush1.msra.mxu0 0.0
    %2799 = vmatprep.subr.mxu0 0.0
    %2800 = vmatpush1.msra.mxu0 0.0
    %2801 = vmatprep.subr.mxu0 0.0
    %2802 = vmatpush1.msra.mxu0 %v2763
    %2803 = vmatprep.subr.mxu0 0.0
    %2804 = vmatpush1.msra.mxu0 %v2762
    %2805 = vmatprep.subr.mxu0 0.0
    %2806 = vmatpush1.msra.mxu0 %v2761
    %2807 = vmatprep.subr.mxu0 0.0
    %2808 = vmatpush1.msra.mxu0 %v2760
    %2809 = vmatprep.subr.mxu0 0.0
    %2810 = vmatpush2.msra.mxu0 0.0
    %2811 = vmatprep.subr.mxu0 0.0
    %2812 = vmatpush2.msra.mxu0 0.0
    %2813 = vmatprep.subr.mxu0 0.0
    %2814 = vmatpush2.msra.mxu0 0.0
    %2815 = vmatprep.subr.mxu0 0.0
    %2816 = vmatpush2.msra.mxu0 0.0
    %2817 = vmatprep.subr.mxu0 0.0
    %2818 = vmatpush2.msra.mxu0 0.0
    %2819 = vmatprep.subr.mxu0 0.0
    %2820 = vmatpush2.msra.mxu0 0.0
    %2821 = vmatprep.subr.mxu0 0.0
    %2822 = vmatpush2.msra.mxu0 0.0
    %2823 = vmatprep.subr.mxu0 0.0
    %2824 = vmatpush2.msra.mxu0 0.0
    %2825 = vmatprep.subr.mxu0 0.0
    %2826 = vmatpush2.msra.mxu0 0.0
    %2827 = vmatprep.subr.mxu0 0.0
    %2828 = vmatpush2.msra.mxu0 0.0
    %2829 = vmatprep.subr.mxu0 0.0
    %2830 = vmatpush2.msra.mxu0 0.0
    %2831 = vmatprep.subr.mxu0 0.0
    %2832 = vmatpush2.msra.mxu0 0.0
    %2833 = vmatprep.subr.mxu0 0.0
    %2834 = vmatpush2.msra.mxu0 0.0
    %2835 = vmatprep.subr.mxu0 0.0
    %2836 = vmatpush2.msra.mxu0 0.0
    %2837 = vmatprep.subr.mxu0 0.0
    %2838 = vmatpush2.msra.mxu0 0.0
    %2839 = vmatprep.subr.mxu0 0.0
    %2840 = vmatpush2.msra.mxu0 0.0
    %2841 = vmatprep.mubr.f32.mxu0 0.0
    %2842 = vmatmul.mubr.f32.gmra.mxu0 %v2772
    %v2843 = vpop.f32.mrf.mxu0
    %v2844 = vadd.f32 %v2769, %v2843
    %v2845 = vpop.f32.mrf.mxu0
    %2846 = vmatprep.mubr.f32.mxu0 0.0
    %2847 = vmatmul.mubr.f32.gmra.mxu0 %v2775
    %v2848 = vpop.f32.mrf.mxu0
    %v2849 = vadd.f32 %v2769, %v2848
    %v2850 = vpop.f32.mrf.mxu0
    %2851 = vdwg.mxu0
    %v2852 = vmax.f32 %v2844, 0.0
    %v2853 = vmax.f32 %v2849, 0.0
    %v2854 = vld [vmem:[%s7] sm:$0xff]
    %v2855 = vld [vmem:[%s7 + $0x8] sm:$0xff]
    %v2856 = vld [vmem:[%s7 + $0x10] sm:$0xff]
    %v2857 = vld [vmem:[%s7 + $0x18] sm:$0xff]
    %v2858 = vld [vmem:[%s7 + $0x20] sm:$0xff]
    %v2859 = vld [vmem:[%s7 + $0x28] sm:$0xff]
    %v2860 = vld [vmem:[%s7 + $0x30] sm:$0xff]
    %v2861 = vld [vmem:[%s7 + $0x38] sm:$0xff]
    %vm2862 = vcmask 523264
    %v2864 = vsel %vm2862, %v2852, 0
    %v2867 = vsel %vm2862, %v2853, 0
    %2869 = vmatprep.subr.mxu0 0.0
    %2870 = vmatpush1.msra.mxu0 0.0
    %2871 = vmatprep.subr.mxu0 0.0
    %2872 = vmatpush1.msra.mxu0 0.0
    %2873 = vmatprep.subr.mxu0 0.0
    %2874 = vmatpush1.msra.mxu0 0.0
    %2875 = vmatprep.subr.mxu0 0.0
    %2876 = vmatpush1.msra.mxu0 0.0
    %2877 = vmatprep.subr.mxu0 0.0
    %2878 = vmatpush1.msra.mxu0 0.0
    %2879 = vmatprep.subr.mxu0 0.0
    %2880 = vmatpush1.msra.mxu0 0.0
    %2881 = vmatprep.subr.mxu0 0.0
    %2882 = vmatpush1.msra.mxu0 0.0
    %2883 = vmatprep.subr.mxu0 0.0
    %2884 = vmatpush1.msra.mxu0 0.0
    %2885 = vmatprep.subr.mxu0 0.0
    %2886 = vmatpush1.msra.mxu0 %v2861
    %2887 = vmatprep.subr.mxu0 0.0
    %2888 = vmatpush1.msra.mxu0 %v2860
    %2889 = vmatprep.subr.mxu0 0.0
    %2890 = vmatpush1.msra.mxu0 %v2859
    %2891 = vmatprep.subr.mxu0 0.0
    %2892 = vmatpush1.msra.mxu0 %v2858
    %2893 = vmatprep.subr.mxu0 0.0
    %2894 = vmatpush1.msra.mxu0 %v2857
    %2895 = vmatprep.subr.mxu0 0.0
    %2896 = vmatpush1.msra.mxu0 %v2856
    %2897 = vmatprep.subr.mxu0 0.0
    %2898 = vmatpush1.msra.mxu0 %v2855
    %2899 = vmatprep.subr.mxu0 0.0
    %2900 = vmatpush1.msra.mxu0 %v2854
    %2901 = vmatprep.subr.mxu0 0.0
    %2902 = vmatpush2.msra.mxu0 0.0
    %2903 = vmatprep.subr.mxu0 0.0
    %2904 = vmatpush2.msra.mxu0 0.0
    %2905 = vmatprep.subr.mxu0 0.0
    %2906 = vmatpush2.msra.mxu0 0.0
    %2907 = vmatprep.subr.mxu0 0.0
    %2908 = vmatpush2.msra.mxu0 0.0
    %2909 = vmatprep.subr.mxu0 0.0
    %2910 = vmatpush2.msra.mxu0 0.0
    %2911 = vmatprep.subr.mxu0 0.0
    %2912 = vmatpush2.msra.mxu0 0.0
    %2913 = vmatprep.subr.mxu0 0.0
    %2914 = vmatpush2.msra.mxu0 0.0
    %2915 = vmatprep.subr.mxu0 0.0
    %2916 = vmatpush2.msra.mxu0 0.0
    %2917 = vmatprep.subr.mxu0 0.0
    %2918 = vmatpush2.msra.mxu0 0.0
    %2919 = vmatprep.subr.mxu0 0.0
    %2920 = vmatpush2.msra.mxu0 0.0
    %2921 = vmatprep.subr.mxu0 0.0
    %2922 = vmatpush2.msra.mxu0 0.0
    %2923 = vmatprep.subr.mxu0 0.0
    %2924 = vmatpush2.msra.mxu0 0.0
    %2925 = vmatprep.subr.mxu0 0.0
    %2926 = vmatpush2.msra.mxu0 0.0
    %2927 = vmatprep.subr.mxu0 0.0
    %2928 = vmatpush2.msra.mxu0 0.0
    %2929 = vmatprep.subr.mxu0 0.0
    %2930 = vmatpush2.msra.mxu0 0.0
    %2931 = vmatprep.subr.mxu0 0.0
    %2932 = vmatpush2.msra.mxu0 0.0
    %2933 = vmatprep.mubr.f32.mxu0 0.0
    %2934 = vmatmul.mubr.f32.gmra.mxu0 %v2864
    %v2935 = vpop.f32.mrf.mxu0
    %v2936 = vadd.f32 0.0, %v2935
    %v2937 = vpop.f32.mrf.mxu0
    %2938 = vmatprep.mubr.f32.mxu0 0.0
    %2939 = vmatmul.mubr.f32.gmra.mxu0 %v2867
    %v2940 = vpop.f32.mrf.mxu0
    %v2941 = vadd.f32 0.0, %v2940
    %v2942 = vpop.f32.mrf.mxu0
    %2943 = vdwg.mxu0
    %v2944 = vadd.f32 %v2759, %v2936
    %v2945 = vadd.f32 %v2759, %v2941
    %v2946 = vadd.f32 %v2750, %v2944
    %v2947 = vadd.f32 %v2751, %v2945
    %v2948 = vld [vmem:[%s11] sm:$0x1]
    %v2949 = vld [vmem:[%s12] sm:$0x1]
    %v2950 = vsel %vm60, %v2946, 0.0
    %2951 = vadd.xlane.f32.xlu0 %v2950
    %v2952 = vpop.xlane.xlu0 %2951
    %v2953 = vsel %vm60, %v2947, 0.0
    %2954 = vadd.xlane.f32.xlu0 %v2953
    %v2955 = vpop.xlane.xlu0 %2954
    %v2956 = vmul.f32 %v2952, %v2715
    %v2957 = vmul.f32 %v2955, %v2715
    %v2958 = vsub.f32 %v2946, %v2956
    %v2959 = vsub.f32 %v2947, %v2957
    %v2960 = vmul.f32 %v2958, %v2958
    %v2961 = vmul.f32 %v2959, %v2959
    %v2962 = vsel %vm60, %v2960, 0.0
    %2963 = vadd.xlane.f32.xlu0 %v2962
    %v2964 = vpop.xlane.xlu0 %2963
    %v2965 = vsel %vm60, %v2961, 0.0
    %2966 = vadd.xlane.f32.xlu0 %v2965
    %v2967 = vpop.xlane.xlu0 %2966
    %v2968 = vmul.f32 %v2964, %v2715
    %v2969 = vmul.f32 %v2967, %v2715
    %v2970 = vadd.f32 %v2968, 1e-05
    %v2971 = vadd.f32 %v2969, 1e-05
    %v2972 = vrsqrt.pop %v2970
    %v2973 = vrsqrt.pop %v2971
    %v2974 = vmul.f32 %v2958, %v2972
    %v2975 = vmul.f32 %v2959, %v2973
    %v2977 = vlaneseq
    %v2978 = vshrl.u32 %v2977, 7
    %v2979 = vsub.s32 0, %v2978
    %v2980 = vrot.slane %v2948, %v2979
    %v2982 = vmul.f32 %v2974, %v2980
    %v2983 = vmul.f32 %v2975, %v2980
    %v2985 = vlaneseq
    %v2986 = vshrl.u32 %v2985, 7
    %v2987 = vsub.s32 0, %v2986
    %v2988 = vrot.slane %v2949, %v2987
    %v2990 = vadd.f32 %v2982, %v2988
    %v2991 = vadd.f32 %v2983, %v2988
    %2992 = vst.msk [vmem:[%s13] sm:$0xff] %vm60, %v2990
    %2993 = vst.msk [vmem:[%s13 + $0x8] sm:$0xff] %vm60, %v2991
    %v2994 = vsel %vm1026, %v1715, 0.0
    %v2995 = vsel %vm1026, %v1717, 0.0
    %v2996 = vadd.f32 %v2994, %v2995
    %v2997 = vsel %vm1026, %v1719, 0.0
    %v2998 = vadd.f32 %v2996, %v2997
    %v2999 = vsel %vm1026, %v1721, 0.0
    %v3000 = vadd.f32 %v2998, %v2999
    %v3001 = vsel %vm1026, %v1716, 0.0
    %v3002 = vsel %vm1026, %v1718, 0.0
    %v3003 = vadd.f32 %v3001, %v3002
    %v3004 = vsel %vm1026, %v1720, 0.0
    %v3005 = vadd.f32 %v3003, %v3004
    %v3006 = vsel %vm1026, %v1722, 0.0
    %v3007 = vadd.f32 %v3005, %v3006
    %v3008 = vrcp.pop 4.0
    %v3009 = vmul.f32 %v3000, %v3008
    %v3010 = vmul.f32 %v3007, %v3008
    %3011 = vst.msk [vmem:[#allocation2] sm:$0xff] %vm1026, %v3009
    %3012 = vst.msk [vmem:[#allocation2 + $0x8] sm:$0xff] %vm1026, %v3010
    // Predicated region
    $region54: #{custom_encoder_layer.1} parent=1 // pred_check
      _
    $region55: #{custom_encoder_layer.1} parent=1 // pred_check_branch
      %3014 = sbr.rel (0) target = $region57
    $region56: #{custom_encoder_layer.1} parent=1 // pred_region
      _
    $region57: #{custom_encoder_layer.1} parent=1 // pred_fallthru
      _
    // Predicated region
    $region58: #{custom_encoder_layer.1} parent=1 // pred_check
      _
    $region59: #{custom_encoder_layer.1} parent=1 // pred_check_branch
      %3016 = sbr.rel (0) target = $region61
    $region60: #{custom_encoder_layer.1} parent=1 // pred_region
      %s3018 = ssub.s32 256, 256
      %3019 = vsyncadd [#allocation3], %s3018
      %s3020 = sshll.u32 [#allocation2], 4
      %s3021 = int_to_ptr.vmem [resolvable:$true] %s3020
      %3026 = dma.vmem_to_hbm [thread:$0]  %s3021, 256, %s14, [#allocation3], 128, 128, 8
    $region61: #{custom_encoder_layer.1} parent=1 // pred_fallthru
      _
    // Predicated region
    $region62: #{custom_encoder_layer.1} parent=1 // pred_check
      _
    $region63: #{custom_encoder_layer.1} parent=1 // pred_check_branch
      %3028 = sbr.rel (0) target = $region65
    $region64: #{custom_encoder_layer.1} parent=1 // pred_region
      _
    $region65: #{custom_encoder_layer.1} parent=1 // pred_fallthru
      _
    // Predicated region
    $region66: #{custom_encoder_layer.1} parent=1 // pred_check
      _
    $region67: #{custom_encoder_layer.1} parent=1 // pred_check_branch
      %3030 = sbr.rel (0) target = $region69
    $region68: #{custom_encoder_layer.1} parent=1 // pred_region
      %3031 = dma.done [#allocation3], 256
    $region69: #{custom_encoder_layer.1} parent=1 // pred_fallthru
      _
    %3032 = vsyncpa [#allocation3], 1

// kernel: custom_encoder_layer.1
$region0: #{custom_encoder_layer.1}
  #allocation0 [shape = 'u32[]', space=smem, size = 0x4, offset = 0x4, fixed_abs, tag = 'smem constant byte address 0x4 - core index']
  #allocation1 [shape = 'u32[144,128]{1,0:T(1,128)}', space=vmem, size = 0x12000, scoped, tag = 'internal scratch']
  %s0 = inlined_call_operand.vmem [shape: f32[2,8,32], index: 0, kind: input, shape index: {}]
  %s1 = inlined_call_operand.vmem [shape: f32[32,96], index: 1, kind: input, shape index: {}]
  %s2 = inlined_call_operand.vmem [shape: f32[1,96], index: 2, kind: input, shape index: {}]
  %s3 = inlined_call_operand.vmem [shape: f32[32,32], index: 3, kind: input, shape index: {}]
  %s4 = inlined_call_operand.vmem [shape: f32[1,32], index: 4, kind: input, shape index: {}]
  %s5 = inlined_call_operand.vmem [shape: f32[32,64], index: 5, kind: input, shape index: {}]
  %s6 = inlined_call_operand.vmem [shape: f32[1,64], index: 6, kind: input, shape index: {}]
  %s7 = inlined_call_operand.vmem [shape: f32[64,32], index: 7, kind: input, shape index: {}]
  %s8 = inlined_call_operand.vmem [shape: f32[1,32], index: 8, kind: input, shape index: {}]
  %s9 = inlined_call_operand.vmem [shape: f32[1,32], index: 9, kind: input, shape index: {}]
  %s10 = inlined_call_operand.vmem [shape: f32[1,32], index: 10, kind: input, shape index: {}]
  %s11 = inlined_call_operand.vmem [shape: f32[1,32], index: 11, kind: input, shape index: {}]
  %s12 = inlined_call_operand.vmem [shape: f32[1,32], index: 12, kind: input, shape index: {}]
  %s13 = inlined_call_operand.vmem [shape: f32[2,8,32], index: 13, kind: output, shape index: {0}]
  %s14 = inlined_call_operand.hbm [shape: f32[2,8,8], index: 14, kind: output, shape index: {1}]
  %15 = xla_tuple %s13, %s14
  %s16 = sld [smem:[#allocation0]]
  $region70: #{custom_encoder_layer.1} parent=0
    _
  %s18 = ssub.s32 1, %s16
  %s19 = scalar_select 0, %s18, %s16
  $region1: #{custom_encoder_layer.1} parent=0
    #allocation2 [shape = 'u8[8192]{0}', space=vmem, size = 0x2000, scoped, tag = 'output window, operand 1, single buffered']
    #allocation3 [shape = 's32[1]{0}', space=sflag, size = 0x4, scoped, tag = 'scoped memory for custom_encoder_layer.1']
    %20 = vsyncpa [#allocation3], 0
    // Predicated region
    $region2: #{custom_encoder_layer.1} parent=1 // pred_check
      _
    $region3: #{custom_encoder_layer.1} parent=1 // pred_check_branch
      %22 = sbr.rel (0) target = $region5
    $region4: #{custom_encoder_layer.1} parent=1 // pred_region
      _
    $region5: #{custom_encoder_layer.1} parent=1 // pred_fallthru
      _
    // Predicated region
    $region6: #{custom_encoder_layer.1} parent=1 // pred_check
      _
    $region7: #{custom_encoder_layer.1} parent=1 // pred_check_branch
      %24 = sbr.rel (0) target = $region9
    $region8: #{custom_encoder_layer.1} parent=1 // pred_region
      _
    $region9: #{custom_encoder_layer.1} parent=1 // pred_fallthru
      _
    // Predicated region
    $region10: #{custom_encoder_layer.1} parent=1 // pred_check
      _
    $region11: #{custom_encoder_layer.1} parent=1 // pred_check_branch
      %26 = sbr.rel (0) target = $region13
    $region12: #{custom_encoder_layer.1} parent=1 // pred_region
      _
    $region13: #{custom_encoder_layer.1} parent=1 // pred_fallthru
      _
    // Predicated region
    $region14: #{custom_encoder_layer.1} parent=1 // pred_check
      _
    $region15: #{custom_encoder_layer.1} parent=1 // pred_check_branch
      %28 = sbr.rel (0) target = $region17
    $region16: #{custom_encoder_layer.1} parent=1 // pred_region
      _
    $region17: #{custom_encoder_layer.1} parent=1 // pred_fallthru
      _
    // Predicated region
    $region18: #{custom_encoder_layer.1} parent=1 // pred_check
      _
    $region19: #{custom_encoder_layer.1} parent=1 // pred_check_branch
      %30 = sbr.rel (0) target = $region21
    $region20: #{custom_encoder_layer.1} parent=1 // pred_region
      _
    $region21: #{custom_encoder_layer.1} parent=1 // pred_fallthru
      _
    // Predicated region
    $region22: #{custom_encoder_layer.1} parent=1 // pred_check
      _
    $region23: #{custom_encoder_layer.1} parent=1 // pred_check_branch
      %32 = sbr.rel (0) target = $region25
    $region24: #{custom_encoder_layer.1} parent=1 // pred_region
      _
    $region25: #{custom_encoder_layer.1} parent=1 // pred_fallthru
      _
    // Predicated region
    $region26: #{custom_encoder_layer.1} parent=1 // pred_check
      _
    $region27: #{custom_encoder_layer.1} parent=1 // pred_check_branch
      %34 = sbr.rel (0) target = $region29
    $region28: #{custom_encoder_layer.1} parent=1 // pred_region
      _
    $region29: #{custom_encoder_layer.1} parent=1 // pred_fallthru
      _
    // Predicated region
    $region30: #{custom_encoder_layer.1} parent=1 // pred_check
      _
    $region31: #{custom_encoder_layer.1} parent=1 // pred_check_branch
      %36 = sbr.rel (0) target = $region33
    $region32: #{custom_encoder_layer.1} parent=1 // pred_region
      _
    $region33: #{custom_encoder_layer.1} parent=1 // pred_fallthru
      _
    // Predicated region
    $region34: #{custom_encoder_layer.1} parent=1 // pred_check
      _
    $region35: #{custom_encoder_layer.1} parent=1 // pred_check_branch
      %38 = sbr.rel (0) target = $region37
    $region36: #{custom_encoder_layer.1} parent=1 // pred_region
      _
    $region37: #{custom_encoder_layer.1} parent=1 // pred_fallthru
      _
    // Predicated region
    $region38: #{custom_encoder_layer.1} parent=1 // pred_check
      _
    $region39: #{custom_encoder_layer.1} parent=1 // pred_check_branch
      %40 = sbr.rel (0) target = $region41
    $region40: #{custom_encoder_layer.1} parent=1 // pred_region
      _
    $region41: #{custom_encoder_layer.1} parent=1 // pred_fallthru
      _
    // Predicated region
    $region42: #{custom_encoder_layer.1} parent=1 // pred_check
      _
    $region43: #{custom_encoder_layer.1} parent=1 // pred_check_branch
      %42 = sbr.rel (0) target = $region45
    $region44: #{custom_encoder_layer.1} parent=1 // pred_region
      _
    $region45: #{custom_encoder_layer.1} parent=1 // pred_fallthru
      _
    // Predicated region
    $region46: #{custom_encoder_layer.1} parent=1 // pred_check
      _
    $region47: #{custom_encoder_layer.1} parent=1 // pred_check_branch
      %44 = sbr.rel (0) target = $region49
    $region48: #{custom_encoder_layer.1} parent=1 // pred_region
      _
    $region49: #{custom_encoder_layer.1} parent=1 // pred_fallthru
      _
    // Predicated region
    $region50: #{custom_encoder_layer.1} parent=1 // pred_check
      _
    $region51: #{custom_encoder_layer.1} parent=1 // pred_check_branch
      %46 = sbr.rel (0) target = $region53
    $region52: #{custom_encoder_layer.1} parent=1 // pred_region
      _
    $region53: #{custom_encoder_layer.1} parent=1 // pred_fallthru
      _
    %v47 = vld [vmem:[%s0] sm:$0xff]
    %v48 = vld [vmem:[%s0 + $0x8] sm:$0xff]
    %v49 = vld [vmem:[%s1] sm:$0xff]
    %v50 = vld [vmem:[%s1 + $0x8] sm:$0xff]
    %v51 = vld [vmem:[%s1 + $0x10] sm:$0xff]
    %v52 = vld [vmem:[%s1 + $0x18] sm:$0xff]
    %v53 = vld [vmem:[%s2] sm:$0x1]
    %v55 = vlaneseq
    %v56 = vshrl.u32 %v55, 7
    %v57 = vsub.s32 0, %v56
    %v58 = vrot.slane %v53, %v57
    %vm60 = vcmask 261120
    %v62 = vsel %vm60, %v47, 0
    %v65 = vsel %vm60, %v48, 0
    %67 = vmatprep.subr.mxu0 0.0
    %68 = vmatpush1.msra.mxu0 0.0
    %69 = vmatprep.subr.mxu0 0.0
    %70 = vmatpush1.msra.mxu0 0.0
    %71 = vmatprep.subr.mxu0 0.0
    %72 = vmatpush1.msra.mxu0 0.0
    %73 = vmatprep.subr.mxu0 0.0
    %74 = vmatpush1.msra.mxu0 0.0
    %75 = vmatprep.subr.mxu0 0.0
    %76 = vmatpush1.msra.mxu0 0.0
    %77 = vmatprep.subr.mxu0 0.0
    %78 = vmatpush1.msra.mxu0 0.0
    %79 = vmatprep.subr.mxu0 0.0
    %80 = vmatpush1.msra.mxu0 0.0
    %81 = vmatprep.subr.mxu0 0.0
    %82 = vmatpush1.msra.mxu0 0.0
    %83 = vmatprep.subr.mxu0 0.0
    %84 = vmatpush1.msra.mxu0 0.0
    %85 = vmatprep.subr.mxu0 0.0
    %86 = vmatpush1.msra.mxu0 0.0
    %87 = vmatprep.subr.mxu0 0.0
    %88 = vmatpush1.msra.mxu0 0.0
    %89 = vmatprep.subr.mxu0 0.0
    %90 = vmatpush1.msra.mxu0 0.0
    %91 = vmatprep.subr.mxu0 0.0
    %92 = vmatpush1.msra.mxu0 %v52
    %93 = vmatprep.subr.mxu0 0.0
    %94 = vmatpush1.msra.mxu0 %v51
    %95 = vmatprep.subr.mxu0 0.0
    %96 = vmatpush1.msra.mxu0 %v50
    %97 = vmatprep.subr.mxu0 0.0
    %98 = vmatpush1.msra.mxu0 %v49
    %99 = vmatprep.subr.mxu0 0.0
    %100 = vmatpush2.msra.mxu0 0.0
    %101 = vmatprep.subr.mxu0 0.0
    %102 = vmatpush2.msra.mxu0 0.0
    %103 = vmatprep.subr.mxu0 0.0
    %104 = vmatpush2.msra.mxu0 0.0
    %105 = vmatprep.subr.mxu0 0.0
    %106 = vmatpush2.msra.mxu0 0.0
    %107 = vmatprep.subr.mxu0 0.0
    %108 = vmatpush2.msra.mxu0 0.0
    %109 = vmatprep.subr.mxu0 0.0
    %110 = vmatpush2.msra.mxu0 0.0
    %111 = vmatprep.subr.mxu0 0.0
    %112 = vmatpush2.msra.mxu0 0.0
    %113 = vmatprep.subr.mxu0 0.0
    %114 = vmatpush2.msra.mxu0 0.0
    %115 = vmatprep.subr.mxu0 0.0
    %116 = vmatpush2.msra.mxu0 0.0
    %117 = vmatprep.subr.mxu0 0.0
    %118 = vmatpush2.msra.mxu0 0.0
    %119 = vmatprep.subr.mxu0 0.0
    %120 = vmatpush2.msra.mxu0 0.0
    %121 = vmatprep.subr.mxu0 0.0
    %122 = vmatpush2.msra.mxu0 0.0
    %123 = vmatprep.subr.mxu0 0.0
    %124 = vmatpush2.msra.mxu0 0.0
    %125 = vmatprep.subr.mxu0 0.0
    %126 = vmatpush2.msra.mxu0 0.0
    %127 = vmatprep.subr.mxu0 0.0
    %128 = vmatpush2.msra.mxu0 0.0
    %129 = vmatprep.subr.mxu0 0.0
    %130 = vmatpush2.msra.mxu0 0.0
    %131 = vmatprep.mubr.f32.mxu0 0.0
    %132 = vmatmul.mubr.f32.gmra.mxu0 %v62
    %v133 = vpop.f32.mrf.mxu0
    %v134 = vadd.f32 %v58, %v133
    %v135 = vpop.f32.mrf.mxu0
    %136 = vmatprep.mubr.f32.mxu0 0.0
    %137 = vmatmul.mubr.f32.gmra.mxu0 %v65
    %v138 = vpop.f32.mrf.mxu0
    %v139 = vadd.f32 %v58, %v138
    %v140 = vpop.f32.mrf.mxu0
    %141 = vdwg.mxu0
    %144 = vrot.lane.b32.xlu0 %v134, 120
    %v145 = vpop.permute.xlu0 %144
    %146 = vrot.lane.b32.xlu0 %v139, 120
    %v147 = vpop.permute.xlu0 %146
    %150 = vrot.lane.b32.xlu0 %v134, 112
    %v151 = vpop.permute.xlu0 %150
    %152 = vrot.lane.b32.xlu0 %v139, 112
    %v153 = vpop.permute.xlu0 %152
    %156 = vrot.lane.b32.xlu0 %v134, 104
    %v157 = vpop.permute.xlu0 %156
    %158 = vrot.lane.b32.xlu0 %v139, 104
    %v159 = vpop.permute.xlu0 %158
    %v162 = vcombine.low %v134, %v151
    %v163 = vcombine.high %v134, %v151
    %v165 = vunpack.c.l.s4 1983009808
    %v166 = vunpack.c.0.s8 %v165
    %v167 = vlaneseq
    %v168 = vshrl.u32 %v167, 7
    %v169 = vsub.s32 %v166, %v168
    %v170 = vrot.slane %v162, %v169
    %v172 = vunpack.c.l.s4 1983009808
    %v173 = vunpack.c.0.s8 %v172
    %v174 = vlaneseq
    %v175 = vshrl.u32 %v174, 7
    %v176 = vsub.s32 %v173, %v175
    %v177 = vrot.slane %v163, %v176
    %v178 = vcombine.low %v145, %v157
    %v179 = vcombine.high %v145, %v157
    %v181 = vunpack.c.l.s4 1983009808
    %v182 = vunpack.c.0.s8 %v181
    %v183 = vlaneseq
    %v184 = vshrl.u32 %v183, 7
    %v185 = vsub.s32 %v182, %v184
    %v186 = vrot.slane %v178, %v185
    %v188 = vunpack.c.l.s4 1983009808
    %v189 = vunpack.c.0.s8 %v188
    %v190 = vlaneseq
    %v191 = vshrl.u32 %v190, 7
    %v192 = vsub.s32 %v189, %v191
    %v193 = vrot.slane %v179, %v192
    %v194 = vcombine.low %v170, %v186
    %v195 = vcombine.high %v170, %v186
    %v197 = vunpack.c.l.s4 1934713408
    %v198 = vunpack.c.0.s8 %v197
    %v199 = vlaneseq
    %v200 = vshrl.u32 %v199, 7
    %v201 = vsub.s32 %v198, %v200
    %v202 = vrot.slane %v194, %v201
    %v204 = vunpack.c.l.s4 1934713408
    %v205 = vunpack.c.0.s8 %v204
    %v206 = vlaneseq
    %v207 = vshrl.u32 %v206, 7
    %v208 = vsub.s32 %v205, %v207
    %v209 = vrot.slane %v195, %v208
    %v210 = vcombine.low %v177, %v193
    %v211 = vcombine.high %v177, %v193
    %v213 = vunpack.c.l.s4 1934713408
    %v214 = vunpack.c.0.s8 %v213
    %v215 = vlaneseq
    %v216 = vshrl.u32 %v215, 7
    %v217 = vsub.s32 %v214, %v216
    %v218 = vrot.slane %v210, %v217
    %v220 = vunpack.c.l.s4 1934713408
    %v221 = vunpack.c.0.s8 %v220
    %v222 = vlaneseq
    %v223 = vshrl.u32 %v222, 7
    %v224 = vsub.s32 %v221, %v223
    %v225 = vrot.slane %v211, %v224
    %v226 = vcombine.high %v202, 0.0
    %v227 = vcombine.high %v209, 0.0
    %v228 = vcombine.high %v218, 0.0
    %v229 = vcombine.high %v225, 0.0
    %v230 = vcombine.low %v139, %v153
    %v231 = vcombine.high %v139, %v153
    %v233 = vunpack.c.l.s4 1983009808
    %v234 = vunpack.c.0.s8 %v233
    %v235 = vlaneseq
    %v236 = vshrl.u32 %v235, 7
    %v237 = vsub.s32 %v234, %v236
    %v238 = vrot.slane %v230, %v237
    %v240 = vunpack.c.l.s4 1983009808
    %v241 = vunpack.c.0.s8 %v240
    %v242 = vlaneseq
    %v243 = vshrl.u32 %v242, 7
    %v244 = vsub.s32 %v241, %v243
    %v245 = vrot.slane %v231, %v244
    %v246 = vcombine.low %v147, %v159
    %v247 = vcombine.high %v147, %v159
    %v249 = vunpack.c.l.s4 1983009808
    %v250 = vunpack.c.0.s8 %v249
    %v251 = vlaneseq
    %v252 = vshrl.u32 %v251, 7
    %v253 = vsub.s32 %v250, %v252
    %v254 = vrot.slane %v246, %v253
    %v256 = vunpack.c.l.s4 1983009808
    %v257 = vunpack.c.0.s8 %v256
    %v258 = vlaneseq
    %v259 = vshrl.u32 %v258, 7
    %v260 = vsub.s32 %v257, %v259
    %v261 = vrot.slane %v247, %v260
    %v262 = vcombine.low %v238, %v254
    %v263 = vcombine.high %v238, %v254
    %v265 = vunpack.c.l.s4 1934713408
    %v266 = vunpack.c.0.s8 %v265
    %v267 = vlaneseq
    %v268 = vshrl.u32 %v267, 7
    %v269 = vsub.s32 %v266, %v268
    %v270 = vrot.slane %v262, %v269
    %v272 = vunpack.c.l.s4 1934713408
    %v273 = vunpack.c.0.s8 %v272
    %v274 = vlaneseq
    %v275 = vshrl.u32 %v274, 7
    %v276 = vsub.s32 %v273, %v275
    %v277 = vrot.slane %v263, %v276
    %v278 = vcombine.low %v245, %v261
    %v279 = vcombine.high %v245, %v261
    %v281 = vunpack.c.l.s4 1934713408
    %v282 = vunpack.c.0.s8 %v281
    %v283 = vlaneseq
    %v284 = vshrl.u32 %v283, 7
    %v285 = vsub.s32 %v282, %v284
    %v286 = vrot.slane %v278, %v285
    %v288 = vunpack.c.l.s4 1934713408
    %v289 = vunpack.c.0.s8 %v288
    %v290 = vlaneseq
    %v291 = vshrl.u32 %v290, 7
    %v292 = vsub.s32 %v289, %v291
    %v293 = vrot.slane %v279, %v292
    %v294 = vcombine.high %v270, 0.0
    %v295 = vcombine.high %v277, 0.0
    %v296 = vcombine.high %v286, 0.0
    %v297 = vcombine.high %v293, 0.0
    %v298 = vcombine.low %v202, %v209
    %v300 = vunpack.c.l.s4 1983009808
    %v301 = vunpack.c.0.s8 %v300
    %v302 = vlaneseq
    %v303 = vshrl.u32 %v302, 7
    %v304 = vsub.s32 %v301, %v303
    %v305 = vrot.slane %v298, %v304
    %v306 = vcombine.low %v226, %v227
    %v308 = vunpack.c.l.s4 1983009808
    %v309 = vunpack.c.0.s8 %v308
    %v310 = vlaneseq
    %v311 = vshrl.u32 %v310, 7
    %v312 = vsub.s32 %v309, %v311
    %v313 = vrot.slane %v306, %v312
    %v314 = vcombine.low %v218, %v225
    %v316 = vunpack.c.l.s4 1983009808
    %v317 = vunpack.c.0.s8 %v316
    %v318 = vlaneseq
    %v319 = vshrl.u32 %v318, 7
    %v320 = vsub.s32 %v317, %v319
    %v321 = vrot.slane %v314, %v320
    %v322 = vcombine.low %v228, %v229
    %v324 = vunpack.c.l.s4 1983009808
    %v325 = vunpack.c.0.s8 %v324
    %v326 = vlaneseq
    %v327 = vshrl.u32 %v326, 7
    %v328 = vsub.s32 %v325, %v327
    %v329 = vrot.slane %v322, %v328
    %v330 = vcombine.low %v305, %v313
    %v331 = vcombine.high %v305, %v313
    %v333 = vunpack.c.l.s4 1934713408
    %v334 = vunpack.c.0.s8 %v333
    %v335 = vlaneseq
    %v336 = vshrl.u32 %v335, 7
    %v337 = vsub.s32 %v334, %v336
    %v338 = vrot.slane %v330, %v337
    %v340 = vunpack.c.l.s4 1934713408
    %v341 = vunpack.c.0.s8 %v340
    %v342 = vlaneseq
    %v343 = vshrl.u32 %v342, 7
    %v344 = vsub.s32 %v341, %v343
    %v345 = vrot.slane %v331, %v344
    %v346 = vcombine.low %v321, %v329
    %v347 = vcombine.high %v321, %v329
    %v349 = vunpack.c.l.s4 1934713408
    %v350 = vunpack.c.0.s8 %v349
    %v351 = vlaneseq
    %v352 = vshrl.u32 %v351, 7
    %v353 = vsub.s32 %v350, %v352
    %v354 = vrot.slane %v346, %v353
    %v356 = vunpack.c.l.s4 1934713408
    %v357 = vunpack.c.0.s8 %v356
    %v358 = vlaneseq
    %v359 = vshrl.u32 %v358, 7
    %v360 = vsub.s32 %v357, %v359
    %v361 = vrot.slane %v347, %v360
    %v362 = vcombine.low %v338, %v354
    %v363 = vcombine.high %v338, %v354
    %v364 = vcombine.low %v345, %v361
    %v365 = vcombine.high %v345, %v361
    %v366 = vcombine.low %v270, %v277
    %v368 = vunpack.c.l.s4 1983009808
    %v369 = vunpack.c.0.s8 %v368
    %v370 = vlaneseq
    %v371 = vshrl.u32 %v370, 7
    %v372 = vsub.s32 %v369, %v371
    %v373 = vrot.slane %v366, %v372
    %v374 = vcombine.low %v294, %v295
    %v376 = vunpack.c.l.s4 1983009808
    %v377 = vunpack.c.0.s8 %v376
    %v378 = vlaneseq
    %v379 = vshrl.u32 %v378, 7
    %v380 = vsub.s32 %v377, %v379
    %v381 = vrot.slane %v374, %v380
    %v382 = vcombine.low %v286, %v293
    %v384 = vunpack.c.l.s4 1983009808
    %v385 = vunpack.c.0.s8 %v384
    %v386 = vlaneseq
    %v387 = vshrl.u32 %v386, 7
    %v388 = vsub.s32 %v385, %v387
    %v389 = vrot.slane %v382, %v388
    %v390 = vcombine.low %v296, %v297
    %v392 = vunpack.c.l.s4 1983009808
    %v393 = vunpack.c.0.s8 %v392
    %v394 = vlaneseq
    %v395 = vshrl.u32 %v394, 7
    %v396 = vsub.s32 %v393, %v395
    %v397 = vrot.slane %v390, %v396
    %v398 = vcombine.low %v373, %v381
    %v399 = vcombine.high %v373, %v381
    %v401 = vunpack.c.l.s4 1934713408
    %v402 = vunpack.c.0.s8 %v401
    %v403 = vlaneseq
    %v404 = vshrl.u32 %v403, 7
    %v405 = vsub.s32 %v402, %v404
    %v406 = vrot.slane %v398, %v405
    %v408 = vunpack.c.l.s4 1934713408
    %v409 = vunpack.c.0.s8 %v408
    %v410 = vlaneseq
    %v411 = vshrl.u32 %v410, 7
    %v412 = vsub.s32 %v409, %v411
    %v413 = vrot.slane %v399, %v412
    %v414 = vcombine.low %v389, %v397
    %v415 = vcombine.high %v389, %v397
    %v417 = vunpack.c.l.s4 1934713408
    %v418 = vunpack.c.0.s8 %v417
    %v419 = vlaneseq
    %v420 = vshrl.u32 %v419, 7
    %v421 = vsub.s32 %v418, %v420
    %v422 = vrot.slane %v414, %v421
    %v424 = vunpack.c.l.s4 1934713408
    %v425 = vunpack.c.0.s8 %v424
    %v426 = vlaneseq
    %v427 = vshrl.u32 %v426, 7
    %v428 = vsub.s32 %v425, %v427
    %v429 = vrot.slane %v415, %v428
    %v430 = vcombine.low %v406, %v422
    %v431 = vcombine.high %v406, %v422
    %v432 = vcombine.low %v413, %v429
    %v433 = vcombine.high %v413, %v429
    %434 = vrot.lane.b32.xlu0 %v134, 96
    %v435 = vpop.permute.xlu0 %434
    %436 = vrot.lane.b32.xlu0 %v139, 96
    %v437 = vpop.permute.xlu0 %436
    %438 = vrot.lane.b32.xlu0 %v145, 96
    %v439 = vpop.permute.xlu0 %438
    %440 = vrot.lane.b32.xlu0 %v147, 96
    %v441 = vpop.permute.xlu0 %440
    %442 = vrot.lane.b32.xlu0 %v151, 96
    %v443 = vpop.permute.xlu0 %442
    %444 = vrot.lane.b32.xlu0 %v153, 96
    %v445 = vpop.permute.xlu0 %444
    %446 = vrot.lane.b32.xlu0 %v157, 96
    %v447 = vpop.permute.xlu0 %446
    %448 = vrot.lane.b32.xlu0 %v159, 96
    %v449 = vpop.permute.xlu0 %448
    %v458 = vcombine.low %v435, %v443
    %v459 = vcombine.high %v435, %v443
    %v461 = vunpack.c.l.s4 1983009808
    %v462 = vunpack.c.0.s8 %v461
    %v463 = vlaneseq
    %v464 = vshrl.u32 %v463, 7
    %v465 = vsub.s32 %v462, %v464
    %v466 = vrot.slane %v458, %v465
    %v468 = vunpack.c.l.s4 1983009808
    %v469 = vunpack.c.0.s8 %v468
    %v470 = vlaneseq
    %v471 = vshrl.u32 %v470, 7
    %v472 = vsub.s32 %v469, %v471
    %v473 = vrot.slane %v459, %v472
    %v474 = vcombine.low %v439, %v447
    %v475 = vcombine.high %v439, %v447
    %v477 = vunpack.c.l.s4 1983009808
    %v478 = vunpack.c.0.s8 %v477
    %v479 = vlaneseq
    %v480 = vshrl.u32 %v479, 7
    %v481 = vsub.s32 %v478, %v480
    %v482 = vrot.slane %v474, %v481
    %v484 = vunpack.c.l.s4 1983009808
    %v485 = vunpack.c.0.s8 %v484
    %v486 = vlaneseq
    %v487 = vshrl.u32 %v486, 7
    %v488 = vsub.s32 %v485, %v487
    %v489 = vrot.slane %v475, %v488
    %v490 = vcombine.low %v466, %v482
    %v491 = vcombine.high %v466, %v482
    %v493 = vunpack.c.l.s4 1934713408
    %v494 = vunpack.c.0.s8 %v493
    %v495 = vlaneseq
    %v496 = vshrl.u32 %v495, 7
    %v497 = vsub.s32 %v494, %v496
    %v498 = vrot.slane %v490, %v497
    %v500 = vunpack.c.l.s4 1934713408
    %v501 = vunpack.c.0.s8 %v500
    %v502 = vlaneseq
    %v503 = vshrl.u32 %v502, 7
    %v504 = vsub.s32 %v501, %v503
    %v505 = vrot.slane %v491, %v504
    %v506 = vcombine.low %v473, %v489
    %v507 = vcombine.high %v473, %v489
    %v509 = vunpack.c.l.s4 1934713408
    %v510 = vunpack.c.0.s8 %v509
    %v511 = vlaneseq
    %v512 = vshrl.u32 %v511, 7
    %v513 = vsub.s32 %v510, %v512
    %v514 = vrot.slane %v506, %v513
    %v516 = vunpack.c.l.s4 1934713408
    %v517 = vunpack.c.0.s8 %v516
    %v518 = vlaneseq
    %v519 = vshrl.u32 %v518, 7
    %v520 = vsub.s32 %v517, %v519
    %v521 = vrot.slane %v507, %v520
    %v522 = vcombine.high %v498, 0.0
    %v523 = vcombine.high %v505, 0.0
    %v524 = vcombine.high %v514, 0.0
    %v525 = vcombine.high %v521, 0.0
    %v526 = vcombine.low %v437, %v445
    %v527 = vcombine.high %v437, %v445
    %v529 = vunpack.c.l.s4 1983009808
    %v530 = vunpack.c.0.s8 %v529
    %v531 = vlaneseq
    %v532 = vshrl.u32 %v531, 7
    %v533 = vsub.s32 %v530, %v532
    %v534 = vrot.slane %v526, %v533
    %v536 = vunpack.c.l.s4 1983009808
    %v537 = vunpack.c.0.s8 %v536
    %v538 = vlaneseq
    %v539 = vshrl.u32 %v538, 7
    %v540 = vsub.s32 %v537, %v539
    %v541 = vrot.slane %v527, %v540
    %v542 = vcombine.low %v441, %v449
    %v543 = vcombine.high %v441, %v449
    %v545 = vunpack.c.l.s4 1983009808
    %v546 = vunpack.c.0.s8 %v545
    %v547 = vlaneseq
    %v548 = vshrl.u32 %v547, 7
    %v549 = vsub.s32 %v546, %v548
    %v550 = vrot.slane %v542, %v549
    %v552 = vunpack.c.l.s4 1983009808
    %v553 = vunpack.c.0.s8 %v552
    %v554 = vlaneseq
    %v555 = vshrl.u32 %v554, 7
    %v556 = vsub.s32 %v553, %v555
    %v557 = vrot.slane %v543, %v556
    %v558 = vcombine.low %v534, %v550
    %v559 = vcombine.high %v534, %v550
    %v561 = vunpack.c.l.s4 1934713408
    %v562 = vunpack.c.0.s8 %v561
    %v563 = vlaneseq
    %v564 = vshrl.u32 %v563, 7
    %v565 = vsub.s32 %v562, %v564
    %v566 = vrot.slane %v558, %v565
    %v568 = vunpack.c.l.s4 1934713408
    %v569 = vunpack.c.0.s8 %v568
    %v570 = vlaneseq
    %v571 = vshrl.u32 %v570, 7
    %v572 = vsub.s32 %v569, %v571
    %v573 = vrot.slane %v559, %v572
    %v574 = vcombine.low %v541, %v557
    %v575 = vcombine.high %v541, %v557
    %v577 = vunpack.c.l.s4 1934713408
    %v578 = vunpack.c.0.s8 %v577
    %v579 = vlaneseq
    %v580 = vshrl.u32 %v579, 7
    %v581 = vsub.s32 %v578, %v580
    %v582 = vrot.slane %v574, %v581
    %v584 = vunpack.c.l.s4 1934713408
    %v585 = vunpack.c.0.s8 %v584
    %v586 = vlaneseq
    %v587 = vshrl.u32 %v586, 7
    %v588 = vsub.s32 %v585, %v587
    %v589 = vrot.slane %v575, %v588
    %v590 = vcombine.high %v566, 0.0
    %v591 = vcombine.high %v573, 0.0
    %v592 = vcombine.high %v582, 0.0
    %v593 = vcombine.high %v589, 0.0
    %v594 = vcombine.low %v498, %v505
    %v596 = vunpack.c.l.s4 1983009808
    %v597 = vunpack.c.0.s8 %v596
    %v598 = vlaneseq
    %v599 = vshrl.u32 %v598, 7
    %v600 = vsub.s32 %v597, %v599
    %v601 = vrot.slane %v594, %v600
    %v602 = vcombine.low %v522, %v523
    %v604 = vunpack.c.l.s4 1983009808
    %v605 = vunpack.c.0.s8 %v604
    %v606 = vlaneseq
    %v607 = vshrl.u32 %v606, 7
    %v608 = vsub.s32 %v605, %v607
    %v609 = vrot.slane %v602, %v608
    %v610 = vcombine.low %v514, %v521
    %v612 = vunpack.c.l.s4 1983009808
    %v613 = vunpack.c.0.s8 %v612
    %v614 = vlaneseq
    %v615 = vshrl.u32 %v614, 7
    %v616 = vsub.s32 %v613, %v615
    %v617 = vrot.slane %v610, %v616
    %v618 = vcombine.low %v524, %v525
    %v620 = vunpack.c.l.s4 1983009808
    %v621 = vunpack.c.0.s8 %v620
    %v622 = vlaneseq
    %v623 = vshrl.u32 %v622, 7
    %v624 = vsub.s32 %v621, %v623
    %v625 = vrot.slane %v618, %v624
    %v626 = vcombine.low %v601, %v609
    %v627 = vcombine.high %v601, %v609
    %v629 = vunpack.c.l.s4 1934713408
    %v630 = vunpack.c.0.s8 %v629
    %v631 = vlaneseq
    %v632 = vshrl.u32 %v631, 7
    %v633 = vsub.s32 %v630, %v632
    %v634 = vrot.slane %v626, %v633
    %v636 = vunpack.c.l.s4 1934713408
    %v637 = vunpack.c.0.s8 %v636
    %v638 = vlaneseq
    %v639 = vshrl.u32 %v638, 7
    %v640 = vsub.s32 %v637, %v639
    %v641 = vrot.slane %v627, %v640
    %v642 = vcombine.low %v617, %v625
    %v643 = vcombine.high %v617, %v625
    %v645 = vunpack.c.l.s4 1934713408
    %v646 = vunpack.c.0.s8 %v645
    %v647 = vlaneseq
    %v648 = vshrl.u32 %v647, 7
    %v649 = vsub.s32 %v646, %v648
    %v650 = vrot.slane %v642, %v649
    %v652 = vunpack.c.l.s4 1934713408
    %v653 = vunpack.c.0.s8 %v652
    %v654 = vlaneseq
    %v655 = vshrl.u32 %v654, 7
    %v656 = vsub.s32 %v653, %v655
    %v657 = vrot.slane %v643, %v656
    %v658 = vcombine.low %v634, %v650
    %v659 = vcombine.high %v634, %v650
    %v660 = vcombine.low %v641, %v657
    %v661 = vcombine.high %v641, %v657
    %v662 = vcombine.low %v566, %v573
    %v664 = vunpack.c.l.s4 1983009808
    %v665 = vunpack.c.0.s8 %v664
    %v666 = vlaneseq
    %v667 = vshrl.u32 %v666, 7
    %v668 = vsub.s32 %v665, %v667
    %v669 = vrot.slane %v662, %v668
    %v670 = vcombine.low %v590, %v591
    %v672 = vunpack.c.l.s4 1983009808
    %v673 = vunpack.c.0.s8 %v672
    %v674 = vlaneseq
    %v675 = vshrl.u32 %v674, 7
    %v676 = vsub.s32 %v673, %v675
    %v677 = vrot.slane %v670, %v676
    %v678 = vcombine.low %v582, %v589
    %v680 = vunpack.c.l.s4 1983009808
    %v681 = vunpack.c.0.s8 %v680
    %v682 = vlaneseq
    %v683 = vshrl.u32 %v682, 7
    %v684 = vsub.s32 %v681, %v683
    %v685 = vrot.slane %v678, %v684
    %v686 = vcombine.low %v592, %v593
    %v688 = vunpack.c.l.s4 1983009808
    %v689 = vunpack.c.0.s8 %v688
    %v690 = vlaneseq
    %v691 = vshrl.u32 %v690, 7
    %v692 = vsub.s32 %v689, %v691
    %v693 = vrot.slane %v686, %v692
    %v694 = vcombine.low %v669, %v677
    %v695 = vcombine.high %v669, %v677
    %v697 = vunpack.c.l.s4 1934713408
    %v698 = vunpack.c.0.s8 %v697
    %v699 = vlaneseq
    %v700 = vshrl.u32 %v699, 7
    %v701 = vsub.s32 %v698, %v700
    %v702 = vrot.slane %v694, %v701
    %v704 = vunpack.c.l.s4 1934713408
    %v705 = vunpack.c.0.s8 %v704
    %v706 = vlaneseq
    %v707 = vshrl.u32 %v706, 7
    %v708 = vsub.s32 %v705, %v707
    %v709 = vrot.slane %v695, %v708
    %v710 = vcombine.low %v685, %v693
    %v711 = vcombine.high %v685, %v693
    %v713 = vunpack.c.l.s4 1934713408
    %v714 = vunpack.c.0.s8 %v713
    %v715 = vlaneseq
    %v716 = vshrl.u32 %v715, 7
    %v717 = vsub.s32 %v714, %v716
    %v718 = vrot.slane %v710, %v717
    %v720 = vunpack.c.l.s4 1934713408
    %v721 = vunpack.c.0.s8 %v720
    %v722 = vlaneseq
    %v723 = vshrl.u32 %v722, 7
    %v724 = vsub.s32 %v721, %v723
    %v725 = vrot.slane %v711, %v724
    %v726 = vcombine.low %v702, %v718
    %v727 = vcombine.high %v702, %v718
    %v728 = vcombine.low %v709, %v725
    %v729 = vcombine.high %v709, %v725
    %730 = vrot.lane.b32.xlu0 %v134, 64
    %v731 = vpop.permute.xlu0 %730
    %732 = vrot.lane.b32.xlu0 %v139, 64
    %v733 = vpop.permute.xlu0 %732
    %734 = vrot.lane.b32.xlu0 %v145, 64
    %v735 = vpop.permute.xlu0 %734
    %736 = vrot.lane.b32.xlu0 %v147, 64
    %v737 = vpop.permute.xlu0 %736
    %738 = vrot.lane.b32.xlu0 %v151, 64
    %v739 = vpop.permute.xlu0 %738
    %740 = vrot.lane.b32.xlu0 %v153, 64
    %v741 = vpop.permute.xlu0 %740
    %742 = vrot.lane.b32.xlu0 %v157, 64
    %v743 = vpop.permute.xlu0 %742
    %744 = vrot.lane.b32.xlu0 %v159, 64
    %v745 = vpop.permute.xlu0 %744
    %v754 = vcombine.low %v731, %v739
    %v755 = vcombine.high %v731, %v739
    %v757 = vunpack.c.l.s4 1983009808
    %v758 = vunpack.c.0.s8 %v757
    %v759 = vlaneseq
    %v760 = vshrl.u32 %v759, 7
    %v761 = vsub.s32 %v758, %v760
    %v762 = vrot.slane %v754, %v761
    %v764 = vunpack.c.l.s4 1983009808
    %v765 = vunpack.c.0.s8 %v764
    %v766 = vlaneseq
    %v767 = vshrl.u32 %v766, 7
    %v768 = vsub.s32 %v765, %v767
    %v769 = vrot.slane %v755, %v768
    %v770 = vcombine.low %v735, %v743
    %v771 = vcombine.high %v735, %v743
    %v773 = vunpack.c.l.s4 1983009808
    %v774 = vunpack.c.0.s8 %v773
    %v775 = vlaneseq
    %v776 = vshrl.u32 %v775, 7
    %v777 = vsub.s32 %v774, %v776
    %v778 = vrot.slane %v770, %v777
    %v780 = vunpack.c.l.s4 1983009808
    %v781 = vunpack.c.0.s8 %v780
    %v782 = vlaneseq
    %v783 = vshrl.u32 %v782, 7
    %v784 = vsub.s32 %v781, %v783
    %v785 = vrot.slane %v771, %v784
    %v786 = vcombine.low %v762, %v778
    %v787 = vcombine.high %v762, %v778
    %v789 = vunpack.c.l.s4 1934713408
    %v790 = vunpack.c.0.s8 %v789
    %v791 = vlaneseq
    %v792 = vshrl.u32 %v791, 7
    %v793 = vsub.s32 %v790, %v792
    %v794 = vrot.slane %v786, %v793
    %v796 = vunpack.c.l.s4 1934713408
    %v797 = vunpack.c.0.s8 %v796
    %v798 = vlaneseq
    %v799 = vshrl.u32 %v798, 7
    %v800 = vsub.s32 %v797, %v799
    %v801 = vrot.slane %v787, %v800
    %v802 = vcombine.low %v769, %v785
    %v803 = vcombine.high %v769, %v785
    %v805 = vunpack.c.l.s4 1934713408
    %v806 = vunpack.c.0.s8 %v805
    %v807 = vlaneseq
    %v808 = vshrl.u32 %v807, 7
    %v809 = vsub.s32 %v806, %v808
    %v810 = vrot.slane %v802, %v809
    %v812 = vunpack.c.l.s4 1934713408
    %v813 = vunpack.c.0.s8 %v812
    %v814 = vlaneseq
    %v815 = vshrl.u32 %v814, 7
    %v816 = vsub.s32 %v813, %v815
    %v817 = vrot.slane %v803, %v816
    %v818 = vcombine.high %v794, 0.0
    %v819 = vcombine.high %v801, 0.0
    %v820 = vcombine.high %v810, 0.0
    %v821 = vcombine.high %v817, 0.0
    %v822 = vcombine.low %v733, %v741
    %v823 = vcombine.high %v733, %v741
    %v825 = vunpack.c.l.s4 1983009808
    %v826 = vunpack.c.0.s8 %v825
    %v827 = vlaneseq
    %v828 = vshrl.u32 %v827, 7
    %v829 = vsub.s32 %v826, %v828
    %v830 = vrot.slane %v822, %v829
    %v832 = vunpack.c.l.s4 1983009808
    %v833 = vunpack.c.0.s8 %v832
    %v834 = vlaneseq
    %v835 = vshrl.u32 %v834, 7
    %v836 = vsub.s32 %v833, %v835
    %v837 = vrot.slane %v823, %v836
    %v838 = vcombine.low %v737, %v745
    %v839 = vcombine.high %v737, %v745
    %v841 = vunpack.c.l.s4 1983009808
    %v842 = vunpack.c.0.s8 %v841
    %v843 = vlaneseq
    %v844 = vshrl.u32 %v843, 7
    %v845 = vsub.s32 %v842, %v844
    %v846 = vrot.slane %v838, %v845
    %v848 = vunpack.c.l.s4 1983009808
    %v849 = vunpack.c.0.s8 %v848
    %v850 = vlaneseq
    %v851 = vshrl.u32 %v850, 7
    %v852 = vsub.s32 %v849, %v851
    %v853 = vrot.slane %v839, %v852
    %v854 = vcombine.low %v830, %v846
    %v855 = vcombine.high %v830, %v846
    %v857 = vunpack.c.l.s4 1934713408
    %v858 = vunpack.c.0.s8 %v857
    %v859 = vlaneseq
    %v860 = vshrl.u32 %v859, 7
    %v861 = vsub.s32 %v858, %v860
    %v862 = vrot.slane %v854, %v861
    %v864 = vunpack.c.l.s4 1934713408
    %v865 = vunpack.c.0.s8 %v864
    %v866 = vlaneseq
    %v867 = vshrl.u32 %v866, 7
    %v868 = vsub.s32 %v865, %v867
    %v869 = vrot.slane %v855, %v868
    %v870 = vcombine.low %v837, %v853
    %v871 = vcombine.high %v837, %v853
    %v873 = vunpack.c.l.s4 1934713408
    %v874 = vunpack.c.0.s8 %v873
    %v875 = vlaneseq
    %v876 = vshrl.u32 %v875, 7
    %v877 = vsub.s32 %v874, %v876
    %v878 = vrot.slane %v870, %v877
    %v880 = vunpack.c.l.s4 1934713408
    %v881 = vunpack.c.0.s8 %v880
    %v882 = vlaneseq
    %v883 = vshrl.u32 %v882, 7
    %v884 = vsub.s32 %v881, %v883
    %v885 = vrot.slane %v871, %v884
    %v886 = vcombine.high %v862, 0.0
    %v887 = vcombine.high %v869, 0.0
    %v888 = vcombine.high %v878, 0.0
    %v889 = vcombine.high %v885, 0.0
    %v890 = vcombine.low %v794, %v801
    %v892 = vunpack.c.l.s4 1983009808
    %v893 = vunpack.c.0.s8 %v892
    %v894 = vlaneseq
    %v895 = vshrl.u32 %v894, 7
    %v896 = vsub.s32 %v893, %v895
    %v897 = vrot.slane %v890, %v896
    %v898 = vcombine.low %v818, %v819
    %v900 = vunpack.c.l.s4 1983009808
    %v901 = vunpack.c.0.s8 %v900
    %v902 = vlaneseq
    %v903 = vshrl.u32 %v902, 7
    %v904 = vsub.s32 %v901, %v903
    %v905 = vrot.slane %v898, %v904
    %v906 = vcombine.low %v810, %v817
    %v908 = vunpack.c.l.s4 1983009808
    %v909 = vunpack.c.0.s8 %v908
    %v910 = vlaneseq
    %v911 = vshrl.u32 %v910, 7
    %v912 = vsub.s32 %v909, %v911
    %v913 = vrot.slane %v906, %v912
    %v914 = vcombine.low %v820, %v821
    %v916 = vunpack.c.l.s4 1983009808
    %v917 = vunpack.c.0.s8 %v916
    %v918 = vlaneseq
    %v919 = vshrl.u32 %v918, 7
    %v920 = vsub.s32 %v917, %v919
    %v921 = vrot.slane %v914, %v920
    %v922 = vcombine.low %v897, %v905
    %v923 = vcombine.high %v897, %v905
    %v925 = vunpack.c.l.s4 1934713408
    %v926 = vunpack.c.0.s8 %v925
    %v927 = vlaneseq
    %v928 = vshrl.u32 %v927, 7
    %v929 = vsub.s32 %v926, %v928
    %v930 = vrot.slane %v922, %v929
    %v932 = vunpack.c.l.s4 1934713408
    %v933 = vunpack.c.0.s8 %v932
    %v934 = vlaneseq
    %v935 = vshrl.u32 %v934, 7
    %v936 = vsub.s32 %v933, %v935
    %v937 = vrot.slane %v923, %v936
    %v938 = vcombine.low %v913, %v921
    %v939 = vcombine.high %v913, %v921
    %v941 = vunpack.c.l.s4 1934713408
    %v942 = vunpack.c.0.s8 %v941
    %v943 = vlaneseq
    %v944 = vshrl.u32 %v943, 7
    %v945 = vsub.s32 %v942, %v944
    %v946 = vrot.slane %v938, %v945
    %v948 = vunpack.c.l.s4 1934713408
    %v949 = vunpack.c.0.s8 %v948
    %v950 = vlaneseq
    %v951 = vshrl.u32 %v950, 7
    %v952 = vsub.s32 %v949, %v951
    %v953 = vrot.slane %v939, %v952
    %v954 = vcombine.low %v930, %v946
    %v955 = vcombine.high %v930, %v946
    %v956 = vcombine.low %v937, %v953
    %v957 = vcombine.high %v937, %v953
    %v958 = vcombine.low %v862, %v869
    %v960 = vunpack.c.l.s4 1983009808
    %v961 = vunpack.c.0.s8 %v960
    %v962 = vlaneseq
    %v963 = vshrl.u32 %v962, 7
    %v964 = vsub.s32 %v961, %v963
    %v965 = vrot.slane %v958, %v964
    %v966 = vcombine.low %v886, %v887
    %v968 = vunpack.c.l.s4 1983009808
    %v969 = vunpack.c.0.s8 %v968
    %v970 = vlaneseq
    %v971 = vshrl.u32 %v970, 7
    %v972 = vsub.s32 %v969, %v971
    %v973 = vrot.slane %v966, %v972
    %v974 = vcombine.low %v878, %v885
    %v976 = vunpack.c.l.s4 1983009808
    %v977 = vunpack.c.0.s8 %v976
    %v978 = vlaneseq
    %v979 = vshrl.u32 %v978, 7
    %v980 = vsub.s32 %v977, %v979
    %v981 = vrot.slane %v974, %v980
    %v982 = vcombine.low %v888, %v889
    %v984 = vunpack.c.l.s4 1983009808
    %v985 = vunpack.c.0.s8 %v984
    %v986 = vlaneseq
    %v987 = vshrl.u32 %v986, 7
    %v988 = vsub.s32 %v985, %v987
    %v989 = vrot.slane %v982, %v988
    %v990 = vcombine.low %v965, %v973
    %v991 = vcombine.high %v965, %v973
    %v993 = vunpack.c.l.s4 1934713408
    %v994 = vunpack.c.0.s8 %v993
    %v995 = vlaneseq
    %v996 = vshrl.u32 %v995, 7
    %v997 = vsub.s32 %v994, %v996
    %v998 = vrot.slane %v990, %v997
    %v1000 = vunpack.c.l.s4 1934713408
    %v1001 = vunpack.c.0.s8 %v1000
    %v1002 = vlaneseq
    %v1003 = vshrl.u32 %v1002, 7
    %v1004 = vsub.s32 %v1001, %v1003
    %v1005 = vrot.slane %v991, %v1004
    %v1006 = vcombine.low %v981, %v989
    %v1007 = vcombine.high %v981, %v989
    %v1009 = vunpack.c.l.s4 1934713408
    %v1010 = vunpack.c.0.s8 %v1009
    %v1011 = vlaneseq
    %v1012 = vshrl.u32 %v1011, 7
    %v1013 = vsub.s32 %v1010, %v1012
    %v1014 = vrot.slane %v1006, %v1013
    %v1016 = vunpack.c.l.s4 1934713408
    %v1017 = vunpack.c.0.s8 %v1016
    %v1018 = vlaneseq
    %v1019 = vshrl.u32 %v1018, 7
    %v1020 = vsub.s32 %v1017, %v1019
    %v1021 = vrot.slane %v1007, %v1020
    %v1022 = vcombine.low %v998, %v1014
    %v1023 = vcombine.high %v998, %v1014
    %v1024 = vcombine.low %v1005, %v1021
    %v1025 = vcombine.high %v1005, %v1021
    %vm1026 = vcmask 64512
    %v1028 = vsel %vm1026, %v362, 0
    %v1031 = vsel %vm1026, %v658, 0
    %1033 = vmatprep.subr.mxu0 0.0
    %1034 = vmatpush1.xpose.msra.mxu0 0.0
    %1035 = vmatprep.subr.mxu0 0.0
    %1036 = vmatpush1.xpose.msra.mxu0 0.0
    %1037 = vmatprep.subr.mxu0 0.0
    %1038 = vmatpush1.xpose.msra.mxu0 0.0
    %1039 = vmatprep.subr.mxu0 0.0
    %1040 = vmatpush1.xpose.msra.mxu0 0.0
    %1041 = vmatprep.subr.mxu0 0.0
    %1042 = vmatpush1.xpose.msra.mxu0 0.0
    %1043 = vmatprep.subr.mxu0 0.0
    %1044 = vmatpush1.xpose.msra.mxu0 0.0
    %1045 = vmatprep.subr.mxu0 0.0
    %1046 = vmatpush1.xpose.msra.mxu0 0.0
    %1047 = vmatprep.subr.mxu0 0.0
    %1048 = vmatpush1.xpose.msra.mxu0 0.0
    %1049 = vmatprep.subr.mxu0 0.0
    %1050 = vmatpush1.xpose.msra.mxu0 0.0
    %1051 = vmatprep.subr.mxu0 0.0
    %1052 = vmatpush1.xpose.msra.mxu0 0.0
    %1053 = vmatprep.subr.mxu0 0.0
    %1054 = vmatpush1.xpose.msra.mxu0 0.0
    %1055 = vmatprep.subr.mxu0 0.0
    %1056 = vmatpush1.xpose.msra.mxu0 0.0
    %1057 = vmatprep.subr.mxu0 0.0
    %1058 = vmatpush1.xpose.msra.mxu0 0.0
    %1059 = vmatprep.subr.mxu0 0.0
    %1060 = vmatpush1.xpose.msra.mxu0 0.0
    %1061 = vmatprep.subr.mxu0 0.0
    %1062 = vmatpush1.xpose.msra.mxu0 0.0
    %1063 = vmatprep.subr.mxu0 0.0
    %1064 = vmatpush1.xpose.msra.mxu0 %v1031
    %1065 = vmatprep.subr.mxu0 0.0
    %1066 = vmatpush2.xpose.msra.mxu0 0.0
    %1067 = vmatprep.subr.mxu0 0.0
    %1068 = vmatpush2.xpose.msra.mxu0 0.0
    %1069 = vmatprep.subr.mxu0 0.0
    %1070 = vmatpush2.xpose.msra.mxu0 0.0
    %1071 = vmatprep.subr.mxu0 0.0
    %1072 = vmatpush2.xpose.msra.mxu0 0.0
    %1073 = vmatprep.subr.mxu0 0.0
    %1074 = vmatpush2.xpose.msra.mxu0 0.0
    %1075 = vmatprep.subr.mxu0 0.0
    %1076 = vmatpush2.xpose.msra.mxu0 0.0
    %1077 = vmatprep.subr.mxu0 0.0
    %1078 = vmatpush2.xpose.msra.mxu0 0.0
    %1079 = vmatprep.subr.mxu0 0.0
    %1080 = vmatpush2.xpose.msra.mxu0 0.0
    %1081 = vmatprep.subr.mxu0 0.0
    %1082 = vmatpush2.xpose.msra.mxu0 0.0
    %1083 = vmatprep.subr.mxu0 0.0
    %1084 = vmatpush2.xpose.msra.mxu0 0.0
    %1085 = vmatprep.subr.mxu0 0.0
    %1086 = vmatpush2.xpose.msra.mxu0 0.0
    %1087 = vmatprep.subr.mxu0 0.0
    %1088 = vmatpush2.xpose.msra.mxu0 0.0
    %1089 = vmatprep.subr.mxu0 0.0
    %1090 = vmatpush2.xpose.msra.mxu0 0.0
    %1091 = vmatprep.subr.mxu0 0.0
    %1092 = vmatpush2.xpose.msra.mxu0 0.0
    %1093 = vmatprep.subr.mxu0 0.0
    %1094 = vmatpush2.xpose.msra.mxu0 0.0
    %1095 = vmatprep.subr.mxu0 0.0
    %1096 = vmatpush2.xpose.msra.mxu0 0.0
    %1097 = vmatprep.mubr.f32.mxu0 0.0
    %1098 = vmatmul.mubr.f32.gmra.mxu0 %v1028
    %v1099 = vpop.f32.mrf.mxu0
    %v1100 = vadd.f32 0.0, %v1099
    %v1101 = vpop.f32.mrf.mxu0
    %1102 = vdwg.mxu0
    %v1104 = vsel %vm1026, %v430, 0
    %v1107 = vsel %vm1026, %v726, 0
    %1109 = vmatprep.subr.mxu0 0.0
    %1110 = vmatpush1.xpose.msra.mxu0 0.0
    %1111 = vmatprep.subr.mxu0 0.0
    %1112 = vmatpush1.xpose.msra.mxu0 0.0
    %1113 = vmatprep.subr.mxu0 0.0
    %1114 = vmatpush1.xpose.msra.mxu0 0.0
    %1115 = vmatprep.subr.mxu0 0.0
    %1116 = vmatpush1.xpose.msra.mxu0 0.0
    %1117 = vmatprep.subr.mxu0 0.0
    %1118 = vmatpush1.xpose.msra.mxu0 0.0
    %1119 = vmatprep.subr.mxu0 0.0
    %1120 = vmatpush1.xpose.msra.mxu0 0.0
    %1121 = vmatprep.subr.mxu0 0.0
    %1122 = vmatpush1.xpose.msra.mxu0 0.0
    %1123 = vmatprep.subr.mxu0 0.0
    %1124 = vmatpush1.xpose.msra.mxu0 0.0
    %1125 = vmatprep.subr.mxu0 0.0
    %1126 = vmatpush1.xpose.msra.mxu0 0.0
    %1127 = vmatprep.subr.mxu0 0.0
    %1128 = vmatpush1.xpose.msra.mxu0 0.0
    %1129 = vmatprep.subr.mxu0 0.0
    %1130 = vmatpush1.xpose.msra.mxu0 0.0
    %1131 = vmatprep.subr.mxu0 0.0
    %1132 = vmatpush1.xpose.msra.mxu0 0.0
    %1133 = vmatprep.subr.mxu0 0.0
    %1134 = vmatpush1.xpose.msra.mxu0 0.0
    %1135 = vmatprep.subr.mxu0 0.0
    %1136 = vmatpush1.xpose.msra.mxu0 0.0
    %1137 = vmatprep.subr.mxu0 0.0
    %1138 = vmatpush1.xpose.msra.mxu0 0.0
    %1139 = vmatprep.subr.mxu0 0.0
    %1140 = vmatpush1.xpose.msra.mxu0 %v1107
    %1141 = vmatprep.subr.mxu0 0.0
    %1142 = vmatpush2.xpose.msra.mxu0 0.0
    %1143 = vmatprep.subr.mxu0 0.0
    %1144 = vmatpush2.xpose.msra.mxu0 0.0
    %1145 = vmatprep.subr.mxu0 0.0
    %1146 = vmatpush2.xpose.msra.mxu0 0.0
    %1147 = vmatprep.subr.mxu0 0.0
    %1148 = vmatpush2.xpose.msra.mxu0 0.0
    %1149 = vmatprep.subr.mxu0 0.0
    %1150 = vmatpush2.xpose.msra.mxu0 0.0
    %1151 = vmatprep.subr.mxu0 0.0
    %1152 = vmatpush2.xpose.msra.mxu0 0.0
    %1153 = vmatprep.subr.mxu0 0.0
    %1154 = vmatpush2.xpose.msra.mxu0 0.0
    %1155 = vmatprep.subr.mxu0 0.0
    %1156 = vmatpush2.xpose.msra.mxu0 0.0
    %1157 = vmatprep.subr.mxu0 0.0
    %1158 = vmatpush2.xpose.msra.mxu0 0.0
    %1159 = vmatprep.subr.mxu0 0.0
    %1160 = vmatpush2.xpose.msra.mxu0 0.0
    %1161 = vmatprep.subr.mxu0 0.0
    %1162 = vmatpush2.xpose.msra.mxu0 0.0
    %1163 = vmatprep.subr.mxu0 0.0
    %1164 = vmatpush2.xpose.msra.mxu0 0.0
    %1165 = vmatprep.subr.mxu0 0.0
    %1166 = vmatpush2.xpose.msra.mxu0 0.0
    %1167 = vmatprep.subr.mxu0 0.0
    %1168 = vmatpush2.xpose.msra.mxu0 0.0
    %1169 = vmatprep.subr.mxu0 0.0
    %1170 = vmatpush2.xpose.msra.mxu0 0.0
    %1171 = vmatprep.subr.mxu0 0.0
    %1172 = vmatpush2.xpose.msra.mxu0 0.0
    %1173 = vmatprep.mubr.f32.mxu0 0.0
    %1174 = vmatmul.mubr.f32.gmra.mxu0 %v1104
    %v1175 = vpop.f32.mrf.mxu0
    %v1176 = vadd.f32 0.0, %v1175
    %v1177 = vpop.f32.mrf.mxu0
    %1178 = vdwg.mxu0
    %v1180 = vsel %vm1026, %v363, 0
    %v1183 = vsel %vm1026, %v659, 0
    %1185 = vmatprep.subr.mxu0 0.0
    %1186 = vmatpush1.xpose.msra.mxu0 0.0
    %1187 = vmatprep.subr.mxu0 0.0
    %1188 = vmatpush1.xpose.msra.mxu0 0.0
    %1189 = vmatprep.subr.mxu0 0.0
    %1190 = vmatpush1.xpose.msra.mxu0 0.0
    %1191 = vmatprep.subr.mxu0 0.0
    %1192 = vmatpush1.xpose.msra.mxu0 0.0
    %1193 = vmatprep.subr.mxu0 0.0
    %1194 = vmatpush1.xpose.msra.mxu0 0.0
    %1195 = vmatprep.subr.mxu0 0.0
    %1196 = vmatpush1.xpose.msra.mxu0 0.0
    %1197 = vmatprep.subr.mxu0 0.0
    %1198 = vmatpush1.xpose.msra.mxu0 0.0
    %1199 = vmatprep.subr.mxu0 0.0
    %1200 = vmatpush1.xpose.msra.mxu0 0.0
    %1201 = vmatprep.subr.mxu0 0.0
    %1202 = vmatpush1.xpose.msra.mxu0 0.0
    %1203 = vmatprep.subr.mxu0 0.0
    %1204 = vmatpush1.xpose.msra.mxu0 0.0
    %1205 = vmatprep.subr.mxu0 0.0
    %1206 = vmatpush1.xpose.msra.mxu0 0.0
    %1207 = vmatprep.subr.mxu0 0.0
    %1208 = vmatpush1.xpose.msra.mxu0 0.0
    %1209 = vmatprep.subr.mxu0 0.0
    %1210 = vmatpush1.xpose.msra.mxu0 0.0
    %1211 = vmatprep.subr.mxu0 0.0
    %1212 = vmatpush1.xpose.msra.mxu0 0.0
    %1213 = vmatprep.subr.mxu0 0.0
    %1214 = vmatpush1.xpose.msra.mxu0 0.0
    %1215 = vmatprep.subr.mxu0 0.0
    %1216 = vmatpush1.xpose.msra.mxu0 %v1183
    %1217 = vmatprep.subr.mxu0 0.0
    %1218 = vmatpush2.xpose.msra.mxu0 0.0
    %1219 = vmatprep.subr.mxu0 0.0
    %1220 = vmatpush2.xpose.msra.mxu0 0.0
    %1221 = vmatprep.subr.mxu0 0.0
    %1222 = vmatpush2.xpose.msra.mxu0 0.0
    %1223 = vmatprep.subr.mxu0 0.0
    %1224 = vmatpush2.xpose.msra.mxu0 0.0
    %1225 = vmatprep.subr.mxu0 0.0
    %1226 = vmatpush2.xpose.msra.mxu0 0.0
    %1227 = vmatprep.subr.mxu0 0.0
    %1228 = vmatpush2.xpose.msra.mxu0 0.0
    %1229 = vmatprep.subr.mxu0 0.0
    %1230 = vmatpush2.xpose.msra.mxu0 0.0
    %1231 = vmatprep.subr.mxu0 0.0
    %1232 = vmatpush2.xpose.msra.mxu0 0.0
    %1233 = vmatprep.subr.mxu0 0.0
    %1234 = vmatpush2.xpose.msra.mxu0 0.0
    %1235 = vmatprep.subr.mxu0 0.0
    %1236 = vmatpush2.xpose.msra.mxu0 0.0
    %1237 = vmatprep.subr.mxu0 0.0
    %1238 = vmatpush2.xpose.msra.mxu0 0.0
    %1239 = vmatprep.subr.mxu0 0.0
    %1240 = vmatpush2.xpose.msra.mxu0 0.0
    %1241 = vmatprep.subr.mxu0 0.0
    %1242 = vmatpush2.xpose.msra.mxu0 0.0
    %1243 = vmatprep.subr.mxu0 0.0
    %1244 = vmatpush2.xpose.msra.mxu0 0.0
    %1245 = vmatprep.subr.mxu0 0.0
    %1246 = vmatpush2.xpose.msra.mxu0 0.0
    %1247 = vmatprep.subr.mxu0 0.0
    %1248 = vmatpush2.xpose.msra.mxu0 0.0
    %1249 = vmatprep.mubr.f32.mxu0 0.0
    %1250 = vmatmul.mubr.f32.gmra.mxu0 %v1180
    %v1251 = vpop.f32.mrf.mxu0
    %v1252 = vadd.f32 0.0, %v1251
    %v1253 = vpop.f32.mrf.mxu0
    %1254 = vdwg.mxu0
    %v1256 = vsel %vm1026, %v431, 0
    %v1259 = vsel %vm1026, %v727, 0
    %1261 = vmatprep.subr.mxu0 0.0
    %1262 = vmatpush1.xpose.msra.mxu0 0.0
    %1263 = vmatprep.subr.mxu0 0.0
    %1264 = vmatpush1.xpose.msra.mxu0 0.0
    %1265 = vmatprep.subr.mxu0 0.0
    %1266 = vmatpush1.xpose.msra.mxu0 0.0
    %1267 = vmatprep.subr.mxu0 0.0
    %1268 = vmatpush1.xpose.msra.mxu0 0.0
    %1269 = vmatprep.subr.mxu0 0.0
    %1270 = vmatpush1.xpose.msra.mxu0 0.0
    %1271 = vmatprep.subr.mxu0 0.0
    %1272 = vmatpush1.xpose.msra.mxu0 0.0
    %1273 = vmatprep.subr.mxu0 0.0
    %1274 = vmatpush1.xpose.msra.mxu0 0.0
    %1275 = vmatprep.subr.mxu0 0.0
    %1276 = vmatpush1.xpose.msra.mxu0 0.0
    %1277 = vmatprep.subr.mxu0 0.0
    %1278 = vmatpush1.xpose.msra.mxu0 0.0
    %1279 = vmatprep.subr.mxu0 0.0
    %1280 = vmatpush1.xpose.msra.mxu0 0.0
    %1281 = vmatprep.subr.mxu0 0.0
    %1282 = vmatpush1.xpose.msra.mxu0 0.0
    %1283 = vmatprep.subr.mxu0 0.0
    %1284 = vmatpush1.xpose.msra.mxu0 0.0
    %1285 = vmatprep.subr.mxu0 0.0
    %1286 = vmatpush1.xpose.msra.mxu0 0.0
    %1287 = vmatprep.subr.mxu0 0.0
    %1288 = vmatpush1.xpose.msra.mxu0 0.0
    %1289 = vmatprep.subr.mxu0 0.0
    %1290 = vmatpush1.xpose.msra.mxu0 0.0
    %1291 = vmatprep.subr.mxu0 0.0
    %1292 = vmatpush1.xpose.msra.mxu0 %v1259
    %1293 = vmatprep.subr.mxu0 0.0
    %1294 = vmatpush2.xpose.msra.mxu0 0.0
    %1295 = vmatprep.subr.mxu0 0.0
    %1296 = vmatpush2.xpose.msra.mxu0 0.0
    %1297 = vmatprep.subr.mxu0 0.0
    %1298 = vmatpush2.xpose.msra.mxu0 0.0
    %1299 = vmatprep.subr.mxu0 0.0
    %1300 = vmatpush2.xpose.msra.mxu0 0.0
    %1301 = vmatprep.subr.mxu0 0.0
    %1302 = vmatpush2.xpose.msra.mxu0 0.0
    %1303 = vmatprep.subr.mxu0 0.0
    %1304 = vmatpush2.xpose.msra.mxu0 0.0
    %1305 = vmatprep.subr.mxu0 0.0
    %1306 = vmatpush2.xpose.msra.mxu0 0.0
    %1307 = vmatprep.subr.mxu0 0.0
    %1308 = vmatpush2.xpose.msra.mxu0 0.0
    %1309 = vmatprep.subr.mxu0 0.0
    %1310 = vmatpush2.xpose.msra.mxu0 0.0
    %1311 = vmatprep.subr.mxu0 0.0
    %1312 = vmatpush2.xpose.msra.mxu0 0.0
    %1313 = vmatprep.subr.mxu0 0.0
    %1314 = vmatpush2.xpose.msra.mxu0 0.0
    %1315 = vmatprep.subr.mxu0 0.0
    %1316 = vmatpush2.xpose.msra.mxu0 0.0
    %1317 = vmatprep.subr.mxu0 0.0
    %1318 = vmatpush2.xpose.msra.mxu0 0.0
    %1319 = vmatprep.subr.mxu0 0.0
    %1320 = vmatpush2.xpose.msra.mxu0 0.0
    %1321 = vmatprep.subr.mxu0 0.0
    %1322 = vmatpush2.xpose.msra.mxu0 0.0
    %1323 = vmatprep.subr.mxu0 0.0
    %1324 = vmatpush2.xpose.msra.mxu0 0.0
    %1325 = vmatprep.mubr.f32.mxu0 0.0
    %1326 = vmatmul.mubr.f32.gmra.mxu0 %v1256
    %v1327 = vpop.f32.mrf.mxu0
    %v1328 = vadd.f32 0.0, %v1327
    %v1329 = vpop.f32.mrf.mxu0
    %1330 = vdwg.mxu0
    %v1332 = vsel %vm1026, %v364, 0
    %v1335 = vsel %vm1026, %v660, 0
    %1337 = vmatprep.subr.mxu0 0.0
    %1338 = vmatpush1.xpose.msra.mxu0 0.0
    %1339 = vmatprep.subr.mxu0 0.0
    %1340 = vmatpush1.xpose.msra.mxu0 0.0
    %1341 = vmatprep.subr.mxu0 0.0
    %1342 = vmatpush1.xpose.msra.mxu0 0.0
    %1343 = vmatprep.subr.mxu0 0.0
    %1344 = vmatpush1.xpose.msra.mxu0 0.0
    %1345 = vmatprep.subr.mxu0 0.0
    %1346 = vmatpush1.xpose.msra.mxu0 0.0
    %1347 = vmatprep.subr.mxu0 0.0
    %1348 = vmatpush1.xpose.msra.mxu0 0.0
    %1349 = vmatprep.subr.mxu0 0.0
    %1350 = vmatpush1.xpose.msra.mxu0 0.0
    %1351 = vmatprep.subr.mxu0 0.0
    %1352 = vmatpush1.xpose.msra.mxu0 0.0
    %1353 = vmatprep.subr.mxu0 0.0
    %1354 = vmatpush1.xpose.msra.mxu0 0.0
    %1355 = vmatprep.subr.mxu0 0.0
    %1356 = vmatpush1.xpose.msra.mxu0 0.0
    %1357 = vmatprep.subr.mxu0 0.0
    %1358 = vmatpush1.xpose.msra.mxu0 0.0
    %1359 = vmatprep.subr.mxu0 0.0
    %1360 = vmatpush1.xpose.msra.mxu0 0.0
    %1361 = vmatprep.subr.mxu0 0.0
    %1362 = vmatpush1.xpose.msra.mxu0 0.0
    %1363 = vmatprep.subr.mxu0 0.0
    %1364 = vmatpush1.xpose.msra.mxu0 0.0
    %1365 = vmatprep.subr.mxu0 0.0
    %1366 = vmatpush1.xpose.msra.mxu0 0.0
    %1367 = vmatprep.subr.mxu0 0.0
    %1368 = vmatpush1.xpose.msra.mxu0 %v1335
    %1369 = vmatprep.subr.mxu0 0.0
    %1370 = vmatpush2.xpose.msra.mxu0 0.0
    %1371 = vmatprep.subr.mxu0 0.0
    %1372 = vmatpush2.xpose.msra.mxu0 0.0
    %1373 = vmatprep.subr.mxu0 0.0
    %1374 = vmatpush2.xpose.msra.mxu0 0.0
    %1375 = vmatprep.subr.mxu0 0.0
    %1376 = vmatpush2.xpose.msra.mxu0 0.0
    %1377 = vmatprep.subr.mxu0 0.0
    %1378 = vmatpush2.xpose.msra.mxu0 0.0
    %1379 = vmatprep.subr.mxu0 0.0
    %1380 = vmatpush2.xpose.msra.mxu0 0.0
    %1381 = vmatprep.subr.mxu0 0.0
    %1382 = vmatpush2.xpose.msra.mxu0 0.0
    %1383 = vmatprep.subr.mxu0 0.0
    %1384 = vmatpush2.xpose.msra.mxu0 0.0
    %1385 = vmatprep.subr.mxu0 0.0
    %1386 = vmatpush2.xpose.msra.mxu0 0.0
    %1387 = vmatprep.subr.mxu0 0.0
    %1388 = vmatpush2.xpose.msra.mxu0 0.0
    %1389 = vmatprep.subr.mxu0 0.0
    %1390 = vmatpush2.xpose.msra.mxu0 0.0
    %1391 = vmatprep.subr.mxu0 0.0
    %1392 = vmatpush2.xpose.msra.mxu0 0.0
    %1393 = vmatprep.subr.mxu0 0.0
    %1394 = vmatpush2.xpose.msra.mxu0 0.0
    %1395 = vmatprep.subr.mxu0 0.0
    %1396 = vmatpush2.xpose.msra.mxu0 0.0
    %1397 = vmatprep.subr.mxu0 0.0
    %1398 = vmatpush2.xpose.msra.mxu0 0.0
    %1399 = vmatprep.subr.mxu0 0.0
    %1400 = vmatpush2.xpose.msra.mxu0 0.0
    %1401 = vmatprep.mubr.f32.mxu0 0.0
    %1402 = vmatmul.mubr.f32.gmra.mxu0 %v1332
    %v1403 = vpop.f32.mrf.mxu0
    %v1404 = vadd.f32 0.0, %v1403
    %v1405 = vpop.f32.mrf.mxu0
    %1406 = vdwg.mxu0
    %v1408 = vsel %vm1026, %v432, 0
    %v1411 = vsel %vm1026, %v728, 0
    %1413 = vmatprep.subr.mxu0 0.0
    %1414 = vmatpush1.xpose.msra.mxu0 0.0
    %1415 = vmatprep.subr.mxu0 0.0
    %1416 = vmatpush1.xpose.msra.mxu0 0.0
    %1417 = vmatprep.subr.mxu0 0.0
    %1418 = vmatpush1.xpose.msra.mxu0 0.0
    %1419 = vmatprep.subr.mxu0 0.0
    %1420 = vmatpush1.xpose.msra.mxu0 0.0
    %1421 = vmatprep.subr.mxu0 0.0
    %1422 = vmatpush1.xpose.msra.mxu0 0.0
    %1423 = vmatprep.subr.mxu0 0.0
    %1424 = vmatpush1.xpose.msra.mxu0 0.0
    %1425 = vmatprep.subr.mxu0 0.0
    %1426 = vmatpush1.xpose.msra.mxu0 0.0
    %1427 = vmatprep.subr.mxu0 0.0
    %1428 = vmatpush1.xpose.msra.mxu0 0.0
    %1429 = vmatprep.subr.mxu0 0.0
    %1430 = vmatpush1.xpose.msra.mxu0 0.0
    %1431 = vmatprep.subr.mxu0 0.0
    %1432 = vmatpush1.xpose.msra.mxu0 0.0
    %1433 = vmatprep.subr.mxu0 0.0
    %1434 = vmatpush1.xpose.msra.mxu0 0.0
    %1435 = vmatprep.subr.mxu0 0.0
    %1436 = vmatpush1.xpose.msra.mxu0 0.0
    %1437 = vmatprep.subr.mxu0 0.0
    %1438 = vmatpush1.xpose.msra.mxu0 0.0
    %1439 = vmatprep.subr.mxu0 0.0
    %1440 = vmatpush1.xpose.msra.mxu0 0.0
    %1441 = vmatprep.subr.mxu0 0.0
    %1442 = vmatpush1.xpose.msra.mxu0 0.0
    %1443 = vmatprep.subr.mxu0 0.0
    %1444 = vmatpush1.xpose.msra.mxu0 %v1411
    %1445 = vmatprep.subr.mxu0 0.0
    %1446 = vmatpush2.xpose.msra.mxu0 0.0
    %1447 = vmatprep.subr.mxu0 0.0
    %1448 = vmatpush2.xpose.msra.mxu0 0.0
    %1449 = vmatprep.subr.mxu0 0.0
    %1450 = vmatpush2.xpose.msra.mxu0 0.0
    %1451 = vmatprep.subr.mxu0 0.0
    %1452 = vmatpush2.xpose.msra.mxu0 0.0
    %1453 = vmatprep.subr.mxu0 0.0
    %1454 = vmatpush2.xpose.msra.mxu0 0.0
    %1455 = vmatprep.subr.mxu0 0.0
    %1456 = vmatpush2.xpose.msra.mxu0 0.0
    %1457 = vmatprep.subr.mxu0 0.0
    %1458 = vmatpush2.xpose.msra.mxu0 0.0
    %1459 = vmatprep.subr.mxu0 0.0
    %1460 = vmatpush2.xpose.msra.mxu0 0.0
    %1461 = vmatprep.subr.mxu0 0.0
    %1462 = vmatpush2.xpose.msra.mxu0 0.0
    %1463 = vmatprep.subr.mxu0 0.0
    %1464 = vmatpush2.xpose.msra.mxu0 0.0
    %1465 = vmatprep.subr.mxu0 0.0
    %1466 = vmatpush2.xpose.msra.mxu0 0.0
    %1467 = vmatprep.subr.mxu0 0.0
    %1468 = vmatpush2.xpose.msra.mxu0 0.0
    %1469 = vmatprep.subr.mxu0 0.0
    %1470 = vmatpush2.xpose.msra.mxu0 0.0
    %1471 = vmatprep.subr.mxu0 0.0
    %1472 = vmatpush2.xpose.msra.mxu0 0.0
    %1473 = vmatprep.subr.mxu0 0.0
    %1474 = vmatpush2.xpose.msra.mxu0 0.0
    %1475 = vmatprep.subr.mxu0 0.0
    %1476 = vmatpush2.xpose.msra.mxu0 0.0
    %1477 = vmatprep.mubr.f32.mxu0 0.0
    %1478 = vmatmul.mubr.f32.gmra.mxu0 %v1408
    %v1479 = vpop.f32.mrf.mxu0
    %v1480 = vadd.f32 0.0, %v1479
    %v1481 = vpop.f32.mrf.mxu0
    %1482 = vdwg.mxu0
    %v1484 = vsel %vm1026, %v365, 0
    %v1487 = vsel %vm1026, %v661, 0
    %1489 = vmatprep.subr.mxu0 0.0
    %1490 = vmatpush1.xpose.msra.mxu0 0.0
    %1491 = vmatprep.subr.mxu0 0.0
    %1492 = vmatpush1.xpose.msra.mxu0 0.0
    %1493 = vmatprep.subr.mxu0 0.0
    %1494 = vmatpush1.xpose.msra.mxu0 0.0
    %1495 = vmatprep.subr.mxu0 0.0
    %1496 = vmatpush1.xpose.msra.mxu0 0.0
    %1497 = vmatprep.subr.mxu0 0.0
    %1498 = vmatpush1.xpose.msra.mxu0 0.0
    %1499 = vmatprep.subr.mxu0 0.0
    %1500 = vmatpush1.xpose.msra.mxu0 0.0
    %1501 = vmatprep.subr.mxu0 0.0
    %1502 = vmatpush1.xpose.msra.mxu0 0.0
    %1503 = vmatprep.subr.mxu0 0.0
    %1504 = vmatpush1.xpose.msra.mxu0 0.0
    %1505 = vmatprep.subr.mxu0 0.0
    %1506 = vmatpush1.xpose.msra.mxu0 0.0
    %1507 = vmatprep.subr.mxu0 0.0
    %1508 = vmatpush1.xpose.msra.mxu0 0.0
    %1509 = vmatprep.subr.mxu0 0.0
    %1510 = vmatpush1.xpose.msra.mxu0 0.0
    %1511 = vmatprep.subr.mxu0 0.0
    %1512 = vmatpush1.xpose.msra.mxu0 0.0
    %1513 = vmatprep.subr.mxu0 0.0
    %1514 = vmatpush1.xpose.msra.mxu0 0.0
    %1515 = vmatprep.subr.mxu0 0.0
    %1516 = vmatpush1.xpose.msra.mxu0 0.0
    %1517 = vmatprep.subr.mxu0 0.0
    %1518 = vmatpush1.xpose.msra.mxu0 0.0
    %1519 = vmatprep.subr.mxu0 0.0
    %1520 = vmatpush1.xpose.msra.mxu0 %v1487
    %1521 = vmatprep.subr.mxu0 0.0
    %1522 = vmatpush2.xpose.msra.mxu0 0.0
    %1523 = vmatprep.subr.mxu0 0.0
    %1524 = vmatpush2.xpose.msra.mxu0 0.0
    %1525 = vmatprep.subr.mxu0 0.0
    %1526 = vmatpush2.xpose.msra.mxu0 0.0
    %1527 = vmatprep.subr.mxu0 0.0
    %1528 = vmatpush2.xpose.msra.mxu0 0.0
    %1529 = vmatprep.subr.mxu0 0.0
    %1530 = vmatpush2.xpose.msra.mxu0 0.0
    %1531 = vmatprep.subr.mxu0 0.0
    %1532 = vmatpush2.xpose.msra.mxu0 0.0
    %1533 = vmatprep.subr.mxu0 0.0
    %1534 = vmatpush2.xpose.msra.mxu0 0.0
    %1535 = vmatprep.subr.mxu0 0.0
    %1536 = vmatpush2.xpose.msra.mxu0 0.0
    %1537 = vmatprep.subr.mxu0 0.0
    %1538 = vmatpush2.xpose.msra.mxu0 0.0
    %1539 = vmatprep.subr.mxu0 0.0
    %1540 = vmatpush2.xpose.msra.mxu0 0.0
    %1541 = vmatprep.subr.mxu0 0.0
    %1542 = vmatpush2.xpose.msra.mxu0 0.0
    %1543 = vmatprep.subr.mxu0 0.0
    %1544 = vmatpush2.xpose.msra.mxu0 0.0
    %1545 = vmatprep.subr.mxu0 0.0
    %1546 = vmatpush2.xpose.msra.mxu0 0.0
    %1547 = vmatprep.subr.mxu0 0.0
    %1548 = vmatpush2.xpose.msra.mxu0 0.0
    %1549 = vmatprep.subr.mxu0 0.0
    %1550 = vmatpush2.xpose.msra.mxu0 0.0
    %1551 = vmatprep.subr.mxu0 0.0
    %1552 = vmatpush2.xpose.msra.mxu0 0.0
    %1553 = vmatprep.mubr.f32.mxu0 0.0
    %1554 = vmatmul.mubr.f32.gmra.mxu0 %v1484
    %v1555 = vpop.f32.mrf.mxu0
    %v1556 = vadd.f32 0.0, %v1555
    %v1557 = vpop.f32.mrf.mxu0
    %1558 = vdwg.mxu0
    %v1560 = vsel %vm1026, %v433, 0
    %v1563 = vsel %vm1026, %v729, 0
    %1565 = vmatprep.subr.mxu0 0.0
    %1566 = vmatpush1.xpose.msra.mxu0 0.0
    %1567 = vmatprep.subr.mxu0 0.0
    %1568 = vmatpush1.xpose.msra.mxu0 0.0
    %1569 = vmatprep.subr.mxu0 0.0
    %1570 = vmatpush1.xpose.msra.mxu0 0.0
    %1571 = vmatprep.subr.mxu0 0.0
    %1572 = vmatpush1.xpose.msra.mxu0 0.0
    %1573 = vmatprep.subr.mxu0 0.0
    %1574 = vmatpush1.xpose.msra.mxu0 0.0
    %1575 = vmatprep.subr.mxu0 0.0
    %1576 = vmatpush1.xpose.msra.mxu0 0.0
    %1577 = vmatprep.subr.mxu0 0.0
    %1578 = vmatpush1.xpose.msra.mxu0 0.0
    %1579 = vmatprep.subr.mxu0 0.0
    %1580 = vmatpush1.xpose.msra.mxu0 0.0
    %1581 = vmatprep.subr.mxu0 0.0
    %1582 = vmatpush1.xpose.msra.mxu0 0.0
    %1583 = vmatprep.subr.mxu0 0.0
    %1584 = vmatpush1.xpose.msra.mxu0 0.0
    %1585 = vmatprep.subr.mxu0 0.0
    %1586 = vmatpush1.xpose.msra.mxu0 0.0
    %1587 = vmatprep.subr.mxu0 0.0
    %1588 = vmatpush1.xpose.msra.mxu0 0.0
    %1589 = vmatprep.subr.mxu0 0.0
    %1590 = vmatpush1.xpose.msra.mxu0 0.0
    %1591 = vmatprep.subr.mxu0 0.0
    %1592 = vmatpush1.xpose.msra.mxu0 0.0
    %1593 = vmatprep.subr.mxu0 0.0
    %1594 = vmatpush1.xpose.msra.mxu0 0.0
    %1595 = vmatprep.subr.mxu0 0.0
    %1596 = vmatpush1.xpose.msra.mxu0 %v1563
    %1597 = vmatprep.subr.mxu0 0.0
    %1598 = vmatpush2.xpose.msra.mxu0 0.0
    %1599 = vmatprep.subr.mxu0 0.0
    %1600 = vmatpush2.xpose.msra.mxu0 0.0
    %1601 = vmatprep.subr.mxu0 0.0
    %1602 = vmatpush2.xpose.msra.mxu0 0.0
    %1603 = vmatprep.subr.mxu0 0.0
    %1604 = vmatpush2.xpose.msra.mxu0 0.0
    %1605 = vmatprep.subr.mxu0 0.0
    %1606 = vmatpush2.xpose.msra.mxu0 0.0
    %1607 = vmatprep.subr.mxu0 0.0
    %1608 = vmatpush2.xpose.msra.mxu0 0.0
    %1609 = vmatprep.subr.mxu0 0.0
    %1610 = vmatpush2.xpose.msra.mxu0 0.0
    %1611 = vmatprep.subr.mxu0 0.0
    %1612 = vmatpush2.xpose.msra.mxu0 0.0
    %1613 = vmatprep.subr.mxu0 0.0
    %1614 = vmatpush2.xpose.msra.mxu0 0.0
    %1615 = vmatprep.subr.mxu0 0.0
    %1616 = vmatpush2.xpose.msra.mxu0 0.0
    %1617 = vmatprep.subr.mxu0 0.0
    %1618 = vmatpush2.xpose.msra.mxu0 0.0
    %1619 = vmatprep.subr.mxu0 0.0
    %1620 = vmatpush2.xpose.msra.mxu0 0.0
    %1621 = vmatprep.subr.mxu0 0.0
    %1622 = vmatpush2.xpose.msra.mxu0 0.0
    %1623 = vmatprep.subr.mxu0 0.0
    %1624 = vmatpush2.xpose.msra.mxu0 0.0
    %1625 = vmatprep.subr.mxu0 0.0
    %1626 = vmatpush2.xpose.msra.mxu0 0.0
    %1627 = vmatprep.subr.mxu0 0.0
    %1628 = vmatpush2.xpose.msra.mxu0 0.0
    %1629 = vmatprep.mubr.f32.mxu0 0.0
    %1630 = vmatmul.mubr.f32.gmra.mxu0 %v1560
    %v1631 = vpop.f32.mrf.mxu0
    %v1632 = vadd.f32 0.0, %v1631
    %v1633 = vpop.f32.mrf.mxu0
    %1634 = vdwg.mxu0
    %v1635 = vsel %vm1026, %v1100, -inf
    %1636 = vmax.xlane.f32.xlu0 %v1635
    %v1637 = vpop.xlane.xlu0 %1636
    %v1638 = vsel %vm1026, %v1176, -inf
    %1639 = vmax.xlane.f32.xlu0 %v1638
    %v1640 = vpop.xlane.xlu0 %1639
    %v1641 = vsel %vm1026, %v1252, -inf
    %1642 = vmax.xlane.f32.xlu0 %v1641
    %v1643 = vpop.xlane.xlu0 %1642
    %v1644 = vsel %vm1026, %v1328, -inf
    %1645 = vmax.xlane.f32.xlu0 %v1644
    %v1646 = vpop.xlane.xlu0 %1645
    %v1647 = vsel %vm1026, %v1404, -inf
    %1648 = vmax.xlane.f32.xlu0 %v1647
    %v1649 = vpop.xlane.xlu0 %1648
    %v1650 = vsel %vm1026, %v1480, -inf
    %1651 = vmax.xlane.f32.xlu0 %v1650
    %v1652 = vpop.xlane.xlu0 %1651
    %v1653 = vsel %vm1026, %v1556, -inf
    %1654 = vmax.xlane.f32.xlu0 %v1653
    %v1655 = vpop.xlane.xlu0 %1654
    %v1656 = vsel %vm1026, %v1632, -inf
    %1657 = vmax.xlane.f32.xlu0 %v1656
    %v1658 = vpop.xlane.xlu0 %1657
    %v1659 = vsub.f32 %v1100, %v1637
    %v1660 = vsub.f32 %v1176, %v1640
    %v1661 = vsub.f32 %v1252, %v1643
    %v1662 = vsub.f32 %v1328, %v1646
    %v1663 = vsub.f32 %v1404, %v1649
    %v1664 = vsub.f32 %v1480, %v1652
    %v1665 = vsub.f32 %v1556, %v1655
    %v1666 = vsub.f32 %v1632, %v1658
    %v1667 = vmul.f32 %v1659, 1.442695
    %v1668 = vpow.pop %v1667
    %v1669 = vmul.f32 %v1660, 1.442695
    %v1670 = vpow.pop %v1669
    %v1671 = vmul.f32 %v1661, 1.442695
    %v1672 = vpow.pop %v1671
    %v1673 = vmul.f32 %v1662, 1.442695
    %v1674 = vpow.pop %v1673
    %v1675 = vmul.f32 %v1663, 1.442695
    %v1676 = vpow.pop %v1675
    %v1677 = vmul.f32 %v1664, 1.442695
    %v1678 = vpow.pop %v1677
    %v1679 = vmul.f32 %v1665, 1.442695
    %v1680 = vpow.pop %v1679
    %v1681 = vmul.f32 %v1666, 1.442695
    %v1682 = vpow.pop %v1681
    %v1683 = vsel %vm1026, %v1668, 0.0
    %1684 = vadd.xlane.f32.xlu0 %v1683
    %v1685 = vpop.xlane.xlu0 %1684
    %v1686 = vsel %vm1026, %v1670, 0.0
    %1687 = vadd.xlane.f32.xlu0 %v1686
    %v1688 = vpop.xlane.xlu0 %1687
    %v1689 = vsel %vm1026, %v1672, 0.0
    %1690 = vadd.xlane.f32.xlu0 %v1689
    %v1691 = vpop.xlane.xlu0 %1690
    %v1692 = vsel %vm1026, %v1674, 0.0
    %1693 = vadd.xlane.f32.xlu0 %v1692
    %v1694 = vpop.xlane.xlu0 %1693
    %v1695 = vsel %vm1026, %v1676, 0.0
    %1696 = vadd.xlane.f32.xlu0 %v1695
    %v1697 = vpop.xlane.xlu0 %1696
    %v1698 = vsel %vm1026, %v1678, 0.0
    %1699 = vadd.xlane.f32.xlu0 %v1698
    %v1700 = vpop.xlane.xlu0 %1699
    %v1701 = vsel %vm1026, %v1680, 0.0
    %1702 = vadd.xlane.f32.xlu0 %v1701
    %v1703 = vpop.xlane.xlu0 %1702
    %v1704 = vsel %vm1026, %v1682, 0.0
    %1705 = vadd.xlane.f32.xlu0 %v1704
    %v1706 = vpop.xlane.xlu0 %1705
    %v1707 = vrcp.pop %v1685
    %v1708 = vrcp.pop %v1688
    %v1709 = vrcp.pop %v1691
    %v1710 = vrcp.pop %v1694
    %v1711 = vrcp.pop %v1697
    %v1712 = vrcp.pop %v1700
    %v1713 = vrcp.pop %v1703
    %v1714 = vrcp.pop %v1706
    %v1715 = vmul.f32 %v1668, %v1707
    %v1716 = vmul.f32 %v1670, %v1708
    %v1717 = vmul.f32 %v1672, %v1709
    %v1718 = vmul.f32 %v1674, %v1710
    %v1719 = vmul.f32 %v1676, %v1711
    %v1720 = vmul.f32 %v1678, %v1712
    %v1721 = vmul.f32 %v1680, %v1713
    %v1722 = vmul.f32 %v1682, %v1714
    %v1724 = vsel %vm1026, %v1715, 0
    %1726 = vmatprep.subr.mxu0 0.0
    %1727 = vmatpush1.msra.mxu0 0.0
    %1728 = vmatprep.subr.mxu0 0.0
    %1729 = vmatpush1.msra.mxu0 0.0
    %1730 = vmatprep.subr.mxu0 0.0
    %1731 = vmatpush1.msra.mxu0 0.0
    %1732 = vmatprep.subr.mxu0 0.0
    %1733 = vmatpush1.msra.mxu0 0.0
    %1734 = vmatprep.subr.mxu0 0.0
    %1735 = vmatpush1.msra.mxu0 0.0
    %1736 = vmatprep.subr.mxu0 0.0
    %1737 = vmatpush1.msra.mxu0 0.0
    %1738 = vmatprep.subr.mxu0 0.0
    %1739 = vmatpush1.msra.mxu0 0.0
    %1740 = vmatprep.subr.mxu0 0.0
    %1741 = vmatpush1.msra.mxu0 0.0
    %1742 = vmatprep.subr.mxu0 0.0
    %1743 = vmatpush1.msra.mxu0 0.0
    %1744 = vmatprep.subr.mxu0 0.0
    %1745 = vmatpush1.msra.mxu0 0.0
    %1746 = vmatprep.subr.mxu0 0.0
    %1747 = vmatpush1.msra.mxu0 0.0
    %1748 = vmatprep.subr.mxu0 0.0
    %1749 = vmatpush1.msra.mxu0 0.0
    %1750 = vmatprep.subr.mxu0 0.0
    %1751 = vmatpush1.msra.mxu0 0.0
    %1752 = vmatprep.subr.mxu0 0.0
    %1753 = vmatpush1.msra.mxu0 0.0
    %1754 = vmatprep.subr.mxu0 0.0
    %1755 = vmatpush1.msra.mxu0 0.0
    %1756 = vmatprep.subr.mxu0 0.0
    %1757 = vmatpush1.msra.mxu0 %v954
    %1758 = vmatprep.subr.mxu0 0.0
    %1759 = vmatpush2.msra.mxu0 0.0
    %1760 = vmatprep.subr.mxu0 0.0
    %1761 = vmatpush2.msra.mxu0 0.0
    %1762 = vmatprep.subr.mxu0 0.0
    %1763 = vmatpush2.msra.mxu0 0.0
    %1764 = vmatprep.subr.mxu0 0.0
    %1765 = vmatpush2.msra.mxu0 0.0
    %1766 = vmatprep.subr.mxu0 0.0
    %1767 = vmatpush2.msra.mxu0 0.0
    %1768 = vmatprep.subr.mxu0 0.0
    %1769 = vmatpush2.msra.mxu0 0.0
    %1770 = vmatprep.subr.mxu0 0.0
    %1771 = vmatpush2.msra.mxu0 0.0
    %1772 = vmatprep.subr.mxu0 0.0
    %1773 = vmatpush2.msra.mxu0 0.0
    %1774 = vmatprep.subr.mxu0 0.0
    %1775 = vmatpush2.msra.mxu0 0.0
    %1776 = vmatprep.subr.mxu0 0.0
    %1777 = vmatpush2.msra.mxu0 0.0
    %1778 = vmatprep.subr.mxu0 0.0
    %1779 = vmatpush2.msra.mxu0 0.0
    %1780 = vmatprep.subr.mxu0 0.0
    %1781 = vmatpush2.msra.mxu0 0.0
    %1782 = vmatprep.subr.mxu0 0.0
    %1783 = vmatpush2.msra.mxu0 0.0
    %1784 = vmatprep.subr.mxu0 0.0
    %1785 = vmatpush2.msra.mxu0 0.0
    %1786 = vmatprep.subr.mxu0 0.0
    %1787 = vmatpush2.msra.mxu0 0.0
    %1788 = vmatprep.subr.mxu0 0.0
    %1789 = vmatpush2.msra.mxu0 0.0
    %1790 = vmatprep.mubr.f32.mxu0 0.0
    %1791 = vmatmul.mubr.f32.gmra.mxu0 %v1724
    %v1792 = vpop.f32.mrf.mxu0
    %v1793 = vadd.f32 0.0, %v1792
    %v1794 = vpop.f32.mrf.mxu0
    %1795 = vdwg.mxu0
    %v1797 = vsel %vm1026, %v1716, 0
    %1799 = vmatprep.subr.mxu0 0.0
    %1800 = vmatpush1.msra.mxu0 0.0
    %1801 = vmatprep.subr.mxu0 0.0
    %1802 = vmatpush1.msra.mxu0 0.0
    %1803 = vmatprep.subr.mxu0 0.0
    %1804 = vmatpush1.msra.mxu0 0.0
    %1805 = vmatprep.subr.mxu0 0.0
    %1806 = vmatpush1.msra.mxu0 0.0
    %1807 = vmatprep.subr.mxu0 0.0
    %1808 = vmatpush1.msra.mxu0 0.0
    %1809 = vmatprep.subr.mxu0 0.0
    %1810 = vmatpush1.msra.mxu0 0.0
    %1811 = vmatprep.subr.mxu0 0.0
    %1812 = vmatpush1.msra.mxu0 0.0
    %1813 = vmatprep.subr.mxu0 0.0
    %1814 = vmatpush1.msra.mxu0 0.0
    %1815 = vmatprep.subr.mxu0 0.0
    %1816 = vmatpush1.msra.mxu0 0.0
    %1817 = vmatprep.subr.mxu0 0.0
    %1818 = vmatpush1.msra.mxu0 0.0
    %1819 = vmatprep.subr.mxu0 0.0
    %1820 = vmatpush1.msra.mxu0 0.0
    %1821 = vmatprep.subr.mxu0 0.0
    %1822 = vmatpush1.msra.mxu0 0.0
    %1823 = vmatprep.subr.mxu0 0.0
    %1824 = vmatpush1.msra.mxu0 0.0
    %1825 = vmatprep.subr.mxu0 0.0
    %1826 = vmatpush1.msra.mxu0 0.0
    %1827 = vmatprep.subr.mxu0 0.0
    %1828 = vmatpush1.msra.mxu0 0.0
    %1829 = vmatprep.subr.mxu0 0.0
    %1830 = vmatpush1.msra.mxu0 %v1022
    %1831 = vmatprep.subr.mxu0 0.0
    %1832 = vmatpush2.msra.mxu0 0.0
    %1833 = vmatprep.subr.mxu0 0.0
    %1834 = vmatpush2.msra.mxu0 0.0
    %1835 = vmatprep.subr.mxu0 0.0
    %1836 = vmatpush2.msra.mxu0 0.0
    %1837 = vmatprep.subr.mxu0 0.0
    %1838 = vmatpush2.msra.mxu0 0.0
    %1839 = vmatprep.subr.mxu0 0.0
    %1840 = vmatpush2.msra.mxu0 0.0
    %1841 = vmatprep.subr.mxu0 0.0
    %1842 = vmatpush2.msra.mxu0 0.0
    %1843 = vmatprep.subr.mxu0 0.0
    %1844 = vmatpush2.msra.mxu0 0.0
    %1845 = vmatprep.subr.mxu0 0.0
    %1846 = vmatpush2.msra.mxu0 0.0
    %1847 = vmatprep.subr.mxu0 0.0
    %1848 = vmatpush2.msra.mxu0 0.0
    %1849 = vmatprep.subr.mxu0 0.0
    %1850 = vmatpush2.msra.mxu0 0.0
    %1851 = vmatprep.subr.mxu0 0.0
    %1852 = vmatpush2.msra.mxu0 0.0
    %1853 = vmatprep.subr.mxu0 0.0
    %1854 = vmatpush2.msra.mxu0 0.0
    %1855 = vmatprep.subr.mxu0 0.0
    %1856 = vmatpush2.msra.mxu0 0.0
    %1857 = vmatprep.subr.mxu0 0.0
    %1858 = vmatpush2.msra.mxu0 0.0
    %1859 = vmatprep.subr.mxu0 0.0
    %1860 = vmatpush2.msra.mxu0 0.0
    %1861 = vmatprep.subr.mxu0 0.0
    %1862 = vmatpush2.msra.mxu0 0.0
    %1863 = vmatprep.mubr.f32.mxu0 0.0
    %1864 = vmatmul.mubr.f32.gmra.mxu0 %v1797
    %v1865 = vpop.f32.mrf.mxu0
    %v1866 = vadd.f32 0.0, %v1865
    %v1867 = vpop.f32.mrf.mxu0
    %1868 = vdwg.mxu0
    %v1870 = vsel %vm1026, %v1717, 0
    %1872 = vmatprep.subr.mxu0 0.0
    %1873 = vmatpush1.msra.mxu0 0.0
    %1874 = vmatprep.subr.mxu0 0.0
    %1875 = vmatpush1.msra.mxu0 0.0
    %1876 = vmatprep.subr.mxu0 0.0
    %1877 = vmatpush1.msra.mxu0 0.0
    %1878 = vmatprep.subr.mxu0 0.0
    %1879 = vmatpush1.msra.mxu0 0.0
    %1880 = vmatprep.subr.mxu0 0.0
    %1881 = vmatpush1.msra.mxu0 0.0
    %1882 = vmatprep.subr.mxu0 0.0
    %1883 = vmatpush1.msra.mxu0 0.0
    %1884 = vmatprep.subr.mxu0 0.0
    %1885 = vmatpush1.msra.mxu0 0.0
    %1886 = vmatprep.subr.mxu0 0.0
    %1887 = vmatpush1.msra.mxu0 0.0
    %1888 = vmatprep.subr.mxu0 0.0
    %1889 = vmatpush1.msra.mxu0 0.0
    %1890 = vmatprep.subr.mxu0 0.0
    %1891 = vmatpush1.msra.mxu0 0.0
    %1892 = vmatprep.subr.mxu0 0.0
    %1893 = vmatpush1.msra.mxu0 0.0
    %1894 = vmatprep.subr.mxu0 0.0
    %1895 = vmatpush1.msra.mxu0 0.0
    %1896 = vmatprep.subr.mxu0 0.0
    %1897 = vmatpush1.msra.mxu0 0.0
    %1898 = vmatprep.subr.mxu0 0.0
    %1899 = vmatpush1.msra.mxu0 0.0
    %1900 = vmatprep.subr.mxu0 0.0
    %1901 = vmatpush1.msra.mxu0 0.0
    %1902 = vmatprep.subr.mxu0 0.0
    %1903 = vmatpush1.msra.mxu0 %v955
    %1904 = vmatprep.subr.mxu0 0.0
    %1905 = vmatpush2.msra.mxu0 0.0
    %1906 = vmatprep.subr.mxu0 0.0
    %1907 = vmatpush2.msra.mxu0 0.0
    %1908 = vmatprep.subr.mxu0 0.0
    %1909 = vmatpush2.msra.mxu0 0.0
    %1910 = vmatprep.subr.mxu0 0.0
    %1911 = vmatpush2.msra.mxu0 0.0
    %1912 = vmatprep.subr.mxu0 0.0
    %1913 = vmatpush2.msra.mxu0 0.0
    %1914 = vmatprep.subr.mxu0 0.0
    %1915 = vmatpush2.msra.mxu0 0.0
    %1916 = vmatprep.subr.mxu0 0.0
    %1917 = vmatpush2.msra.mxu0 0.0
    %1918 = vmatprep.subr.mxu0 0.0
    %1919 = vmatpush2.msra.mxu0 0.0
    %1920 = vmatprep.subr.mxu0 0.0
    %1921 = vmatpush2.msra.mxu0 0.0
    %1922 = vmatprep.subr.mxu0 0.0
    %1923 = vmatpush2.msra.mxu0 0.0
    %1924 = vmatprep.subr.mxu0 0.0
    %1925 = vmatpush2.msra.mxu0 0.0
    %1926 = vmatprep.subr.mxu0 0.0
    %1927 = vmatpush2.msra.mxu0 0.0
    %1928 = vmatprep.subr.mxu0 0.0
    %1929 = vmatpush2.msra.mxu0 0.0
    %1930 = vmatprep.subr.mxu0 0.0
    %1931 = vmatpush2.msra.mxu0 0.0
    %1932 = vmatprep.subr.mxu0 0.0
    %1933 = vmatpush2.msra.mxu0 0.0
    %1934 = vmatprep.subr.mxu0 0.0
    %1935 = vmatpush2.msra.mxu0 0.0
    %1936 = vmatprep.mubr.f32.mxu0 0.0
    %1937 = vmatmul.mubr.f32.gmra.mxu0 %v1870
    %v1938 = vpop.f32.mrf.mxu0
    %v1939 = vadd.f32 0.0, %v1938
    %v1940 = vpop.f32.mrf.mxu0
    %1941 = vdwg.mxu0
    %v1943 = vsel %vm1026, %v1718, 0
    %1945 = vmatprep.subr.mxu0 0.0
    %1946 = vmatpush1.msra.mxu0 0.0
    %1947 = vmatprep.subr.mxu0 0.0
    %1948 = vmatpush1.msra.mxu0 0.0
    %1949 = vmatprep.subr.mxu0 0.0
    %1950 = vmatpush1.msra.mxu0 0.0
    %1951 = vmatprep.subr.mxu0 0.0
    %1952 = vmatpush1.msra.mxu0 0.0
    %1953 = vmatprep.subr.mxu0 0.0
    %1954 = vmatpush1.msra.mxu0 0.0
    %1955 = vmatprep.subr.mxu0 0.0
    %1956 = vmatpush1.msra.mxu0 0.0
    %1957 = vmatprep.subr.mxu0 0.0
    %1958 = vmatpush1.msra.mxu0 0.0
    %1959 = vmatprep.subr.mxu0 0.0
    %1960 = vmatpush1.msra.mxu0 0.0
    %1961 = vmatprep.subr.mxu0 0.0
    %1962 = vmatpush1.msra.mxu0 0.0
    %1963 = vmatprep.subr.mxu0 0.0
    %1964 = vmatpush1.msra.mxu0 0.0
    %1965 = vmatprep.subr.mxu0 0.0
    %1966 = vmatpush1.msra.mxu0 0.0
    %1967 = vmatprep.subr.mxu0 0.0
    %1968 = vmatpush1.msra.mxu0 0.0
    %1969 = vmatprep.subr.mxu0 0.0
    %1970 = vmatpush1.msra.mxu0 0.0
    %1971 = vmatprep.subr.mxu0 0.0
    %1972 = vmatpush1.msra.mxu0 0.0
    %1973 = vmatprep.subr.mxu0 0.0
    %1974 = vmatpush1.msra.mxu0 0.0
    %1975 = vmatprep.subr.mxu0 0.0
    %1976 = vmatpush1.msra.mxu0 %v1023
    %1977 = vmatprep.subr.mxu0 0.0
    %1978 = vmatpush2.msra.mxu0 0.0
    %1979 = vmatprep.subr.mxu0 0.0
    %1980 = vmatpush2.msra.mxu0 0.0
    %1981 = vmatprep.subr.mxu0 0.0
    %1982 = vmatpush2.msra.mxu0 0.0
    %1983 = vmatprep.subr.mxu0 0.0
    %1984 = vmatpush2.msra.mxu0 0.0
    %1985 = vmatprep.subr.mxu0 0.0
    %1986 = vmatpush2.msra.mxu0 0.0
    %1987 = vmatprep.subr.mxu0 0.0
    %1988 = vmatpush2.msra.mxu0 0.0
    %1989 = vmatprep.subr.mxu0 0.0
    %1990 = vmatpush2.msra.mxu0 0.0
    %1991 = vmatprep.subr.mxu0 0.0
    %1992 = vmatpush2.msra.mxu0 0.0
    %1993 = vmatprep.subr.mxu0 0.0
    %1994 = vmatpush2.msra.mxu0 0.0
    %1995 = vmatprep.subr.mxu0 0.0
    %1996 = vmatpush2.msra.mxu0 0.0
    %1997 = vmatprep.subr.mxu0 0.0
    %1998 = vmatpush2.msra.mxu0 0.0
    %1999 = vmatprep.subr.mxu0 0.0
    %2000 = vmatpush2.msra.mxu0 0.0
    %2001 = vmatprep.subr.mxu0 0.0
    %2002 = vmatpush2.msra.mxu0 0.0
    %2003 = vmatprep.subr.mxu0 0.0
    %2004 = vmatpush2.msra.mxu0 0.0
    %2005 = vmatprep.subr.mxu0 0.0
    %2006 = vmatpush2.msra.mxu0 0.0
    %2007 = vmatprep.subr.mxu0 0.0
    %2008 = vmatpush2.msra.mxu0 0.0
    %2009 = vmatprep.mubr.f32.mxu0 0.0
    %2010 = vmatmul.mubr.f32.gmra.mxu0 %v1943
    %v2011 = vpop.f32.mrf.mxu0
    %v2012 = vadd.f32 0.0, %v2011
    %v2013 = vpop.f32.mrf.mxu0
    %2014 = vdwg.mxu0
    %v2016 = vsel %vm1026, %v1719, 0
    %2018 = vmatprep.subr.mxu0 0.0
    %2019 = vmatpush1.msra.mxu0 0.0
    %2020 = vmatprep.subr.mxu0 0.0
    %2021 = vmatpush1.msra.mxu0 0.0
    %2022 = vmatprep.subr.mxu0 0.0
    %2023 = vmatpush1.msra.mxu0 0.0
    %2024 = vmatprep.subr.mxu0 0.0
    %2025 = vmatpush1.msra.mxu0 0.0
    %2026 = vmatprep.subr.mxu0 0.0
    %2027 = vmatpush1.msra.mxu0 0.0
    %2028 = vmatprep.subr.mxu0 0.0
    %2029 = vmatpush1.msra.mxu0 0.0
    %2030 = vmatprep.subr.mxu0 0.0
    %2031 = vmatpush1.msra.mxu0 0.0
    %2032 = vmatprep.subr.mxu0 0.0
    %2033 = vmatpush1.msra.mxu0 0.0
    %2034 = vmatprep.subr.mxu0 0.0
    %2035 = vmatpush1.msra.mxu0 0.0
    %2036 = vmatprep.subr.mxu0 0.0
    %2037 = vmatpush1.msra.mxu0 0.0
    %2038 = vmatprep.subr.mxu0 0.0
    %2039 = vmatpush1.msra.mxu0 0.0
    %2040 = vmatprep.subr.mxu0 0.0
    %2041 = vmatpush1.msra.mxu0 0.0
    %2042 = vmatprep.subr.mxu0 0.0
    %2043 = vmatpush1.msra.mxu0 0.0
    %2044 = vmatprep.subr.mxu0 0.0
    %2045 = vmatpush1.msra.mxu0 0.0
    %2046 = vmatprep.subr.mxu0 0.0
    %2047 = vmatpush1.msra.mxu0 0.0
    %2048 = vmatprep.subr.mxu0 0.0
    %2049 = vmatpush1.msra.mxu0 %v956
    %2050 = vmatprep.subr.mxu0 0.0
    %2051 = vmatpush2.msra.mxu0 0.0
    %2052 = vmatprep.subr.mxu0 0.0
    %2053 = vmatpush2.msra.mxu0 0.0
    %2054 = vmatprep.subr.mxu0 0.0
    %2055 = vmatpush2.msra.mxu0 0.0
    %2056 = vmatprep.subr.mxu0 0.0
    %2057 = vmatpush2.msra.mxu0 0.0
    %2058 = vmatprep.subr.mxu0 0.0
    %2059 = vmatpush2.msra.mxu0 0.0
    %2060 = vmatprep.subr.mxu0 0.0
    %2061 = vmatpush2.msra.mxu0 0.0
    %2062 = vmatprep.subr.mxu0 0.0
    %2063 = vmatpush2.msra.mxu0 0.0
    %2064 = vmatprep.subr.mxu0 0.0
    %2065 = vmatpush2.msra.mxu0 0.0
    %2066 = vmatprep.subr.mxu0 0.0
    %2067 = vmatpush2.msra.mxu0 0.0
    %2068 = vmatprep.subr.mxu0 0.0
    %2069 = vmatpush2.msra.mxu0 0.0
    %2070 = vmatprep.subr.mxu0 0.0
    %2071 = vmatpush2.msra.mxu0 0.0
    %2072 = vmatprep.subr.mxu0 0.0
    %2073 = vmatpush2.msra.mxu0 0.0
    %2074 = vmatprep.subr.mxu0 0.0
    %2075 = vmatpush2.msra.mxu0 0.0
    %2076 = vmatprep.subr.mxu0 0.0
    %2077 = vmatpush2.msra.mxu0 0.0
    %2078 = vmatprep.subr.mxu0 0.0
    %2079 = vmatpush2.msra.mxu0 0.0
    %2080 = vmatprep.subr.mxu0 0.0
    %2081 = vmatpush2.msra.mxu0 0.0
    %2082 = vmatprep.mubr.f32.mxu0 0.0
    %2083 = vmatmul.mubr.f32.gmra.mxu0 %v2016
    %v2084 = vpop.f32.mrf.mxu0
    %v2085 = vadd.f32 0.0, %v2084
    %v2086 = vpop.f32.mrf.mxu0
    %2087 = vdwg.mxu0
    %v2089 = vsel %vm1026, %v1720, 0
    %2091 = vmatprep.subr.mxu0 0.0
    %2092 = vmatpush1.msra.mxu0 0.0
    %2093 = vmatprep.subr.mxu0 0.0
    %2094 = vmatpush1.msra.mxu0 0.0
    %2095 = vmatprep.subr.mxu0 0.0
    %2096 = vmatpush1.msra.mxu0 0.0
    %2097 = vmatprep.subr.mxu0 0.0
    %2098 = vmatpush1.msra.mxu0 0.0
    %2099 = vmatprep.subr.mxu0 0.0
    %2100 = vmatpush1.msra.mxu0 0.0
    %2101 = vmatprep.subr.mxu0 0.0
    %2102 = vmatpush1.msra.mxu0 0.0
    %2103 = vmatprep.subr.mxu0 0.0
    %2104 = vmatpush1.msra.mxu0 0.0
    %2105 = vmatprep.subr.mxu0 0.0
    %2106 = vmatpush1.msra.mxu0 0.0
    %2107 = vmatprep.subr.mxu0 0.0
    %2108 = vmatpush1.msra.mxu0 0.0
    %2109 = vmatprep.subr.mxu0 0.0
    %2110 = vmatpush1.msra.mxu0 0.0
    %2111 = vmatprep.subr.mxu0 0.0
    %2112 = vmatpush1.msra.mxu0 0.0
    %2113 = vmatprep.subr.mxu0 0.0
    %2114 = vmatpush1.msra.mxu0 0.0
    %2115 = vmatprep.subr.mxu0 0.0
    %2116 = vmatpush1.msra.mxu0 0.0
    %2117 = vmatprep.subr.mxu0 0.0
    %2118 = vmatpush1.msra.mxu0 0.0
    %2119 = vmatprep.subr.mxu0 0.0
    %2120 = vmatpush1.msra.mxu0 0.0
    %2121 = vmatprep.subr.mxu0 0.0
    %2122 = vmatpush1.msra.mxu0 %v1024
    %2123 = vmatprep.subr.mxu0 0.0
    %2124 = vmatpush2.msra.mxu0 0.0
    %2125 = vmatprep.subr.mxu0 0.0
    %2126 = vmatpush2.msra.mxu0 0.0
    %2127 = vmatprep.subr.mxu0 0.0
    %2128 = vmatpush2.msra.mxu0 0.0
    %2129 = vmatprep.subr.mxu0 0.0
    %2130 = vmatpush2.msra.mxu0 0.0
    %2131 = vmatprep.subr.mxu0 0.0
    %2132 = vmatpush2.msra.mxu0 0.0
    %2133 = vmatprep.subr.mxu0 0.0
    %2134 = vmatpush2.msra.mxu0 0.0
    %2135 = vmatprep.subr.mxu0 0.0
    %2136 = vmatpush2.msra.mxu0 0.0
    %2137 = vmatprep.subr.mxu0 0.0
    %2138 = vmatpush2.msra.mxu0 0.0
    %2139 = vmatprep.subr.mxu0 0.0
    %2140 = vmatpush2.msra.mxu0 0.0
    %2141 = vmatprep.subr.mxu0 0.0
    %2142 = vmatpush2.msra.mxu0 0.0
    %2143 = vmatprep.subr.mxu0 0.0
    %2144 = vmatpush2.msra.mxu0 0.0
    %2145 = vmatprep.subr.mxu0 0.0
    %2146 = vmatpush2.msra.mxu0 0.0
    %2147 = vmatprep.subr.mxu0 0.0
    %2148 = vmatpush2.msra.mxu0 0.0
    %2149 = vmatprep.subr.mxu0 0.0
    %2150 = vmatpush2.msra.mxu0 0.0
    %2151 = vmatprep.subr.mxu0 0.0
    %2152 = vmatpush2.msra.mxu0 0.0
    %2153 = vmatprep.subr.mxu0 0.0
    %2154 = vmatpush2.msra.mxu0 0.0
    %2155 = vmatprep.mubr.f32.mxu0 0.0
    %2156 = vmatmul.mubr.f32.gmra.mxu0 %v2089
    %v2157 = vpop.f32.mrf.mxu0
    %v2158 = vadd.f32 0.0, %v2157
    %v2159 = vpop.f32.mrf.mxu0
    %2160 = vdwg.mxu0
    %v2162 = vsel %vm1026, %v1721, 0
    %2164 = vmatprep.subr.mxu0 0.0
    %2165 = vmatpush1.msra.mxu0 0.0
    %2166 = vmatprep.subr.mxu0 0.0
    %2167 = vmatpush1.msra.mxu0 0.0
    %2168 = vmatprep.subr.mxu0 0.0
    %2169 = vmatpush1.msra.mxu0 0.0
    %2170 = vmatprep.subr.mxu0 0.0
    %2171 = vmatpush1.msra.mxu0 0.0
    %2172 = vmatprep.subr.mxu0 0.0
    %2173 = vmatpush1.msra.mxu0 0.0
    %2174 = vmatprep.subr.mxu0 0.0
    %2175 = vmatpush1.msra.mxu0 0.0
    %2176 = vmatprep.subr.mxu0 0.0
    %2177 = vmatpush1.msra.mxu0 0.0
    %2178 = vmatprep.subr.mxu0 0.0
    %2179 = vmatpush1.msra.mxu0 0.0
    %2180 = vmatprep.subr.mxu0 0.0
    %2181 = vmatpush1.msra.mxu0 0.0
    %2182 = vmatprep.subr.mxu0 0.0
    %2183 = vmatpush1.msra.mxu0 0.0
    %2184 = vmatprep.subr.mxu0 0.0
    %2185 = vmatpush1.msra.mxu0 0.0
    %2186 = vmatprep.subr.mxu0 0.0
    %2187 = vmatpush1.msra.mxu0 0.0
    %2188 = vmatprep.subr.mxu0 0.0
    %2189 = vmatpush1.msra.mxu0 0.0
    %2190 = vmatprep.subr.mxu0 0.0
    %2191 = vmatpush1.msra.mxu0 0.0
    %2192 = vmatprep.subr.mxu0 0.0
    %2193 = vmatpush1.msra.mxu0 0.0
    %2194 = vmatprep.subr.mxu0 0.0
    %2195 = vmatpush1.msra.mxu0 %v957
    %2196 = vmatprep.subr.mxu0 0.0
    %2197 = vmatpush2.msra.mxu0 0.0
    %2198 = vmatprep.subr.mxu0 0.0
    %2199 = vmatpush2.msra.mxu0 0.0
    %2200 = vmatprep.subr.mxu0 0.0
    %2201 = vmatpush2.msra.mxu0 0.0
    %2202 = vmatprep.subr.mxu0 0.0
    %2203 = vmatpush2.msra.mxu0 0.0
    %2204 = vmatprep.subr.mxu0 0.0
    %2205 = vmatpush2.msra.mxu0 0.0
    %2206 = vmatprep.subr.mxu0 0.0
    %2207 = vmatpush2.msra.mxu0 0.0
    %2208 = vmatprep.subr.mxu0 0.0
    %2209 = vmatpush2.msra.mxu0 0.0
    %2210 = vmatprep.subr.mxu0 0.0
    %2211 = vmatpush2.msra.mxu0 0.0
    %2212 = vmatprep.subr.mxu0 0.0
    %2213 = vmatpush2.msra.mxu0 0.0
    %2214 = vmatprep.subr.mxu0 0.0
    %2215 = vmatpush2.msra.mxu0 0.0
    %2216 = vmatprep.subr.mxu0 0.0
    %2217 = vmatpush2.msra.mxu0 0.0
    %2218 = vmatprep.subr.mxu0 0.0
    %2219 = vmatpush2.msra.mxu0 0.0
    %2220 = vmatprep.subr.mxu0 0.0
    %2221 = vmatpush2.msra.mxu0 0.0
    %2222 = vmatprep.subr.mxu0 0.0
    %2223 = vmatpush2.msra.mxu0 0.0
    %2224 = vmatprep.subr.mxu0 0.0
    %2225 = vmatpush2.msra.mxu0 0.0
    %2226 = vmatprep.subr.mxu0 0.0
    %2227 = vmatpush2.msra.mxu0 0.0
    %2228 = vmatprep.mubr.f32.mxu0 0.0
    %2229 = vmatmul.mubr.f32.gmra.mxu0 %v2162
    %v2230 = vpop.f32.mrf.mxu0
    %v2231 = vadd.f32 0.0, %v2230
    %v2232 = vpop.f32.mrf.mxu0
    %2233 = vdwg.mxu0
    %v2235 = vsel %vm1026, %v1722, 0
    %2237 = vmatprep.subr.mxu0 0.0
    %2238 = vmatpush1.msra.mxu0 0.0
    %2239 = vmatprep.subr.mxu0 0.0
    %2240 = vmatpush1.msra.mxu0 0.0
    %2241 = vmatprep.subr.mxu0 0.0
    %2242 = vmatpush1.msra.mxu0 0.0
    %2243 = vmatprep.subr.mxu0 0.0
    %2244 = vmatpush1.msra.mxu0 0.0
    %2245 = vmatprep.subr.mxu0 0.0
    %2246 = vmatpush1.msra.mxu0 0.0
    %2247 = vmatprep.subr.mxu0 0.0
    %2248 = vmatpush1.msra.mxu0 0.0
    %2249 = vmatprep.subr.mxu0 0.0
    %2250 = vmatpush1.msra.mxu0 0.0
    %2251 = vmatprep.subr.mxu0 0.0
    %2252 = vmatpush1.msra.mxu0 0.0
    %2253 = vmatprep.subr.mxu0 0.0
    %2254 = vmatpush1.msra.mxu0 0.0
    %2255 = vmatprep.subr.mxu0 0.0
    %2256 = vmatpush1.msra.mxu0 0.0
    %2257 = vmatprep.subr.mxu0 0.0
    %2258 = vmatpush1.msra.mxu0 0.0
    %2259 = vmatprep.subr.mxu0 0.0
    %2260 = vmatpush1.msra.mxu0 0.0
    %2261 = vmatprep.subr.mxu0 0.0
    %2262 = vmatpush1.msra.mxu0 0.0
    %2263 = vmatprep.subr.mxu0 0.0
    %2264 = vmatpush1.msra.mxu0 0.0
    %2265 = vmatprep.subr.mxu0 0.0
    %2266 = vmatpush1.msra.mxu0 0.0
    %2267 = vmatprep.subr.mxu0 0.0
    %2268 = vmatpush1.msra.mxu0 %v1025
    %2269 = vmatprep.subr.mxu0 0.0
    %2270 = vmatpush2.msra.mxu0 0.0
    %2271 = vmatprep.subr.mxu0 0.0
    %2272 = vmatpush2.msra.mxu0 0.0
    %2273 = vmatprep.subr.mxu0 0.0
    %2274 = vmatpush2.msra.mxu0 0.0
    %2275 = vmatprep.subr.mxu0 0.0
    %2276 = vmatpush2.msra.mxu0 0.0
    %2277 = vmatprep.subr.mxu0 0.0
    %2278 = vmatpush2.msra.mxu0 0.0
    %2279 = vmatprep.subr.mxu0 0.0
    %2280 = vmatpush2.msra.mxu0 0.0
    %2281 = vmatprep.subr.mxu0 0.0
    %2282 = vmatpush2.msra.mxu0 0.0
    %2283 = vmatprep.subr.mxu0 0.0
    %2284 = vmatpush2.msra.mxu0 0.0
    %2285 = vmatprep.subr.mxu0 0.0
    %2286 = vmatpush2.msra.mxu0 0.0
    %2287 = vmatprep.subr.mxu0 0.0
    %2288 = vmatpush2.msra.mxu0 0.0
    %2289 = vmatprep.subr.mxu0 0.0
    %2290 = vmatpush2.msra.mxu0 0.0
    %2291 = vmatprep.subr.mxu0 0.0
    %2292 = vmatpush2.msra.mxu0 0.0
    %2293 = vmatprep.subr.mxu0 0.0
    %2294 = vmatpush2.msra.mxu0 0.0
    %2295 = vmatprep.subr.mxu0 0.0
    %2296 = vmatpush2.msra.mxu0 0.0
    %2297 = vmatprep.subr.mxu0 0.0
    %2298 = vmatpush2.msra.mxu0 0.0
    %2299 = vmatprep.subr.mxu0 0.0
    %2300 = vmatpush2.msra.mxu0 0.0
    %2301 = vmatprep.mubr.f32.mxu0 0.0
    %2302 = vmatmul.mubr.f32.gmra.mxu0 %v2235
    %v2303 = vpop.f32.mrf.mxu0
    %v2304 = vadd.f32 0.0, %v2303
    %v2305 = vpop.f32.mrf.mxu0
    %2306 = vdwg.mxu0
    %v2307 = vcombine.low %v1793, %v2085
    %v2308 = vcombine.high %v1793, %v2085
    %v2310 = vunpack.c.l.s4 1983009808
    %v2311 = vunpack.c.0.s8 %v2310
    %v2312 = vlaneseq
    %v2313 = vshrl.u32 %v2312, 7
    %v2314 = vsub.s32 %v2311, %v2313
    %v2315 = vrot.slane %v2307, %v2314
    %v2317 = vunpack.c.l.s4 1983009808
    %v2318 = vunpack.c.0.s8 %v2317
    %v2319 = vlaneseq
    %v2320 = vshrl.u32 %v2319, 7
    %v2321 = vsub.s32 %v2318, %v2320
    %v2322 = vrot.slane %v2308, %v2321
    %v2323 = vcombine.low %v1939, %v2231
    %v2324 = vcombine.high %v1939, %v2231
    %v2326 = vunpack.c.l.s4 1983009808
    %v2327 = vunpack.c.0.s8 %v2326
    %v2328 = vlaneseq
    %v2329 = vshrl.u32 %v2328, 7
    %v2330 = vsub.s32 %v2327, %v2329
    %v2331 = vrot.slane %v2323, %v2330
    %v2333 = vunpack.c.l.s4 1983009808
    %v2334 = vunpack.c.0.s8 %v2333
    %v2335 = vlaneseq
    %v2336 = vshrl.u32 %v2335, 7
    %v2337 = vsub.s32 %v2334, %v2336
    %v2338 = vrot.slane %v2324, %v2337
    %v2339 = vcombine.low %v2315, %v2331
    %v2340 = vcombine.high %v2315, %v2331
    %v2342 = vunpack.c.l.s4 1934713408
    %v2343 = vunpack.c.0.s8 %v2342
    %v2344 = vlaneseq
    %v2345 = vshrl.u32 %v2344, 7
    %v2346 = vsub.s32 %v2343, %v2345
    %v2347 = vrot.slane %v2339, %v2346
    %v2349 = vunpack.c.l.s4 1934713408
    %v2350 = vunpack.c.0.s8 %v2349
    %v2351 = vlaneseq
    %v2352 = vshrl.u32 %v2351, 7
    %v2353 = vsub.s32 %v2350, %v2352
    %v2354 = vrot.slane %v2340, %v2353
    %v2355 = vcombine.low %v2322, %v2338
    %v2356 = vcombine.high %v2322, %v2338
    %v2358 = vunpack.c.l.s4 1934713408
    %v2359 = vunpack.c.0.s8 %v2358
    %v2360 = vlaneseq
    %v2361 = vshrl.u32 %v2360, 7
    %v2362 = vsub.s32 %v2359, %v2361
    %v2363 = vrot.slane %v2355, %v2362
    %v2365 = vunpack.c.l.s4 1934713408
    %v2366 = vunpack.c.0.s8 %v2365
    %v2367 = vlaneseq
    %v2368 = vshrl.u32 %v2367, 7
    %v2369 = vsub.s32 %v2366, %v2368
    %v2370 = vrot.slane %v2356, %v2369
    %v2371 = vcombine.high %v2347, 0.0
    %v2372 = vcombine.high %v2354, 0.0
    %v2373 = vcombine.high %v2363, 0.0
    %v2374 = vcombine.high %v2370, 0.0
    %v2375 = vcombine.low %v1866, %v2158
    %v2376 = vcombine.high %v1866, %v2158
    %v2378 = vunpack.c.l.s4 1983009808
    %v2379 = vunpack.c.0.s8 %v2378
    %v2380 = vlaneseq
    %v2381 = vshrl.u32 %v2380, 7
    %v2382 = vsub.s32 %v2379, %v2381
    %v2383 = vrot.slane %v2375, %v2382
    %v2385 = vunpack.c.l.s4 1983009808
    %v2386 = vunpack.c.0.s8 %v2385
    %v2387 = vlaneseq
    %v2388 = vshrl.u32 %v2387, 7
    %v2389 = vsub.s32 %v2386, %v2388
    %v2390 = vrot.slane %v2376, %v2389
    %v2391 = vcombine.low %v2012, %v2304
    %v2392 = vcombine.high %v2012, %v2304
    %v2394 = vunpack.c.l.s4 1983009808
    %v2395 = vunpack.c.0.s8 %v2394
    %v2396 = vlaneseq
    %v2397 = vshrl.u32 %v2396, 7
    %v2398 = vsub.s32 %v2395, %v2397
    %v2399 = vrot.slane %v2391, %v2398
    %v2401 = vunpack.c.l.s4 1983009808
    %v2402 = vunpack.c.0.s8 %v2401
    %v2403 = vlaneseq
    %v2404 = vshrl.u32 %v2403, 7
    %v2405 = vsub.s32 %v2402, %v2404
    %v2406 = vrot.slane %v2392, %v2405
    %v2407 = vcombine.low %v2383, %v2399
    %v2408 = vcombine.high %v2383, %v2399
    %v2410 = vunpack.c.l.s4 1934713408
    %v2411 = vunpack.c.0.s8 %v2410
    %v2412 = vlaneseq
    %v2413 = vshrl.u32 %v2412, 7
    %v2414 = vsub.s32 %v2411, %v2413
    %v2415 = vrot.slane %v2407, %v2414
    %v2417 = vunpack.c.l.s4 1934713408
    %v2418 = vunpack.c.0.s8 %v2417
    %v2419 = vlaneseq
    %v2420 = vshrl.u32 %v2419, 7
    %v2421 = vsub.s32 %v2418, %v2420
    %v2422 = vrot.slane %v2408, %v2421
    %v2423 = vcombine.low %v2390, %v2406
    %v2424 = vcombine.high %v2390, %v2406
    %v2426 = vunpack.c.l.s4 1934713408
    %v2427 = vunpack.c.0.s8 %v2426
    %v2428 = vlaneseq
    %v2429 = vshrl.u32 %v2428, 7
    %v2430 = vsub.s32 %v2427, %v2429
    %v2431 = vrot.slane %v2423, %v2430
    %v2433 = vunpack.c.l.s4 1934713408
    %v2434 = vunpack.c.0.s8 %v2433
    %v2435 = vlaneseq
    %v2436 = vshrl.u32 %v2435, 7
    %v2437 = vsub.s32 %v2434, %v2436
    %v2438 = vrot.slane %v2424, %v2437
    %v2439 = vcombine.high %v2415, 0.0
    %v2440 = vcombine.high %v2422, 0.0
    %v2441 = vcombine.high %v2431, 0.0
    %v2442 = vcombine.high %v2438, 0.0
    %v2443 = vcombine.low %v2347, %v2354
    %v2445 = vunpack.c.l.s4 1983009808
    %v2446 = vunpack.c.0.s8 %v2445
    %v2447 = vlaneseq
    %v2448 = vshrl.u32 %v2447, 7
    %v2449 = vsub.s32 %v2446, %v2448
    %v2450 = vrot.slane %v2443, %v2449
    %v2451 = vcombine.low %v2371, %v2372
    %v2453 = vunpack.c.l.s4 1983009808
    %v2454 = vunpack.c.0.s8 %v2453
    %v2455 = vlaneseq
    %v2456 = vshrl.u32 %v2455, 7
    %v2457 = vsub.s32 %v2454, %v2456
    %v2458 = vrot.slane %v2451, %v2457
    %v2459 = vcombine.low %v2363, %v2370
    %v2461 = vunpack.c.l.s4 1983009808
    %v2462 = vunpack.c.0.s8 %v2461
    %v2463 = vlaneseq
    %v2464 = vshrl.u32 %v2463, 7
    %v2465 = vsub.s32 %v2462, %v2464
    %v2466 = vrot.slane %v2459, %v2465
    %v2467 = vcombine.low %v2373, %v2374
    %v2469 = vunpack.c.l.s4 1983009808
    %v2470 = vunpack.c.0.s8 %v2469
    %v2471 = vlaneseq
    %v2472 = vshrl.u32 %v2471, 7
    %v2473 = vsub.s32 %v2470, %v2472
    %v2474 = vrot.slane %v2467, %v2473
    %v2475 = vcombine.low %v2450, %v2458
    %v2476 = vcombine.high %v2450, %v2458
    %v2478 = vunpack.c.l.s4 1934713408
    %v2479 = vunpack.c.0.s8 %v2478
    %v2480 = vlaneseq
    %v2481 = vshrl.u32 %v2480, 7
    %v2482 = vsub.s32 %v2479, %v2481
    %v2483 = vrot.slane %v2475, %v2482
    %v2485 = vunpack.c.l.s4 1934713408
    %v2486 = vunpack.c.0.s8 %v2485
    %v2487 = vlaneseq
    %v2488 = vshrl.u32 %v2487, 7
    %v2489 = vsub.s32 %v2486, %v2488
    %v2490 = vrot.slane %v2476, %v2489
    %v2491 = vcombine.low %v2466, %v2474
    %v2492 = vcombine.high %v2466, %v2474
    %v2494 = vunpack.c.l.s4 1934713408
    %v2495 = vunpack.c.0.s8 %v2494
    %v2496 = vlaneseq
    %v2497 = vshrl.u32 %v2496, 7
    %v2498 = vsub.s32 %v2495, %v2497
    %v2499 = vrot.slane %v2491, %v2498
    %v2501 = vunpack.c.l.s4 1934713408
    %v2502 = vunpack.c.0.s8 %v2501
    %v2503 = vlaneseq
    %v2504 = vshrl.u32 %v2503, 7
    %v2505 = vsub.s32 %v2502, %v2504
    %v2506 = vrot.slane %v2492, %v2505
    %v2507 = vcombine.low %v2483, %v2499
    %v2508 = vcombine.high %v2483, %v2499
    %v2509 = vcombine.low %v2490, %v2506
    %v2510 = vcombine.high %v2490, %v2506
    %v2511 = vcombine.low %v2415, %v2422
    %v2513 = vunpack.c.l.s4 1983009808
    %v2514 = vunpack.c.0.s8 %v2513
    %v2515 = vlaneseq
    %v2516 = vshrl.u32 %v2515, 7
    %v2517 = vsub.s32 %v2514, %v2516
    %v2518 = vrot.slane %v2511, %v2517
    %v2519 = vcombine.low %v2439, %v2440
    %v2521 = vunpack.c.l.s4 1983009808
    %v2522 = vunpack.c.0.s8 %v2521
    %v2523 = vlaneseq
    %v2524 = vshrl.u32 %v2523, 7
    %v2525 = vsub.s32 %v2522, %v2524
    %v2526 = vrot.slane %v2519, %v2525
    %v2527 = vcombine.low %v2431, %v2438
    %v2529 = vunpack.c.l.s4 1983009808
    %v2530 = vunpack.c.0.s8 %v2529
    %v2531 = vlaneseq
    %v2532 = vshrl.u32 %v2531, 7
    %v2533 = vsub.s32 %v2530, %v2532
    %v2534 = vrot.slane %v2527, %v2533
    %v2535 = vcombine.low %v2441, %v2442
    %v2537 = vunpack.c.l.s4 1983009808
    %v2538 = vunpack.c.0.s8 %v2537
    %v2539 = vlaneseq
    %v2540 = vshrl.u32 %v2539, 7
    %v2541 = vsub.s32 %v2538, %v2540
    %v2542 = vrot.slane %v2535, %v2541
    %v2543 = vcombine.low %v2518, %v2526
    %v2544 = vcombine.high %v2518, %v2526
    %v2546 = vunpack.c.l.s4 1934713408
    %v2547 = vunpack.c.0.s8 %v2546
    %v2548 = vlaneseq
    %v2549 = vshrl.u32 %v2548, 7
    %v2550 = vsub.s32 %v2547, %v2549
    %v2551 = vrot.slane %v2543, %v2550
    %v2553 = vunpack.c.l.s4 1934713408
    %v2554 = vunpack.c.0.s8 %v2553
    %v2555 = vlaneseq
    %v2556 = vshrl.u32 %v2555, 7
    %v2557 = vsub.s32 %v2554, %v2556
    %v2558 = vrot.slane %v2544, %v2557
    %v2559 = vcombine.low %v2534, %v2542
    %v2560 = vcombine.high %v2534, %v2542
    %v2562 = vunpack.c.l.s4 1934713408
    %v2563 = vunpack.c.0.s8 %v2562
    %v2564 = vlaneseq
    %v2565 = vshrl.u32 %v2564, 7
    %v2566 = vsub.s32 %v2563, %v2565
    %v2567 = vrot.slane %v2559, %v2566
    %v2569 = vunpack.c.l.s4 1934713408
    %v2570 = vunpack.c.0.s8 %v2569
    %v2571 = vlaneseq
    %v2572 = vshrl.u32 %v2571, 7
    %v2573 = vsub.s32 %v2570, %v2572
    %v2574 = vrot.slane %v2560, %v2573
    %v2575 = vcombine.low %v2551, %v2567
    %v2576 = vcombine.high %v2551, %v2567
    %v2577 = vcombine.low %v2558, %v2574
    %v2578 = vcombine.high %v2558, %v2574
    %2581 = vrot.lane.b32.xlu0 %v2508, 8
    %v2582 = vpop.permute.xlu0 %2581
    %2583 = vrot.lane.b32.xlu0 %v2576, 8
    %v2584 = vpop.permute.xlu0 %2583
    %2589 = vrot.lane.b32.xlu0 %v2509, 16
    %v2590 = vpop.permute.xlu0 %2589
    %2591 = vrot.lane.b32.xlu0 %v2577, 16
    %v2592 = vpop.permute.xlu0 %2591
    %2597 = vrot.lane.b32.xlu0 %v2510, 24
    %v2598 = vpop.permute.xlu0 %2597
    %2599 = vrot.lane.b32.xlu0 %v2578, 24
    %v2600 = vpop.permute.xlu0 %2599
    %v2603 = vsel %vm1026, %v2507, %v2582
    %v2604 = vsel %vm1026, %v2575, %v2584
    %vm2605 = vcmask 130048
    %v2606 = vsel %vm2605, %v2603, %v2590
    %v2607 = vsel %vm2605, %v2604, %v2592
    %vm2608 = vcmask 195584
    %v2609 = vsel %vm2608, %v2606, %v2598
    %v2610 = vsel %vm2608, %v2607, %v2600
    %v2611 = vld [vmem:[%s3] sm:$0xff]
    %v2612 = vld [vmem:[%s3 + $0x8] sm:$0xff]
    %v2613 = vld [vmem:[%s3 + $0x10] sm:$0xff]
    %v2614 = vld [vmem:[%s3 + $0x18] sm:$0xff]
    %v2616 = vsel %vm60, %v2609, 0
    %v2619 = vsel %vm60, %v2610, 0
    %2621 = vmatprep.subr.mxu0 0.0
    %2622 = vmatpush1.msra.mxu0 0.0
    %2623 = vmatprep.subr.mxu0 0.0
    %2624 = vmatpush1.msra.mxu0 0.0
    %2625 = vmatprep.subr.mxu0 0.0
    %2626 = vmatpush1.msra.mxu0 0.0
    %2627 = vmatprep.subr.mxu0 0.0
    %2628 = vmatpush1.msra.mxu0 0.0
    %2629 = vmatprep.subr.mxu0 0.0
    %2630 = vmatpush1.msra.mxu0 0.0
    %2631 = vmatprep.subr.mxu0 0.0
    %2632 = vmatpush1.msra.mxu0 0.0
    %2633 = vmatprep.subr.mxu0 0.0
    %2634 = vmatpush1.msra.mxu0 0.0
    %2635 = vmatprep.subr.mxu0 0.0
    %2636 = vmatpush1.msra.mxu0 0.0
    %2637 = vmatprep.subr.mxu0 0.0
    %2638 = vmatpush1.msra.mxu0 0.0
    %2639 = vmatprep.subr.mxu0 0.0
    %2640 = vmatpush1.msra.mxu0 0.0
    %2641 = vmatprep.subr.mxu0 0.0
    %2642 = vmatpush1.msra.mxu0 0.0
    %2643 = vmatprep.subr.mxu0 0.0
    %2644 = vmatpush1.msra.mxu0 0.0
    %2645 = vmatprep.subr.mxu0 0.0
    %2646 = vmatpush1.msra.mxu0 %v2614
    %2647 = vmatprep.subr.mxu0 0.0
    %2648 = vmatpush1.msra.mxu0 %v2613
    %2649 = vmatprep.subr.mxu0 0.0
    %2650 = vmatpush1.msra.mxu0 %v2612
    %2651 = vmatprep.subr.mxu0 0.0
    %2652 = vmatpush1.msra.mxu0 %v2611
    %2653 = vmatprep.subr.mxu0 0.0
    %2654 = vmatpush2.msra.mxu0 0.0
    %2655 = vmatprep.subr.mxu0 0.0
    %2656 = vmatpush2.msra.mxu0 0.0
    %2657 = vmatprep.subr.mxu0 0.0
    %2658 = vmatpush2.msra.mxu0 0.0
    %2659 = vmatprep.subr.mxu0 0.0
    %2660 = vmatpush2.msra.mxu0 0.0
    %2661 = vmatprep.subr.mxu0 0.0
    %2662 = vmatpush2.msra.mxu0 0.0
    %2663 = vmatprep.subr.mxu0 0.0
    %2664 = vmatpush2.msra.mxu0 0.0
    %2665 = vmatprep.subr.mxu0 0.0
    %2666 = vmatpush2.msra.mxu0 0.0
    %2667 = vmatprep.subr.mxu0 0.0
    %2668 = vmatpush2.msra.mxu0 0.0
    %2669 = vmatprep.subr.mxu0 0.0
    %2670 = vmatpush2.msra.mxu0 0.0
    %2671 = vmatprep.subr.mxu0 0.0
    %2672 = vmatpush2.msra.mxu0 0.0
    %2673 = vmatprep.subr.mxu0 0.0
    %2674 = vmatpush2.msra.mxu0 0.0
    %2675 = vmatprep.subr.mxu0 0.0
    %2676 = vmatpush2.msra.mxu0 0.0
    %2677 = vmatprep.subr.mxu0 0.0
    %2678 = vmatpush2.msra.mxu0 0.0
    %2679 = vmatprep.subr.mxu0 0.0
    %2680 = vmatpush2.msra.mxu0 0.0
    %2681 = vmatprep.subr.mxu0 0.0
    %2682 = vmatpush2.msra.mxu0 0.0
    %2683 = vmatprep.subr.mxu0 0.0
    %2684 = vmatpush2.msra.mxu0 0.0
    %2685 = vmatprep.mubr.f32.mxu0 0.0
    %2686 = vmatmul.mubr.f32.gmra.mxu0 %v2616
    %v2687 = vpop.f32.mrf.mxu0
    %v2688 = vadd.f32 0.0, %v2687
    %v2689 = vpop.f32.mrf.mxu0
    %2690 = vmatprep.mubr.f32.mxu0 0.0
    %2691 = vmatmul.mubr.f32.gmra.mxu0 %v2619
    %v2692 = vpop.f32.mrf.mxu0
    %v2693 = vadd.f32 0.0, %v2692
    %v2694 = vpop.f32.mrf.mxu0
    %2695 = vdwg.mxu0
    %v2696 = vadd.f32 %v47, %v2688
    %v2697 = vadd.f32 %v48, %v2693
    %v2698 = vld [vmem:[%s4] sm:$0x1]
    %v2700 = vlaneseq
    %v2701 = vshrl.u32 %v2700, 7
    %v2702 = vsub.s32 0, %v2701
    %v2703 = vrot.slane %v2698, %v2702
    %v2705 = vadd.f32 %v2696, %v2703
    %v2706 = vadd.f32 %v2697, %v2703
    %v2707 = vld [vmem:[%s9] sm:$0x1]
    %v2708 = vld [vmem:[%s10] sm:$0x1]
    %v2709 = vsel %vm60, %v2705, 0.0
    %2710 = vadd.xlane.f32.xlu0 %v2709
    %v2711 = vpop.xlane.xlu0 %2710
    %v2712 = vsel %vm60, %v2706, 0.0
    %2713 = vadd.xlane.f32.xlu0 %v2712
    %v2714 = vpop.xlane.xlu0 %2713
    %v2715 = vrcp.pop 32.0
    %v2716 = vmul.f32 %v2711, %v2715
    %v2717 = vmul.f32 %v2714, %v2715
    %v2718 = vsub.f32 %v2705, %v2716
    %v2719 = vsub.f32 %v2706, %v2717
    %v2720 = vmul.f32 %v2718, %v2718
    %v2721 = vmul.f32 %v2719, %v2719
    %v2722 = vsel %vm60, %v2720, 0.0
    %2723 = vadd.xlane.f32.xlu0 %v2722
    %v2724 = vpop.xlane.xlu0 %2723
    %v2725 = vsel %vm60, %v2721, 0.0
    %2726 = vadd.xlane.f32.xlu0 %v2725
    %v2727 = vpop.xlane.xlu0 %2726
    %v2728 = vmul.f32 %v2724, %v2715
    %v2729 = vmul.f32 %v2727, %v2715
    %v2730 = vadd.f32 %v2728, 1e-05
    %v2731 = vadd.f32 %v2729, 1e-05
    %v2732 = vrsqrt.pop %v2730
    %v2733 = vrsqrt.pop %v2731
    %v2734 = vmul.f32 %v2718, %v2732
    %v2735 = vmul.f32 %v2719, %v2733
    %v2737 = vlaneseq
    %v2738 = vshrl.u32 %v2737, 7
    %v2739 = vsub.s32 0, %v2738
    %v2740 = vrot.slane %v2707, %v2739
    %v2742 = vmul.f32 %v2734, %v2740
    %v2743 = vmul.f32 %v2735, %v2740
    %v2745 = vlaneseq
    %v2746 = vshrl.u32 %v2745, 7
    %v2747 = vsub.s32 0, %v2746
    %v2748 = vrot.slane %v2708, %v2747
    %v2750 = vadd.f32 %v2742, %v2748
    %v2751 = vadd.f32 %v2743, %v2748
    %v2752 = vld [vmem:[%s8] sm:$0x1]
    %v2754 = vlaneseq
    %v2755 = vshrl.u32 %v2754, 7
    %v2756 = vsub.s32 0, %v2755
    %v2757 = vrot.slane %v2752, %v2756
    %v2759 = vadd.f32 %v2757, 0.0
    %v2760 = vld [vmem:[%s5] sm:$0xff]
    %v2761 = vld [vmem:[%s5 + $0x8] sm:$0xff]
    %v2762 = vld [vmem:[%s5 + $0x10] sm:$0xff]
    %v2763 = vld [vmem:[%s5 + $0x18] sm:$0xff]
    %v2764 = vld [vmem:[%s6] sm:$0x1]
    %v2766 = vlaneseq
    %v2767 = vshrl.u32 %v2766, 7
    %v2768 = vsub.s32 0, %v2767
    %v2769 = vrot.slane %v2764, %v2768
    %v2772 = vsel %vm60, %v2750, 0
    %v2775 = vsel %vm60, %v2751, 0
    %2777 = vmatprep.subr.mxu0 0.0
    %2778 = vmatpush1.msra.mxu0 0.0
    %2779 = vmatprep.subr.mxu0 0.0
    %2780 = vmatpush1.msra.mxu0 0.0
    %2781 = vmatprep.subr.mxu0 0.0
    %2782 = vmatpush1.msra.mxu0 0.0
    %2783 = vmatprep.subr.mxu0 0.0
    %2784 = vmatpush1.msra.mxu0 0.0
    %2785 = vmatprep.subr.mxu0 0.0
    %2786 = vmatpush1.msra.mxu0 0.0
    %2787 = vmatprep.subr.mxu0 0.0
    %2788 = vmatpush1.msra.mxu0 0.0
    %2789 = vmatprep.subr.mxu0 0.0
    %2790 = vmatpush1.msra.mxu0 0.0
    %2791 = vmatprep.subr.mxu0 0.0
    %2792 = vmatpush1.msra.mxu0 0.0
    %2793 = vmatprep.subr.mxu0 0.0
    %2794 = vmatpush1.msra.mxu0 0.0
    %2795 = vmatprep.subr.mxu0 0.0
    %2796 = vmatpush1.msra.mxu0 0.0
    %2797 = vmatprep.subr.mxu0 0.0
    %2798 = vmatpush1.msra.mxu0 0.0
    %2799 = vmatprep.subr.mxu0 0.0
    %2800 = vmatpush1.msra.mxu0 0.0
    %2801 = vmatprep.subr.mxu0 0.0
    %2802 = vmatpush1.msra.mxu0 %v2763
    %2803 = vmatprep.subr.mxu0 0.0
    %2804 = vmatpush1.msra.mxu0 %v2762
    %2805 = vmatprep.subr.mxu0 0.0
    %2806 = vmatpush1.msra.mxu0 %v2761
    %2807 = vmatprep.subr.mxu0 0.0
    %2808 = vmatpush1.msra.mxu0 %v2760
    %2809 = vmatprep.subr.mxu0 0.0
    %2810 = vmatpush2.msra.mxu0 0.0
    %2811 = vmatprep.subr.mxu0 0.0
    %2812 = vmatpush2.msra.mxu0 0.0
    %2813 = vmatprep.subr.mxu0 0.0
    %2814 = vmatpush2.msra.mxu0 0.0
    %2815 = vmatprep.subr.mxu0 0.0
    %2816 = vmatpush2.msra.mxu0 0.0
    %2817 = vmatprep.subr.mxu0 0.0
    %2818 = vmatpush2.msra.mxu0 0.0
    %2819 = vmatprep.subr.mxu0 0.0
    %2820 = vmatpush2.msra.mxu0 0.0
    %2821 = vmatprep.subr.mxu0 0.0
    %2822 = vmatpush2.msra.mxu0 0.0
    %2823 = vmatprep.subr.mxu0 0.0
    %2824 = vmatpush2.msra.mxu0 0.0
    %2825 = vmatprep.subr.mxu0 0.0
    %2826 = vmatpush2.msra.mxu0 0.0
    %2827 = vmatprep.subr.mxu0 0.0
    %2828 = vmatpush2.msra.mxu0 0.0
    %2829 = vmatprep.subr.mxu0 0.0
    %2830 = vmatpush2.msra.mxu0 0.0
    %2831 = vmatprep.subr.mxu0 0.0
    %2832 = vmatpush2.msra.mxu0 0.0
    %2833 = vmatprep.subr.mxu0 0.0
    %2834 = vmatpush2.msra.mxu0 0.0
    %2835 = vmatprep.subr.mxu0 0.0
    %2836 = vmatpush2.msra.mxu0 0.0
    %2837 = vmatprep.subr.mxu0 0.0
    %2838 = vmatpush2.msra.mxu0 0.0
    %2839 = vmatprep.subr.mxu0 0.0
    %2840 = vmatpush2.msra.mxu0 0.0
    %2841 = vmatprep.mubr.f32.mxu0 0.0
    %2842 = vmatmul.mubr.f32.gmra.mxu0 %v2772
    %v2843 = vpop.f32.mrf.mxu0
    %v2844 = vadd.f32 %v2769, %v2843
    %v2845 = vpop.f32.mrf.mxu0
    %2846 = vmatprep.mubr.f32.mxu0 0.0
    %2847 = vmatmul.mubr.f32.gmra.mxu0 %v2775
    %v2848 = vpop.f32.mrf.mxu0
    %v2849 = vadd.f32 %v2769, %v2848
    %v2850 = vpop.f32.mrf.mxu0
    %2851 = vdwg.mxu0
    %v2852 = vmax.f32 %v2844, 0.0
    %v2853 = vmax.f32 %v2849, 0.0
    %v2854 = vld [vmem:[%s7] sm:$0xff]
    %v2855 = vld [vmem:[%s7 + $0x8] sm:$0xff]
    %v2856 = vld [vmem:[%s7 + $0x10] sm:$0xff]
    %v2857 = vld [vmem:[%s7 + $0x18] sm:$0xff]
    %v2858 = vld [vmem:[%s7 + $0x20] sm:$0xff]
    %v2859 = vld [vmem:[%s7 + $0x28] sm:$0xff]
    %v2860 = vld [vmem:[%s7 + $0x30] sm:$0xff]
    %v2861 = vld [vmem:[%s7 + $0x38] sm:$0xff]
    %vm2862 = vcmask 523264
    %v2864 = vsel %vm2862, %v2852, 0
    %v2867 = vsel %vm2862, %v2853, 0
    %2869 = vmatprep.subr.mxu0 0.0
    %2870 = vmatpush1.msra.mxu0 0.0
    %2871 = vmatprep.subr.mxu0 0.0
    %2872 = vmatpush1.msra.mxu0 0.0
    %2873 = vmatprep.subr.mxu0 0.0
    %2874 = vmatpush1.msra.mxu0 0.0
    %2875 = vmatprep.subr.mxu0 0.0
    %2876 = vmatpush1.msra.mxu0 0.0
    %2877 = vmatprep.subr.mxu0 0.0
    %2878 = vmatpush1.msra.mxu0 0.0
    %2879 = vmatprep.subr.mxu0 0.0
    %2880 = vmatpush1.msra.mxu0 0.0
    %2881 = vmatprep.subr.mxu0 0.0
    %2882 = vmatpush1.msra.mxu0 0.0
    %2883 = vmatprep.subr.mxu0 0.0
    %2884 = vmatpush1.msra.mxu0 0.0
    %2885 = vmatprep.subr.mxu0 0.0
    %2886 = vmatpush1.msra.mxu0 %v2861
    %2887 = vmatprep.subr.mxu0 0.0
    %2888 = vmatpush1.msra.mxu0 %v2860
    %2889 = vmatprep.subr.mxu0 0.0
    %2890 = vmatpush1.msra.mxu0 %v2859
    %2891 = vmatprep.subr.mxu0 0.0
    %2892 = vmatpush1.msra.mxu0 %v2858
    %2893 = vmatprep.subr.mxu0 0.0
    %2894 = vmatpush1.msra.mxu0 %v2857
    %2895 = vmatprep.subr.mxu0 0.0
    %2896 = vmatpush1.msra.mxu0 %v2856
    %2897 = vmatprep.subr.mxu0 0.0
    %2898 = vmatpush1.msra.mxu0 %v2855
    %2899 = vmatprep.subr.mxu0 0.0
    %2900 = vmatpush1.msra.mxu0 %v2854
    %2901 = vmatprep.subr.mxu0 0.0
    %2902 = vmatpush2.msra.mxu0 0.0
    %2903 = vmatprep.subr.mxu0 0.0
    %2904 = vmatpush2.msra.mxu0 0.0
    %2905 = vmatprep.subr.mxu0 0.0
    %2906 = vmatpush2.msra.mxu0 0.0
    %2907 = vmatprep.subr.mxu0 0.0
    %2908 = vmatpush2.msra.mxu0 0.0
    %2909 = vmatprep.subr.mxu0 0.0
    %2910 = vmatpush2.msra.mxu0 0.0
    %2911 = vmatprep.subr.mxu0 0.0
    %2912 = vmatpush2.msra.mxu0 0.0
    %2913 = vmatprep.subr.mxu0 0.0
    %2914 = vmatpush2.msra.mxu0 0.0
    %2915 = vmatprep.subr.mxu0 0.0
    %2916 = vmatpush2.msra.mxu0 0.0
    %2917 = vmatprep.subr.mxu0 0.0
    %2918 = vmatpush2.msra.mxu0 0.0
    %2919 = vmatprep.subr.mxu0 0.0
    %2920 = vmatpush2.msra.mxu0 0.0
    %2921 = vmatprep.subr.mxu0 0.0
    %2922 = vmatpush2.msra.mxu0 0.0
    %2923 = vmatprep.subr.mxu0 0.0
    %2924 = vmatpush2.msra.mxu0 0.0
    %2925 = vmatprep.subr.mxu0 0.0
    %2926 = vmatpush2.msra.mxu0 0.0
    %2927 = vmatprep.subr.mxu0 0.0
    %2928 = vmatpush2.msra.mxu0 0.0
    %2929 = vmatprep.subr.mxu0 0.0
    %2930 = vmatpush2.msra.mxu0 0.0
    %2931 = vmatprep.subr.mxu0 0.0
    %2932 = vmatpush2.msra.mxu0 0.0
    %2933 = vmatprep.mubr.f32.mxu0 0.0
    %2934 = vmatmul.mubr.f32.gmra.mxu0 %v2864
    %v2935 = vpop.f32.mrf.mxu0
    %v2936 = vadd.f32 0.0, %v2935
    %v2937 = vpop.f32.mrf.mxu0
    %2938 = vmatprep.mubr.f32.mxu0 0.0
    %2939 = vmatmul.mubr.f32.gmra.mxu0 %v2867
    %v2940 = vpop.f32.mrf.mxu0
    %v2941 = vadd.f32 0.0, %v2940
    %v2942 = vpop.f32.mrf.mxu0
    %2943 = vdwg.mxu0
    %v2944 = vadd.f32 %v2759, %v2936
    %v2945 = vadd.f32 %v2759, %v2941
    %v2946 = vadd.f32 %v2750, %v2944
    %v2947 = vadd.f32 %v2751, %v2945
    %v2948 = vld [vmem:[%s11] sm:$0x1]
    %v2949 = vld [vmem:[%s12] sm:$0x1]
    %v2950 = vsel %vm60, %v2946, 0.0
    %2951 = vadd.xlane.f32.xlu0 %v2950
    %v2952 = vpop.xlane.xlu0 %2951
    %v2953 = vsel %vm60, %v2947, 0.0
    %2954 = vadd.xlane.f32.xlu0 %v2953
    %v2955 = vpop.xlane.xlu0 %2954
    %v2956 = vmul.f32 %v2952, %v2715
    %v2957 = vmul.f32 %v2955, %v2715
    %v2958 = vsub.f32 %v2946, %v2956
    %v2959 = vsub.f32 %v2947, %v2957
    %v2960 = vmul.f32 %v2958, %v2958
    %v2961 = vmul.f32 %v2959, %v2959
    %v2962 = vsel %vm60, %v2960, 0.0
    %2963 = vadd.xlane.f32.xlu0 %v2962
    %v2964 = vpop.xlane.xlu0 %2963
    %v2965 = vsel %vm60, %v2961, 0.0
    %2966 = vadd.xlane.f32.xlu0 %v2965
    %v2967 = vpop.xlane.xlu0 %2966
    %v2968 = vmul.f32 %v2964, %v2715
    %v2969 = vmul.f32 %v2967, %v2715
    %v2970 = vadd.f32 %v2968, 1e-05
    %v2971 = vadd.f32 %v2969, 1e-05
    %v2972 = vrsqrt.pop %v2970
    %v2973 = vrsqrt.pop %v2971
    %v2974 = vmul.f32 %v2958, %v2972
    %v2975 = vmul.f32 %v2959, %v2973
    %v2977 = vlaneseq
    %v2978 = vshrl.u32 %v2977, 7
    %v2979 = vsub.s32 0, %v2978
    %v2980 = vrot.slane %v2948, %v2979
    %v2982 = vmul.f32 %v2974, %v2980
    %v2983 = vmul.f32 %v2975, %v2980
    %v2985 = vlaneseq
    %v2986 = vshrl.u32 %v2985, 7
    %v2987 = vsub.s32 0, %v2986
    %v2988 = vrot.slane %v2949, %v2987
    %v2990 = vadd.f32 %v2982, %v2988
    %v2991 = vadd.f32 %v2983, %v2988
    %2992 = vst.msk [vmem:[%s13] sm:$0xff] %vm60, %v2990
    %2993 = vst.msk [vmem:[%s13 + $0x8] sm:$0xff] %vm60, %v2991
    %v2994 = vsel %vm1026, %v1715, 0.0
    %v2995 = vsel %vm1026, %v1717, 0.0
    %v2996 = vadd.f32 %v2994, %v2995
    %v2997 = vsel %vm1026, %v1719, 0.0
    %v2998 = vadd.f32 %v2996, %v2997
    %v2999 = vsel %vm1026, %v1721, 0.0
    %v3000 = vadd.f32 %v2998, %v2999
    %v3001 = vsel %vm1026, %v1716, 0.0
    %v3002 = vsel %vm1026, %v1718, 0.0
    %v3003 = vadd.f32 %v3001, %v3002
    %v3004 = vsel %vm1026, %v1720, 0.0
    %v3005 = vadd.f32 %v3003, %v3004
    %v3006 = vsel %vm1026, %v1722, 0.0
    %v3007 = vadd.f32 %v3005, %v3006
    %v3008 = vrcp.pop 4.0
    %v3009 = vmul.f32 %v3000, %v3008
    %v3010 = vmul.f32 %v3007, %v3008
    %3011 = vst.msk [vmem:[#allocation2] sm:$0xff] %vm1026, %v3009
    %3012 = vst.msk [vmem:[#allocation2 + $0x8] sm:$0xff] %vm1026, %v3010
    // Predicated region
    $region54: #{custom_encoder_layer.1} parent=1 // pred_check
      _
    $region55: #{custom_encoder_layer.1} parent=1 // pred_check_branch
      %3014 = sbr.rel (0) target = $region57
    $region56: #{custom_encoder_layer.1} parent=1 // pred_region
      _
    $region57: #{custom_encoder_layer.1} parent=1 // pred_fallthru
      _
    // Predicated region
    $region58: #{custom_encoder_layer.1} parent=1 // pred_check
      _
    $region59: #{custom_encoder_layer.1} parent=1 // pred_check_branch
      %3016 = sbr.rel (0) target = $region61
    $region60: #{custom_encoder_layer.1} parent=1 // pred_region
      %s3018 = ssub.s32 256, 256
      %3019 = vsyncadd [#allocation3], %s3018
      %s3020 = sshll.u32 [#allocation2], 4
      %s3021 = int_to_ptr.vmem [resolvable:$true] %s3020
      %3026 = dma.vmem_to_hbm [thread:$0]  %s3021, 256, %s14, [#allocation3], 128, 128, 8
    $region61: #{custom_encoder_layer.1} parent=1 // pred_fallthru
      _
    // Predicated region
    $region62: #{custom_encoder_layer.1} parent=1 // pred_check
      _
    $region63: #{custom_encoder_layer.1} parent=1 // pred_check_branch
      %3028 = sbr.rel (0) target = $region65
    $region64: #{custom_encoder_layer.1} parent=1 // pred_region
      _
    $region65: #{custom_encoder_layer.1} parent=1 // pred_fallthru
      _
    // Predicated region
    $region66: #{custom_encoder_layer.1} parent=1 // pred_check
      _
    $region67: #{custom_encoder_layer.1} parent=1 // pred_check_branch
      %3030 = sbr.rel (0) target = $region69
    $region68: #{custom_encoder_layer.1} parent=1 // pred_region
      %3031 = dma.done [#allocation3], 256
    $region69: #{custom_encoder_layer.1} parent=1 // pred_fallthru
      _
    %3032 = vsyncpa [#allocation3], 1

</llo_original>
